<compile_context>
chip_gen: v5e
topology: v5e:2x2
jax: 0.10.0
libtpu: 0.0.40
codegen_flags: <defaults>
</compile_context>

<pallas_src>
import functools

import jax
import jax.numpy as jnp
from jax import lax
from jax.experimental import pallas as pl
from jax.experimental.pallas import tpu as pltpu

F32 = jnp.float32
BF16 = jnp.bfloat16


def _bf(x):
    return x.astype(BF16)


def _mask_bf16(cond):
    # 0/1 selection matrix in bf16 (exact) from a boolean predicate.
    return jnp.where(cond, 1.0, 0.0).astype(BF16)


def _layernorm(x, g, b, eps=1e-5):
    mean = jnp.mean(x, axis=-1, keepdims=True)
    xc = x - mean
    var = jnp.mean(xc * xc, axis=-1, keepdims=True)
    return xc * lax.rsqrt(var + eps) * g + b


# --------------------------------------------------------------------------
# Per-module bodies (pure value computation on VMEM-resident data)
# --------------------------------------------------------------------------
def _resblock_body(h, w1, s1, b1, w2, s2, b2, wr, sr, br):
    """relu(bn2(conv2(relu(bn1(conv1(h))))) + bn_r(conv1x1(h))), stride 2.

    h: (t_in, c_in) f32 value.  Stride-2 tap sampling and the +/-1 row shifts
    of the k=3 convs are realized as tiny 0/1 selection matmuls (rows falling
    outside [0, t_in) are all-zero == the conv's zero padding) instead of
    jnp.concatenate copies or wrapper-side tap duplication.
    """
    t_in, _ = h.shape
    t_out = t_in // 2
    hb = _bf(h)

    # stride-2 tap selectors: output row m reads input row 2m + k - 1, k=0,1,2
    r = lax.broadcasted_iota(jnp.int32, (t_out, t_in), 0)
    c = lax.broadcasted_iota(jnp.int32, (t_out, t_in), 1)
    two_r = 2 * r
    x_m1 = jnp.dot(_mask_bf16(c == two_r - 1), hb, preferred_element_type=F32)
    x_0 = jnp.dot(_mask_bf16(c == two_r), hb, preferred_element_type=F32)
    x_p1 = jnp.dot(_mask_bf16(c == two_r + 1), hb, preferred_element_type=F32)

    # conv1 (k=3, pad=1, stride=2) + folded BN + relu
    h1 = jnp.dot(_bf(x_m1), w1[0], preferred_element_type=F32)
    h1 = h1 + jnp.dot(_bf(x_0), w1[1], preferred_element_type=F32)
    h1 = h1 + jnp.dot(_bf(x_p1), w1[2], preferred_element_type=F32)
    h1 = jnp.maximum(h1 * s1[...] + b1[...], 0.0)

    # conv2 (k=3, pad=1, stride=1) + folded BN; +/-1 shifts as selection matmuls
    r2 = lax.broadcasted_iota(jnp.int32, (t_out, t_out), 0)
    c2 = lax.broadcasted_iota(jnp.int32, (t_out, t_out), 1)
    h1b = _bf(h1)
    left = jnp.dot(_mask_bf16(c2 == r2 - 1), h1b, preferred_element_type=F32)   # h1[t-1]
    right = jnp.dot(_mask_bf16(c2 == r2 + 1), h1b, preferred_element_type=F32)  # h1[t+1]
    h2 = jnp.dot(_bf(left), w2[0], preferred_element_type=F32)
    h2 = h2 + jnp.dot(h1b, w2[1], preferred_element_type=F32)
    h2 = h2 + jnp.dot(_bf(right), w2[2], preferred_element_type=F32)
    h2 = h2 * s2[...] + b2[...]

    # residual: 1x1 conv, stride 2 (reuses the stride-2 sampled rows) + folded BN
    res = jnp.dot(_bf(x_0), wr[...], preferred_element_type=F32) * sr[...] + br[...]
    return jnp.maximum(h2 + res, 0.0)


def _transformer_layer_body(x, rep, rep_t, hmask, wqkv, bqkv, wo, bo,
                            g1, be1, wf1, bf1, wf2, bf2, g2, be2):
    """Post-norm encoder layer (MHA + ReLU FFN) for one (S, D) sequence in f32.

    All heads are computed at once with 2-D MXU-friendly matmuls: rows of the
    (H*S, *) intermediates are (head, position) pairs; `rep` replicates Q per
    head, `hmask` keeps only that head's feature columns, and `rep_t` folds the
    per-head outputs back into the (S, D) concatenated-heads layout.  This
    replaces the old 8-iteration per-head loop and jnp.concatenate.
    """
    s, d = x.shape
    xb = _bf(x)
    qkv = jnp.dot(xb, wqkv[...], preferred_element_type=F32) + bqkv[...]
    # 1/sqrt(dh) is folded into the Q columns of wqkv/bqkv at parameter prep.
    q, k, v = qkv[:, :d], qkv[:, d:2 * d], qkv[:, 2 * d:]

    hm = hmask[...]                                                   # (H*S, D)
    q_big = jnp.dot(rep[...], _bf(q), preferred_element_type=F32) * hm
    scores = lax.dot_general(_bf(q_big), _bf(k), (((1,), (1,)), ((), ())),
                             preferred_element_type=F32)              # (H*S, S)
    # TODO(synk): relative positional attention bias (relative_positional=True,
    # distance=100) not implemented -- the custom TransformerEncoderLayer source
    # was not provided; standard scaled dot-product attention is used instead.
    scores = scores - jnp.max(scores, axis=-1, keepdims=True)
    p = jnp.exp(scores)
    p = p * pl.reciprocal(jnp.sum(p, axis=-1, keepdims=True), approx=True)
    o_big = jnp.dot(_bf(p), _bf(v), preferred_element_type=F32) * hm  # (H*S, D)
    attn = jnp.dot(rep_t[...], _bf(o_big), preferred_element_type=F32)  # (S, D)
    attn = jnp.dot(_bf(attn), wo[...], preferred_element_type=F32) + bo[...]

    y = _layernorm(x + attn, g1[...], be1[...])
    ff = jnp.maximum(
        jnp.dot(_bf(y), wf1[...], preferred_element_type=F32) + bf1[...], 0.0)
    ff = jnp.dot(_bf(ff), wf2[...], preferred_element_type=F32) + bf2[...]
    return _layernorm(y + ff, g2[...], be2[...])


# --------------------------------------------------------------------------
# Single fused kernel: full forward pass for one batch element per grid step
# --------------------------------------------------------------------------
def fused_forward_kernel(*refs, n_blocks, n_layers):
    o_ref = refs[-1]
    it = iter(refs[:-1])
    x_ref = next(it)

    h = x_ref[...]                                                # (T, C_in) f32
    for _ in range(n_blocks):                                     # ResBlocks, stride 2
        h = _resblock_body(h, *[next(it) for _ in range(9)])

    w_in, b_in = next(it), next(it)                               # w_raw_in Linear
    h = jnp.dot(_bf(h), w_in[...], preferred_element_type=F32) + b_in[...]

    rep, rep_t, hmask = next(it), next(it), next(it)              # attention constants
    for _ in range(n_layers):                                     # transformer encoder
        h = _transformer_layer_body(h, rep, rep_t, hmask,
                                    *[next(it) for _ in range(12)])

    w_o, b_o = next(it), next(it)                                 # w_out Linear
    o_ref[...] = jnp.dot(_bf(h), w_o[...], preferred_element_type=F32) + b_o[...]


# --------------------------------------------------------------------------
# pallas_call plumbing
# --------------------------------------------------------------------------
def _const_spec(a):
    zeros = (0,) * a.ndim
    return pl.BlockSpec(a.shape, lambda b, _z=zeros: _z)


def _batch_spec(a):
    rest = tuple(a.shape[1:])
    zeros = (0,) * len(rest)
    return pl.BlockSpec((None,) + rest, lambda b, _z=zeros: (b,) + _z)


def proposed_model_forward(x, params, n_heads):
    """use_resnet=True forward, fully fused into a single pallas_call.

    Grid = (batch,), marked "parallel" so v7x's two TensorCores split the batch;
    on v5e/v6e it is a short serial loop.  All weights (fetched once, constant
    index maps) and intermediate activations stay VMEM-resident.
    """
    B, T, _ = x.shape
    n_blocks = len(params["conv_blocks"])
    assert T % (2 ** n_blocks) == 0, "time dim must be divisible by 2**n_blocks"
    S = T // (2 ** n_blocks)
    D = params["w_raw_in"]["w"].shape[0]
    dh = D // n_heads
    out_dim = params["w_out"]["w"].shape[1]
    n_layers = len(params["layers"])

    # Head-batching constants (plain JAX; constant-folded under jit).
    eye = jnp.eye(S, dtype=F32)
    rep = jnp.tile(eye, (n_heads, 1)).astype(BF16)          # (H*S, S): replicate Q rows
    rep_t = jnp.tile(eye, (1, n_heads)).astype(BF16)        # (S, H*S): fold heads back
    hmask = (jnp.repeat(jnp.arange(n_heads), S)[:, None]
             == jnp.repeat(jnp.arange(n_heads), dh)[None, :]).astype(F32)  # (H*S, D)

    flat, specs = [x], [_batch_spec(x)]

    def add(a):
        flat.append(a)
        specs.append(_const_spec(a))

    for blk in params["conv_blocks"]:
        for name in ("w1", "s1", "b1", "w2", "s2", "b2", "wr", "sr", "br"):
            add(blk[name])
    add(params["w_raw_in"]["w"]); add(params["w_raw_in"]["b"])
    add(rep); add(rep_t); add(hmask)
    for lyr in params["layers"]:
        for name in ("wqkv", "bqkv", "wo", "bo", "g1", "be1",
                     "wf1", "bf1", "wf2", "bf2", "g2", "be2"):
            add(lyr[name])
    add(params["w_out"]["w"]); add(params["w_out"]["b"])

    kernel = functools.partial(fused_forward_kernel,
                               n_blocks=n_blocks, n_layers=n_layers)
    return pl.pallas_call(
        kernel,
        out_shape=jax.ShapeDtypeStruct((B, S, out_dim), F32),
        grid=(B,),
        in_specs=specs,
        out_specs=pl.BlockSpec((None, S, out_dim), lambda b: (b, 0, 0)),
        compiler_params=pltpu.CompilerParams(dimension_semantics=("parallel",)),
    )(*flat)


# --------------------------------------------------------------------------
# Deterministic synthetic, kernel-ready parameters
# (matmul weights stored bf16; BN folded to scale/bias; attention scale folded)
# --------------------------------------------------------------------------
def init_params(key, in_dim, model_size, n_heads, dim_ff, num_layers, out_dim):
    kit = iter(jax.random.split(key, 256))

    def nrm(shape, scale=0.1, dtype=F32):
        return (scale * jax.random.normal(next(kit), shape, F32)).astype(dtype)

    conv_blocks = []
    for cin in (in_dim, model_size, model_size):
        conv_blocks.append(dict(
            w1=nrm((3, cin, model_size), dtype=BF16),       # conv1 weight (K, Cin, Cout)
            s1=1.0 + nrm((1, model_size), 0.05),            # folded bn1 scale
            b1=nrm((1, model_size), 0.05),                  # folded bn1 bias (+conv bias)
            w2=nrm((3, model_size, model_size), dtype=BF16),
            s2=1.0 + nrm((1, model_size), 0.05),
            b2=nrm((1, model_size), 0.05),
            wr=nrm((cin, model_size), dtype=BF16),          # 1x1 residual conv
            sr=1.0 + nrm((1, model_size), 0.05),
            br=nrm((1, model_size), 0.05),
        ))
    w_raw_in = dict(w=nrm((model_size, model_size), dtype=BF16),
                    b=nrm((1, model_size), 0.05))

    dh = model_size // n_heads
    qscale = 1.0 / (dh ** 0.5)
    col_scale = jnp.concatenate([jnp.full((model_size,), qscale, F32),
                                 jnp.ones((2 * model_size,), F32)])[None, :]
    layers = []
    for _ in range(num_layers):
        wqkv = nrm((model_size, 3 * model_size)) * col_scale   # fold 1/sqrt(dh) into Q
        bqkv = nrm((1, 3 * model_size), 0.05) * col_scale
        layers.append(dict(
            wqkv=wqkv.astype(BF16), bqkv=bqkv,
            wo=nrm((model_size, model_size), dtype=BF16), bo=nrm((1, model_size), 0.05),
            g1=jnp.ones((1, model_size), F32), be1=jnp.zeros((1, model_size), F32),
            wf1=nrm((model_size, dim_ff), dtype=BF16), bf1=nrm((1, dim_ff), 0.05),
            wf2=nrm((dim_ff, model_size), dtype=BF16), bf2=nrm((1, model_size), 0.05),
            g2=jnp.ones((1, model_size), F32), be2=jnp.zeros((1, model_size), F32),
        ))
    w_out = dict(w=nrm((model_size, out_dim), dtype=BF16), b=nrm((1, out_dim), 0.05))
    return dict(conv_blocks=conv_blocks, w_raw_in=w_raw_in, layers=layers, w_out=w_out)


# --------------------------------------------------------------------------
if __name__ == "__main__":
    B, T, IN_DIM = 2, 64, 62                    # x: (batch, time, 62) channels-last
    MODEL_SIZE, N_HEADS, DIM_FF, NUM_LAYERS, OUT_DIM = 32, 8, 64, 2, 80

    key = jax.random.PRNGKey(0)
    kx, kp = jax.random.split(key)
    x = jax.random.normal(kx, (B, T, IN_DIM), F32)
    params = init_params(kp, IN_DIM, MODEL_SIZE, N_HEADS, DIM_FF, NUM_LAYERS, OUT_DIM)

    fwd = jax.jit(functools.partial(proposed_model_forward, n_heads=N_HEADS))
    out = jax.block_until_ready(fwd(x, params))

    assert out.shape == (B, T // 8, OUT_DIM), out.shape
    assert bool(jnp.all(jnp.isfinite(out)))
    print("KERNEL_OK")
</pallas_src>

<mosaic_0001>
module attributes {stable_mosaic.version = 11 : i64} {
  func.func @fused_forward_kernel(%arg0: i32, %arg1: memref<1x64x62xf32, #tpu.memory_space<vmem>>, %arg2: memref<3x62x32xbf16, #tpu.memory_space<vmem>>, %arg3: memref<1x32xf32, #tpu.memory_space<vmem>>, %arg4: memref<1x32xf32, #tpu.memory_space<vmem>>, %arg5: memref<3x32x32xbf16, #tpu.memory_space<vmem>>, %arg6: memref<1x32xf32, #tpu.memory_space<vmem>>, %arg7: memref<1x32xf32, #tpu.memory_space<vmem>>, %arg8: memref<62x32xbf16, #tpu.memory_space<vmem>>, %arg9: memref<1x32xf32, #tpu.memory_space<vmem>>, %arg10: memref<1x32xf32, #tpu.memory_space<vmem>>, %arg11: memref<3x32x32xbf16, #tpu.memory_space<vmem>>, %arg12: memref<1x32xf32, #tpu.memory_space<vmem>>, %arg13: memref<1x32xf32, #tpu.memory_space<vmem>>, %arg14: memref<3x32x32xbf16, #tpu.memory_space<vmem>>, %arg15: memref<1x32xf32, #tpu.memory_space<vmem>>, %arg16: memref<1x32xf32, #tpu.memory_space<vmem>>, %arg17: memref<32x32xbf16, #tpu.memory_space<vmem>>, %arg18: memref<1x32xf32, #tpu.memory_space<vmem>>, %arg19: memref<1x32xf32, #tpu.memory_space<vmem>>, %arg20: memref<3x32x32xbf16, #tpu.memory_space<vmem>>, %arg21: memref<1x32xf32, #tpu.memory_space<vmem>>, %arg22: memref<1x32xf32, #tpu.memory_space<vmem>>, %arg23: memref<3x32x32xbf16, #tpu.memory_space<vmem>>, %arg24: memref<1x32xf32, #tpu.memory_space<vmem>>, %arg25: memref<1x32xf32, #tpu.memory_space<vmem>>, %arg26: memref<32x32xbf16, #tpu.memory_space<vmem>>, %arg27: memref<1x32xf32, #tpu.memory_space<vmem>>, %arg28: memref<1x32xf32, #tpu.memory_space<vmem>>, %arg29: memref<32x32xbf16, #tpu.memory_space<vmem>>, %arg30: memref<1x32xf32, #tpu.memory_space<vmem>>, %arg31: memref<64x8xbf16, #tpu.memory_space<vmem>>, %arg32: memref<8x64xbf16, #tpu.memory_space<vmem>>, %arg33: memref<64x32xf32, #tpu.memory_space<vmem>>, %arg34: memref<32x96xbf16, #tpu.memory_space<vmem>>, %arg35: memref<1x96xf32, #tpu.memory_space<vmem>>, %arg36: memref<32x32xbf16, #tpu.memory_space<vmem>>, %arg37: memref<1x32xf32, #tpu.memory_space<vmem>>, %arg38: memref<1x32xf32, #tpu.memory_space<vmem>>, %arg39: memref<1x32xf32, #tpu.memory_space<vmem>>, %arg40: memref<32x64xbf16, #tpu.memory_space<vmem>>, %arg41: memref<1x64xf32, #tpu.memory_space<vmem>>, %arg42: memref<64x32xbf16, #tpu.memory_space<vmem>>, %arg43: memref<1x32xf32, #tpu.memory_space<vmem>>, %arg44: memref<1x32xf32, #tpu.memory_space<vmem>>, %arg45: memref<1x32xf32, #tpu.memory_space<vmem>>, %arg46: memref<32x96xbf16, #tpu.memory_space<vmem>>, %arg47: memref<1x96xf32, #tpu.memory_space<vmem>>, %arg48: memref<32x32xbf16, #tpu.memory_space<vmem>>, %arg49: memref<1x32xf32, #tpu.memory_space<vmem>>, %arg50: memref<1x32xf32, #tpu.memory_space<vmem>>, %arg51: memref<1x32xf32, #tpu.memory_space<vmem>>, %arg52: memref<32x64xbf16, #tpu.memory_space<vmem>>, %arg53: memref<1x64xf32, #tpu.memory_space<vmem>>, %arg54: memref<64x32xbf16, #tpu.memory_space<vmem>>, %arg55: memref<1x32xf32, #tpu.memory_space<vmem>>, %arg56: memref<1x32xf32, #tpu.memory_space<vmem>>, %arg57: memref<1x32xf32, #tpu.memory_space<vmem>>, %arg58: memref<32x80xbf16, #tpu.memory_space<vmem>>, %arg59: memref<1x80xf32, #tpu.memory_space<vmem>>, %arg60: memref<1x8x80xf32, #tpu.memory_space<vmem>>) attributes {dimension_semantics = [#tpu.dimension_semantics<parallel>], iteration_bounds = array<i64: 2>, scalar_prefetch = 0 : i64, scratch_operands = 0 : i64, tpu.core_type = #tpu.core_type<tc>, window_params = [{transform_indices = @transform_0, window_bounds = array<i64: 1, 64, 62>}, {pipeline_mode = #tpu.pipeline_mode<synchronous>, transform_indices = @transform_1, window_bounds = array<i64: 3, 62, 32>}, {pipeline_mode = #tpu.pipeline_mode<synchronous>, transform_indices = @transform_2, window_bounds = array<i64: 1, 32>}, {pipeline_mode = #tpu.pipeline_mode<synchronous>, transform_indices = @transform_3, window_bounds = array<i64: 1, 32>}, {pipeline_mode = #tpu.pipeline_mode<synchronous>, transform_indices = @transform_4, window_bounds = array<i64: 3, 32, 32>}, {pipeline_mode = #tpu.pipeline_mode<synchronous>, transform_indices = @transform_5, window_bounds = array<i64: 1, 32>}, {pipeline_mode = #tpu.pipeline_mode<synchronous>, transform_indices = @transform_6, window_bounds = array<i64: 1, 32>}, {pipeline_mode = #tpu.pipeline_mode<synchronous>, transform_indices = @transform_7, window_bounds = array<i64: 62, 32>}, {pipeline_mode = #tpu.pipeline_mode<synchronous>, transform_indices = @transform_8, window_bounds = array<i64: 1, 32>}, {pipeline_mode = #tpu.pipeline_mode<synchronous>, transform_indices = @transform_9, window_bounds = array<i64: 1, 32>}, {pipeline_mode = #tpu.pipeline_mode<synchronous>, transform_indices = @transform_10, window_bounds = array<i64: 3, 32, 32>}, {pipeline_mode = #tpu.pipeline_mode<synchronous>, transform_indices = @transform_11, window_bounds = array<i64: 1, 32>}, {pipeline_mode = #tpu.pipeline_mode<synchronous>, transform_indices = @transform_12, window_bounds = array<i64: 1, 32>}, {pipeline_mode = #tpu.pipeline_mode<synchronous>, transform_indices = @transform_13, window_bounds = array<i64: 3, 32, 32>}, {pipeline_mode = #tpu.pipeline_mode<synchronous>, transform_indices = @transform_14, window_bounds = array<i64: 1, 32>}, {pipeline_mode = #tpu.pipeline_mode<synchronous>, transform_indices = @transform_15, window_bounds = array<i64: 1, 32>}, {pipeline_mode = #tpu.pipeline_mode<synchronous>, transform_indices = @transform_16, window_bounds = array<i64: 32, 32>}, {pipeline_mode = #tpu.pipeline_mode<synchronous>, transform_indices = @transform_17, window_bounds = array<i64: 1, 32>}, {pipeline_mode = #tpu.pipeline_mode<synchronous>, transform_indices = @transform_18, window_bounds = array<i64: 1, 32>}, {pipeline_mode = #tpu.pipeline_mode<synchronous>, transform_indices = @transform_19, window_bounds = array<i64: 3, 32, 32>}, {pipeline_mode = #tpu.pipeline_mode<synchronous>, transform_indices = @transform_20, window_bounds = array<i64: 1, 32>}, {pipeline_mode = #tpu.pipeline_mode<synchronous>, transform_indices = @transform_21, window_bounds = array<i64: 1, 32>}, {pipeline_mode = #tpu.pipeline_mode<synchronous>, transform_indices = @transform_22, window_bounds = array<i64: 3, 32, 32>}, {pipeline_mode = #tpu.pipeline_mode<synchronous>, transform_indices = @transform_23, window_bounds = array<i64: 1, 32>}, {pipeline_mode = #tpu.pipeline_mode<synchronous>, transform_indices = @transform_24, window_bounds = array<i64: 1, 32>}, {pipeline_mode = #tpu.pipeline_mode<synchronous>, transform_indices = @transform_25, window_bounds = array<i64: 32, 32>}, {pipeline_mode = #tpu.pipeline_mode<synchronous>, transform_indices = @transform_26, window_bounds = array<i64: 1, 32>}, {pipeline_mode = #tpu.pipeline_mode<synchronous>, transform_indices = @transform_27, window_bounds = array<i64: 1, 32>}, {pipeline_mode = #tpu.pipeline_mode<synchronous>, transform_indices = @transform_28, window_bounds = array<i64: 32, 32>}, {pipeline_mode = #tpu.pipeline_mode<synchronous>, transform_indices = @transform_29, window_bounds = array<i64: 1, 32>}, {pipeline_mode = #tpu.pipeline_mode<synchronous>, transform_indices = @transform_30, window_bounds = array<i64: 64, 8>}, {pipeline_mode = #tpu.pipeline_mode<synchronous>, transform_indices = @transform_31, window_bounds = array<i64: 8, 64>}, {pipeline_mode = #tpu.pipeline_mode<synchronous>, transform_indices = @transform_32, window_bounds = array<i64: 64, 32>}, {pipeline_mode = #tpu.pipeline_mode<synchronous>, transform_indices = @transform_33, window_bounds = array<i64: 32, 96>}, {pipeline_mode = #tpu.pipeline_mode<synchronous>, transform_indices = @transform_34, window_bounds = array<i64: 1, 96>}, {pipeline_mode = #tpu.pipeline_mode<synchronous>, transform_indices = @transform_35, window_bounds = array<i64: 32, 32>}, {pipeline_mode = #tpu.pipeline_mode<synchronous>, transform_indices = @transform_36, window_bounds = array<i64: 1, 32>}, {pipeline_mode = #tpu.pipeline_mode<synchronous>, transform_indices = @transform_37, window_bounds = array<i64: 1, 32>}, {pipeline_mode = #tpu.pipeline_mode<synchronous>, transform_indices = @transform_38, window_bounds = array<i64: 1, 32>}, {pipeline_mode = #tpu.pipeline_mode<synchronous>, transform_indices = @transform_39, window_bounds = array<i64: 32, 64>}, {pipeline_mode = #tpu.pipeline_mode<synchronous>, transform_indices = @transform_40, window_bounds = array<i64: 1, 64>}, {pipeline_mode = #tpu.pipeline_mode<synchronous>, transform_indices = @transform_41, window_bounds = array<i64: 64, 32>}, {pipeline_mode = #tpu.pipeline_mode<synchronous>, transform_indices = @transform_42, window_bounds = array<i64: 1, 32>}, {pipeline_mode = #tpu.pipeline_mode<synchronous>, transform_indices = @transform_43, window_bounds = array<i64: 1, 32>}, {pipeline_mode = #tpu.pipeline_mode<synchronous>, transform_indices = @transform_44, window_bounds = array<i64: 1, 32>}, {pipeline_mode = #tpu.pipeline_mode<synchronous>, transform_indices = @transform_45, window_bounds = array<i64: 32, 96>}, {pipeline_mode = #tpu.pipeline_mode<synchronous>, transform_indices = @transform_46, window_bounds = array<i64: 1, 96>}, {pipeline_mode = #tpu.pipeline_mode<synchronous>, transform_indices = @transform_47, window_bounds = array<i64: 32, 32>}, {pipeline_mode = #tpu.pipeline_mode<synchronous>, transform_indices = @transform_48, window_bounds = array<i64: 1, 32>}, {pipeline_mode = #tpu.pipeline_mode<synchronous>, transform_indices = @transform_49, window_bounds = array<i64: 1, 32>}, {pipeline_mode = #tpu.pipeline_mode<synchronous>, transform_indices = @transform_50, window_bounds = array<i64: 1, 32>}, {pipeline_mode = #tpu.pipeline_mode<synchronous>, transform_indices = @transform_51, window_bounds = array<i64: 32, 64>}, {pipeline_mode = #tpu.pipeline_mode<synchronous>, transform_indices = @transform_52, window_bounds = array<i64: 1, 64>}, {pipeline_mode = #tpu.pipeline_mode<synchronous>, transform_indices = @transform_53, window_bounds = array<i64: 64, 32>}, {pipeline_mode = #tpu.pipeline_mode<synchronous>, transform_indices = @transform_54, window_bounds = array<i64: 1, 32>}, {pipeline_mode = #tpu.pipeline_mode<synchronous>, transform_indices = @transform_55, window_bounds = array<i64: 1, 32>}, {pipeline_mode = #tpu.pipeline_mode<synchronous>, transform_indices = @transform_56, window_bounds = array<i64: 1, 32>}, {pipeline_mode = #tpu.pipeline_mode<synchronous>, transform_indices = @transform_57, window_bounds = array<i64: 32, 80>}, {pipeline_mode = #tpu.pipeline_mode<synchronous>, transform_indices = @transform_58, window_bounds = array<i64: 1, 80>}, {transform_indices = @transform_59, window_bounds = array<i64: 1, 8, 80>}]} {
    %c0 = arith.constant 0 : index
    %c0_0 = arith.constant 0 : index
    %c0_1 = arith.constant 0 : index
    %0 = vector.load %arg1[%c0, %c0_0, %c0_1] : memref<1x64x62xf32, #tpu.memory_space<vmem>>, vector<1x64x62xf32>
    %1 = vector.shape_cast %0 : vector<1x64x62xf32> to vector<64x62xf32>
    %2 = arith.truncf %1 : vector<64x62xf32> to vector<64x62xbf16>
    %3 = tpu.iota {dimensions = array<i32: 0>} : vector<32x64xi32>
    %4 = tpu.iota {dimensions = array<i32: 1>} : vector<32x64xi32>
    %c2_i32 = arith.constant 2 : i32
    %5 = vector.broadcast %c2_i32 : i32 to vector<32x64xi32>
    %6 = arith.muli %5, %3 : vector<32x64xi32>
    %c1_i32 = arith.constant 1 : i32
    %7 = vector.broadcast %c1_i32 : i32 to vector<32x64xi32>
    %8 = arith.subi %6, %7 : vector<32x64xi32>
    %9 = arith.cmpi eq, %4, %8 : vector<32x64xi32>
    %cst = arith.constant 1.000000e+00 : f32
    %cst_2 = arith.constant 0.000000e+00 : f32
    %10 = vector.broadcast %cst : f32 to vector<32x64xf32>
    %11 = vector.broadcast %cst_2 : f32 to vector<32x64xf32>
    %12 = arith.select %9, %10, %11 : vector<32x64xi1>, vector<32x64xf32>
    %13 = arith.truncf %12 : vector<32x64xf32> to vector<32x64xbf16>
    %cst_3 = arith.constant dense<0.000000e+00> : vector<32x62xf32>
    %14 = tpu.matmul %13, %2, %cst_3 {dimension_numbers = #tpu.dot_dimension_numbers<[1], [0], [0], [1], [0, 0, 1, 1], [], []>} : vector<32x64xbf16>, vector<64x62xbf16>, vector<32x62xf32> -> vector<32x62xf32>
    %15 = arith.cmpi eq, %4, %6 : vector<32x64xi32>
    %cst_4 = arith.constant 1.000000e+00 : f32
    %cst_5 = arith.constant 0.000000e+00 : f32
    %16 = vector.broadcast %cst_4 : f32 to vector<32x64xf32>
    %17 = vector.broadcast %cst_5 : f32 to vector<32x64xf32>
    %18 = arith.select %15, %16, %17 : vector<32x64xi1>, vector<32x64xf32>
    %19 = arith.truncf %18 : vector<32x64xf32> to vector<32x64xbf16>
    %cst_6 = arith.constant dense<0.000000e+00> : vector<32x62xf32>
    %20 = tpu.matmul %19, %2, %cst_6 {dimension_numbers = #tpu.dot_dimension_numbers<[1], [0], [0], [1], [0, 0, 1, 1], [], []>} : vector<32x64xbf16>, vector<64x62xbf16>, vector<32x62xf32> -> vector<32x62xf32>
    %c1_i32_7 = arith.constant 1 : i32
    %21 = vector.broadcast %c1_i32_7 : i32 to vector<32x64xi32>
    %22 = arith.addi %6, %21 : vector<32x64xi32>
    %23 = arith.cmpi eq, %4, %22 : vector<32x64xi32>
    %cst_8 = arith.constant 1.000000e+00 : f32
    %cst_9 = arith.constant 0.000000e+00 : f32
    %24 = vector.broadcast %cst_8 : f32 to vector<32x64xf32>
    %25 = vector.broadcast %cst_9 : f32 to vector<32x64xf32>
    %26 = arith.select %23, %24, %25 : vector<32x64xi1>, vector<32x64xf32>
    %27 = arith.truncf %26 : vector<32x64xf32> to vector<32x64xbf16>
    %cst_10 = arith.constant dense<0.000000e+00> : vector<32x62xf32>
    %28 = tpu.matmul %27, %2, %cst_10 {dimension_numbers = #tpu.dot_dimension_numbers<[1], [0], [0], [1], [0, 0, 1, 1], [], []>} : vector<32x64xbf16>, vector<64x62xbf16>, vector<32x62xf32> -> vector<32x62xf32>
    %29 = arith.truncf %14 : vector<32x62xf32> to vector<32x62xbf16>
    %c0_11 = arith.constant 0 : index
    %c0_12 = arith.constant 0 : index
    %c0_13 = arith.constant 0 : index
    %30 = vector.load %arg2[%c0_11, %c0_12, %c0_13] : memref<3x62x32xbf16, #tpu.memory_space<vmem>>, vector<1x62x32xbf16>
    %31 = vector.shape_cast %30 : vector<1x62x32xbf16> to vector<62x32xbf16>
    %cst_14 = arith.constant dense<0.000000e+00> : vector<32x32xf32>
    %32 = tpu.matmul %29, %31, %cst_14 {dimension_numbers = #tpu.dot_dimension_numbers<[1], [0], [0], [1], [0, 0, 1, 1], [], []>} : vector<32x62xbf16>, vector<62x32xbf16>, vector<32x32xf32> -> vector<32x32xf32>
    %33 = arith.truncf %20 : vector<32x62xf32> to vector<32x62xbf16>
    %c1 = arith.constant 1 : index
    %c0_15 = arith.constant 0 : index
    %c0_16 = arith.constant 0 : index
    %34 = vector.load %arg2[%c1, %c0_15, %c0_16] : memref<3x62x32xbf16, #tpu.memory_space<vmem>>, vector<1x62x32xbf16>
    %35 = vector.shape_cast %34 : vector<1x62x32xbf16> to vector<62x32xbf16>
    %cst_17 = arith.constant dense<0.000000e+00> : vector<32x32xf32>
    %36 = tpu.matmul %33, %35, %cst_17 {dimension_numbers = #tpu.dot_dimension_numbers<[1], [0], [0], [1], [0, 0, 1, 1], [], []>} : vector<32x62xbf16>, vector<62x32xbf16>, vector<32x32xf32> -> vector<32x32xf32>
    %37 = arith.addf %32, %36 : vector<32x32xf32>
    %38 = arith.truncf %28 : vector<32x62xf32> to vector<32x62xbf16>
    %c2 = arith.constant 2 : index
    %c0_18 = arith.constant 0 : index
    %c0_19 = arith.constant 0 : index
    %39 = vector.load %arg2[%c2, %c0_18, %c0_19] : memref<3x62x32xbf16, #tpu.memory_space<vmem>>, vector<1x62x32xbf16>
    %40 = vector.shape_cast %39 : vector<1x62x32xbf16> to vector<62x32xbf16>
    %cst_20 = arith.constant dense<0.000000e+00> : vector<32x32xf32>
    %41 = tpu.matmul %38, %40, %cst_20 {dimension_numbers = #tpu.dot_dimension_numbers<[1], [0], [0], [1], [0, 0, 1, 1], [], []>} : vector<32x62xbf16>, vector<62x32xbf16>, vector<32x32xf32> -> vector<32x32xf32>
    %42 = arith.addf %37, %41 : vector<32x32xf32>
    %c0_21 = arith.constant 0 : index
    %c0_22 = arith.constant 0 : index
    %43 = vector.load %arg3[%c0_21, %c0_22] : memref<1x32xf32, #tpu.memory_space<vmem>>, vector<1x32xf32>
    %44 = vector.broadcast %43 : vector<1x32xf32> to vector<32x32xf32>
    %45 = arith.mulf %42, %44 : vector<32x32xf32>
    %c0_23 = arith.constant 0 : index
    %c0_24 = arith.constant 0 : index
    %46 = vector.load %arg4[%c0_23, %c0_24] : memref<1x32xf32, #tpu.memory_space<vmem>>, vector<1x32xf32>
    %47 = vector.broadcast %46 : vector<1x32xf32> to vector<32x32xf32>
    %48 = arith.addf %45, %47 : vector<32x32xf32>
    %cst_25 = arith.constant 0.000000e+00 : f32
    %49 = vector.broadcast %cst_25 : f32 to vector<32x32xf32>
    %50 = arith.maximumf %48, %49 : vector<32x32xf32>
    %51 = tpu.iota {dimensions = array<i32: 0>} : vector<32x32xi32>
    %52 = tpu.iota {dimensions = array<i32: 1>} : vector<32x32xi32>
    %53 = arith.truncf %50 : vector<32x32xf32> to vector<32x32xbf16>
    %c1_i32_26 = arith.constant 1 : i32
    %54 = vector.broadcast %c1_i32_26 : i32 to vector<32x32xi32>
    %55 = arith.subi %51, %54 : vector<32x32xi32>
    %56 = arith.cmpi eq, %52, %55 : vector<32x32xi32>
    %cst_27 = arith.constant 1.000000e+00 : f32
    %cst_28 = arith.constant 0.000000e+00 : f32
    %57 = vector.broadcast %cst_27 : f32 to vector<32x32xf32>
    %58 = vector.broadcast %cst_28 : f32 to vector<32x32xf32>
    %59 = arith.select %56, %57, %58 : vector<32x32xi1>, vector<32x32xf32>
    %60 = arith.truncf %59 : vector<32x32xf32> to vector<32x32xbf16>
    %cst_29 = arith.constant dense<0.000000e+00> : vector<32x32xf32>
    %61 = tpu.matmul %60, %53, %cst_29 {dimension_numbers = #tpu.dot_dimension_numbers<[1], [0], [0], [1], [0, 0, 1, 1], [], []>} : vector<32x32xbf16>, vector<32x32xbf16>, vector<32x32xf32> -> vector<32x32xf32>
    %c1_i32_30 = arith.constant 1 : i32
    %62 = vector.broadcast %c1_i32_30 : i32 to vector<32x32xi32>
    %63 = arith.addi %51, %62 : vector<32x32xi32>
    %64 = arith.cmpi eq, %52, %63 : vector<32x32xi32>
    %cst_31 = arith.constant 1.000000e+00 : f32
    %cst_32 = arith.constant 0.000000e+00 : f32
    %65 = vector.broadcast %cst_31 : f32 to vector<32x32xf32>
    %66 = vector.broadcast %cst_32 : f32 to vector<32x32xf32>
    %67 = arith.select %64, %65, %66 : vector<32x32xi1>, vector<32x32xf32>
    %68 = arith.truncf %67 : vector<32x32xf32> to vector<32x32xbf16>
    %cst_33 = arith.constant dense<0.000000e+00> : vector<32x32xf32>
    %69 = tpu.matmul %68, %53, %cst_33 {dimension_numbers = #tpu.dot_dimension_numbers<[1], [0], [0], [1], [0, 0, 1, 1], [], []>} : vector<32x32xbf16>, vector<32x32xbf16>, vector<32x32xf32> -> vector<32x32xf32>
    %70 = arith.truncf %61 : vector<32x32xf32> to vector<32x32xbf16>
    %c0_34 = arith.constant 0 : index
    %c0_35 = arith.constant 0 : index
    %c0_36 = arith.constant 0 : index
    %71 = vector.load %arg5[%c0_34, %c0_35, %c0_36] : memref<3x32x32xbf16, #tpu.memory_space<vmem>>, vector<1x32x32xbf16>
    %72 = vector.shape_cast %71 : vector<1x32x32xbf16> to vector<32x32xbf16>
    %cst_37 = arith.constant dense<0.000000e+00> : vector<32x32xf32>
    %73 = tpu.matmul %70, %72, %cst_37 {dimension_numbers = #tpu.dot_dimension_numbers<[1], [0], [0], [1], [0, 0, 1, 1], [], []>} : vector<32x32xbf16>, vector<32x32xbf16>, vector<32x32xf32> -> vector<32x32xf32>
    %c1_38 = arith.constant 1 : index
    %c0_39 = arith.constant 0 : index
    %c0_40 = arith.constant 0 : index
    %74 = vector.load %arg5[%c1_38, %c0_39, %c0_40] : memref<3x32x32xbf16, #tpu.memory_space<vmem>>, vector<1x32x32xbf16>
    %75 = vector.shape_cast %74 : vector<1x32x32xbf16> to vector<32x32xbf16>
    %cst_41 = arith.constant dense<0.000000e+00> : vector<32x32xf32>
    %76 = tpu.matmul %53, %75, %cst_41 {dimension_numbers = #tpu.dot_dimension_numbers<[1], [0], [0], [1], [0, 0, 1, 1], [], []>} : vector<32x32xbf16>, vector<32x32xbf16>, vector<32x32xf32> -> vector<32x32xf32>
    %77 = arith.addf %73, %76 : vector<32x32xf32>
    %78 = arith.truncf %69 : vector<32x32xf32> to vector<32x32xbf16>
    %c2_42 = arith.constant 2 : index
    %c0_43 = arith.constant 0 : index
    %c0_44 = arith.constant 0 : index
    %79 = vector.load %arg5[%c2_42, %c0_43, %c0_44] : memref<3x32x32xbf16, #tpu.memory_space<vmem>>, vector<1x32x32xbf16>
    %80 = vector.shape_cast %79 : vector<1x32x32xbf16> to vector<32x32xbf16>
    %cst_45 = arith.constant dense<0.000000e+00> : vector<32x32xf32>
    %81 = tpu.matmul %78, %80, %cst_45 {dimension_numbers = #tpu.dot_dimension_numbers<[1], [0], [0], [1], [0, 0, 1, 1], [], []>} : vector<32x32xbf16>, vector<32x32xbf16>, vector<32x32xf32> -> vector<32x32xf32>
    %82 = arith.addf %77, %81 : vector<32x32xf32>
    %c0_46 = arith.constant 0 : index
    %c0_47 = arith.constant 0 : index
    %83 = vector.load %arg6[%c0_46, %c0_47] : memref<1x32xf32, #tpu.memory_space<vmem>>, vector<1x32xf32>
    %84 = vector.broadcast %83 : vector<1x32xf32> to vector<32x32xf32>
    %85 = arith.mulf %82, %84 : vector<32x32xf32>
    %c0_48 = arith.constant 0 : index
    %c0_49 = arith.constant 0 : index
    %86 = vector.load %arg7[%c0_48, %c0_49] : memref<1x32xf32, #tpu.memory_space<vmem>>, vector<1x32xf32>
    %87 = vector.broadcast %86 : vector<1x32xf32> to vector<32x32xf32>
    %88 = arith.addf %85, %87 : vector<32x32xf32>
    %89 = arith.truncf %20 : vector<32x62xf32> to vector<32x62xbf16>
    %c0_50 = arith.constant 0 : index
    %c0_51 = arith.constant 0 : index
    %90 = vector.load %arg8[%c0_50, %c0_51] : memref<62x32xbf16, #tpu.memory_space<vmem>>, vector<62x32xbf16>
    %cst_52 = arith.constant dense<0.000000e+00> : vector<32x32xf32>
    %91 = tpu.matmul %89, %90, %cst_52 {dimension_numbers = #tpu.dot_dimension_numbers<[1], [0], [0], [1], [0, 0, 1, 1], [], []>} : vector<32x62xbf16>, vector<62x32xbf16>, vector<32x32xf32> -> vector<32x32xf32>
    %c0_53 = arith.constant 0 : index
    %c0_54 = arith.constant 0 : index
    %92 = vector.load %arg9[%c0_53, %c0_54] : memref<1x32xf32, #tpu.memory_space<vmem>>, vector<1x32xf32>
    %93 = vector.broadcast %92 : vector<1x32xf32> to vector<32x32xf32>
    %94 = arith.mulf %91, %93 : vector<32x32xf32>
    %c0_55 = arith.constant 0 : index
    %c0_56 = arith.constant 0 : index
    %95 = vector.load %arg10[%c0_55, %c0_56] : memref<1x32xf32, #tpu.memory_space<vmem>>, vector<1x32xf32>
    %96 = vector.broadcast %95 : vector<1x32xf32> to vector<32x32xf32>
    %97 = arith.addf %94, %96 : vector<32x32xf32>
    %98 = arith.addf %88, %97 : vector<32x32xf32>
    %cst_57 = arith.constant 0.000000e+00 : f32
    %99 = vector.broadcast %cst_57 : f32 to vector<32x32xf32>
    %100 = arith.maximumf %98, %99 : vector<32x32xf32>
    %101 = arith.truncf %100 : vector<32x32xf32> to vector<32x32xbf16>
    %102 = tpu.iota {dimensions = array<i32: 0>} : vector<16x32xi32>
    %103 = tpu.iota {dimensions = array<i32: 1>} : vector<16x32xi32>
    %c2_i32_58 = arith.constant 2 : i32
    %104 = vector.broadcast %c2_i32_58 : i32 to vector<16x32xi32>
    %105 = arith.muli %104, %102 : vector<16x32xi32>
    %c1_i32_59 = arith.constant 1 : i32
    %106 = vector.broadcast %c1_i32_59 : i32 to vector<16x32xi32>
    %107 = arith.subi %105, %106 : vector<16x32xi32>
    %108 = arith.cmpi eq, %103, %107 : vector<16x32xi32>
    %cst_60 = arith.constant 1.000000e+00 : f32
    %cst_61 = arith.constant 0.000000e+00 : f32
    %109 = vector.broadcast %cst_60 : f32 to vector<16x32xf32>
    %110 = vector.broadcast %cst_61 : f32 to vector<16x32xf32>
    %111 = arith.select %108, %109, %110 : vector<16x32xi1>, vector<16x32xf32>
    %112 = arith.truncf %111 : vector<16x32xf32> to vector<16x32xbf16>
    %cst_62 = arith.constant dense<0.000000e+00> : vector<16x32xf32>
    %113 = tpu.matmul %112, %101, %cst_62 {dimension_numbers = #tpu.dot_dimension_numbers<[1], [0], [0], [1], [0, 0, 1, 1], [], []>} : vector<16x32xbf16>, vector<32x32xbf16>, vector<16x32xf32> -> vector<16x32xf32>
    %114 = arith.cmpi eq, %103, %105 : vector<16x32xi32>
    %cst_63 = arith.constant 1.000000e+00 : f32
    %cst_64 = arith.constant 0.000000e+00 : f32
    %115 = vector.broadcast %cst_63 : f32 to vector<16x32xf32>
    %116 = vector.broadcast %cst_64 : f32 to vector<16x32xf32>
    %117 = arith.select %114, %115, %116 : vector<16x32xi1>, vector<16x32xf32>
    %118 = arith.truncf %117 : vector<16x32xf32> to vector<16x32xbf16>
    %cst_65 = arith.constant dense<0.000000e+00> : vector<16x32xf32>
    %119 = tpu.matmul %118, %101, %cst_65 {dimension_numbers = #tpu.dot_dimension_numbers<[1], [0], [0], [1], [0, 0, 1, 1], [], []>} : vector<16x32xbf16>, vector<32x32xbf16>, vector<16x32xf32> -> vector<16x32xf32>
    %c1_i32_66 = arith.constant 1 : i32
    %120 = vector.broadcast %c1_i32_66 : i32 to vector<16x32xi32>
    %121 = arith.addi %105, %120 : vector<16x32xi32>
    %122 = arith.cmpi eq, %103, %121 : vector<16x32xi32>
    %cst_67 = arith.constant 1.000000e+00 : f32
    %cst_68 = arith.constant 0.000000e+00 : f32
    %123 = vector.broadcast %cst_67 : f32 to vector<16x32xf32>
    %124 = vector.broadcast %cst_68 : f32 to vector<16x32xf32>
    %125 = arith.select %122, %123, %124 : vector<16x32xi1>, vector<16x32xf32>
    %126 = arith.truncf %125 : vector<16x32xf32> to vector<16x32xbf16>
    %cst_69 = arith.constant dense<0.000000e+00> : vector<16x32xf32>
    %127 = tpu.matmul %126, %101, %cst_69 {dimension_numbers = #tpu.dot_dimension_numbers<[1], [0], [0], [1], [0, 0, 1, 1], [], []>} : vector<16x32xbf16>, vector<32x32xbf16>, vector<16x32xf32> -> vector<16x32xf32>
    %128 = arith.truncf %113 : vector<16x32xf32> to vector<16x32xbf16>
    %c0_70 = arith.constant 0 : index
    %c0_71 = arith.constant 0 : index
    %c0_72 = arith.constant 0 : index
    %129 = vector.load %arg11[%c0_70, %c0_71, %c0_72] : memref<3x32x32xbf16, #tpu.memory_space<vmem>>, vector<1x32x32xbf16>
    %130 = vector.shape_cast %129 : vector<1x32x32xbf16> to vector<32x32xbf16>
    %cst_73 = arith.constant dense<0.000000e+00> : vector<16x32xf32>
    %131 = tpu.matmul %128, %130, %cst_73 {dimension_numbers = #tpu.dot_dimension_numbers<[1], [0], [0], [1], [0, 0, 1, 1], [], []>} : vector<16x32xbf16>, vector<32x32xbf16>, vector<16x32xf32> -> vector<16x32xf32>
    %132 = arith.truncf %119 : vector<16x32xf32> to vector<16x32xbf16>
    %c1_74 = arith.constant 1 : index
    %c0_75 = arith.constant 0 : index
    %c0_76 = arith.constant 0 : index
    %133 = vector.load %arg11[%c1_74, %c0_75, %c0_76] : memref<3x32x32xbf16, #tpu.memory_space<vmem>>, vector<1x32x32xbf16>
    %134 = vector.shape_cast %133 : vector<1x32x32xbf16> to vector<32x32xbf16>
    %cst_77 = arith.constant dense<0.000000e+00> : vector<16x32xf32>
    %135 = tpu.matmul %132, %134, %cst_77 {dimension_numbers = #tpu.dot_dimension_numbers<[1], [0], [0], [1], [0, 0, 1, 1], [], []>} : vector<16x32xbf16>, vector<32x32xbf16>, vector<16x32xf32> -> vector<16x32xf32>
    %136 = arith.addf %131, %135 : vector<16x32xf32>
    %137 = arith.truncf %127 : vector<16x32xf32> to vector<16x32xbf16>
    %c2_78 = arith.constant 2 : index
    %c0_79 = arith.constant 0 : index
    %c0_80 = arith.constant 0 : index
    %138 = vector.load %arg11[%c2_78, %c0_79, %c0_80] : memref<3x32x32xbf16, #tpu.memory_space<vmem>>, vector<1x32x32xbf16>
    %139 = vector.shape_cast %138 : vector<1x32x32xbf16> to vector<32x32xbf16>
    %cst_81 = arith.constant dense<0.000000e+00> : vector<16x32xf32>
    %140 = tpu.matmul %137, %139, %cst_81 {dimension_numbers = #tpu.dot_dimension_numbers<[1], [0], [0], [1], [0, 0, 1, 1], [], []>} : vector<16x32xbf16>, vector<32x32xbf16>, vector<16x32xf32> -> vector<16x32xf32>
    %141 = arith.addf %136, %140 : vector<16x32xf32>
    %c0_82 = arith.constant 0 : index
    %c0_83 = arith.constant 0 : index
    %142 = vector.load %arg12[%c0_82, %c0_83] : memref<1x32xf32, #tpu.memory_space<vmem>>, vector<1x32xf32>
    %143 = vector.broadcast %142 : vector<1x32xf32> to vector<16x32xf32>
    %144 = arith.mulf %141, %143 : vector<16x32xf32>
    %c0_84 = arith.constant 0 : index
    %c0_85 = arith.constant 0 : index
    %145 = vector.load %arg13[%c0_84, %c0_85] : memref<1x32xf32, #tpu.memory_space<vmem>>, vector<1x32xf32>
    %146 = vector.broadcast %145 : vector<1x32xf32> to vector<16x32xf32>
    %147 = arith.addf %144, %146 : vector<16x32xf32>
    %cst_86 = arith.constant 0.000000e+00 : f32
    %148 = vector.broadcast %cst_86 : f32 to vector<16x32xf32>
    %149 = arith.maximumf %147, %148 : vector<16x32xf32>
    %150 = tpu.iota {dimensions = array<i32: 0>} : vector<16x16xi32>
    %151 = tpu.iota {dimensions = array<i32: 1>} : vector<16x16xi32>
    %152 = arith.truncf %149 : vector<16x32xf32> to vector<16x32xbf16>
    %c1_i32_87 = arith.constant 1 : i32
    %153 = vector.broadcast %c1_i32_87 : i32 to vector<16x16xi32>
    %154 = arith.subi %150, %153 : vector<16x16xi32>
    %155 = arith.cmpi eq, %151, %154 : vector<16x16xi32>
    %cst_88 = arith.constant 1.000000e+00 : f32
    %cst_89 = arith.constant 0.000000e+00 : f32
    %156 = vector.broadcast %cst_88 : f32 to vector<16x16xf32>
    %157 = vector.broadcast %cst_89 : f32 to vector<16x16xf32>
    %158 = arith.select %155, %156, %157 : vector<16x16xi1>, vector<16x16xf32>
    %159 = arith.truncf %158 : vector<16x16xf32> to vector<16x16xbf16>
    %cst_90 = arith.constant dense<0.000000e+00> : vector<16x32xf32>
    %160 = tpu.matmul %159, %152, %cst_90 {dimension_numbers = #tpu.dot_dimension_numbers<[1], [0], [0], [1], [0, 0, 1, 1], [], []>} : vector<16x16xbf16>, vector<16x32xbf16>, vector<16x32xf32> -> vector<16x32xf32>
    %c1_i32_91 = arith.constant 1 : i32
    %161 = vector.broadcast %c1_i32_91 : i32 to vector<16x16xi32>
    %162 = arith.addi %150, %161 : vector<16x16xi32>
    %163 = arith.cmpi eq, %151, %162 : vector<16x16xi32>
    %cst_92 = arith.constant 1.000000e+00 : f32
    %cst_93 = arith.constant 0.000000e+00 : f32
    %164 = vector.broadcast %cst_92 : f32 to vector<16x16xf32>
    %165 = vector.broadcast %cst_93 : f32 to vector<16x16xf32>
    %166 = arith.select %163, %164, %165 : vector<16x16xi1>, vector<16x16xf32>
    %167 = arith.truncf %166 : vector<16x16xf32> to vector<16x16xbf16>
    %cst_94 = arith.constant dense<0.000000e+00> : vector<16x32xf32>
    %168 = tpu.matmul %167, %152, %cst_94 {dimension_numbers = #tpu.dot_dimension_numbers<[1], [0], [0], [1], [0, 0, 1, 1], [], []>} : vector<16x16xbf16>, vector<16x32xbf16>, vector<16x32xf32> -> vector<16x32xf32>
    %169 = arith.truncf %160 : vector<16x32xf32> to vector<16x32xbf16>
    %c0_95 = arith.constant 0 : index
    %c0_96 = arith.constant 0 : index
    %c0_97 = arith.constant 0 : index
    %170 = vector.load %arg14[%c0_95, %c0_96, %c0_97] : memref<3x32x32xbf16, #tpu.memory_space<vmem>>, vector<1x32x32xbf16>
    %171 = vector.shape_cast %170 : vector<1x32x32xbf16> to vector<32x32xbf16>
    %cst_98 = arith.constant dense<0.000000e+00> : vector<16x32xf32>
    %172 = tpu.matmul %169, %171, %cst_98 {dimension_numbers = #tpu.dot_dimension_numbers<[1], [0], [0], [1], [0, 0, 1, 1], [], []>} : vector<16x32xbf16>, vector<32x32xbf16>, vector<16x32xf32> -> vector<16x32xf32>
    %c1_99 = arith.constant 1 : index
    %c0_100 = arith.constant 0 : index
    %c0_101 = arith.constant 0 : index
    %173 = vector.load %arg14[%c1_99, %c0_100, %c0_101] : memref<3x32x32xbf16, #tpu.memory_space<vmem>>, vector<1x32x32xbf16>
    %174 = vector.shape_cast %173 : vector<1x32x32xbf16> to vector<32x32xbf16>
    %cst_102 = arith.constant dense<0.000000e+00> : vector<16x32xf32>
    %175 = tpu.matmul %152, %174, %cst_102 {dimension_numbers = #tpu.dot_dimension_numbers<[1], [0], [0], [1], [0, 0, 1, 1], [], []>} : vector<16x32xbf16>, vector<32x32xbf16>, vector<16x32xf32> -> vector<16x32xf32>
    %176 = arith.addf %172, %175 : vector<16x32xf32>
    %177 = arith.truncf %168 : vector<16x32xf32> to vector<16x32xbf16>
    %c2_103 = arith.constant 2 : index
    %c0_104 = arith.constant 0 : index
    %c0_105 = arith.constant 0 : index
    %178 = vector.load %arg14[%c2_103, %c0_104, %c0_105] : memref<3x32x32xbf16, #tpu.memory_space<vmem>>, vector<1x32x32xbf16>
    %179 = vector.shape_cast %178 : vector<1x32x32xbf16> to vector<32x32xbf16>
    %cst_106 = arith.constant dense<0.000000e+00> : vector<16x32xf32>
    %180 = tpu.matmul %177, %179, %cst_106 {dimension_numbers = #tpu.dot_dimension_numbers<[1], [0], [0], [1], [0, 0, 1, 1], [], []>} : vector<16x32xbf16>, vector<32x32xbf16>, vector<16x32xf32> -> vector<16x32xf32>
    %181 = arith.addf %176, %180 : vector<16x32xf32>
    %c0_107 = arith.constant 0 : index
    %c0_108 = arith.constant 0 : index
    %182 = vector.load %arg15[%c0_107, %c0_108] : memref<1x32xf32, #tpu.memory_space<vmem>>, vector<1x32xf32>
    %183 = vector.broadcast %182 : vector<1x32xf32> to vector<16x32xf32>
    %184 = arith.mulf %181, %183 : vector<16x32xf32>
    %c0_109 = arith.constant 0 : index
    %c0_110 = arith.constant 0 : index
    %185 = vector.load %arg16[%c0_109, %c0_110] : memref<1x32xf32, #tpu.memory_space<vmem>>, vector<1x32xf32>
    %186 = vector.broadcast %185 : vector<1x32xf32> to vector<16x32xf32>
    %187 = arith.addf %184, %186 : vector<16x32xf32>
    %188 = arith.truncf %119 : vector<16x32xf32> to vector<16x32xbf16>
    %c0_111 = arith.constant 0 : index
    %c0_112 = arith.constant 0 : index
    %189 = vector.load %arg17[%c0_111, %c0_112] : memref<32x32xbf16, #tpu.memory_space<vmem>>, vector<32x32xbf16>
    %cst_113 = arith.constant dense<0.000000e+00> : vector<16x32xf32>
    %190 = tpu.matmul %188, %189, %cst_113 {dimension_numbers = #tpu.dot_dimension_numbers<[1], [0], [0], [1], [0, 0, 1, 1], [], []>} : vector<16x32xbf16>, vector<32x32xbf16>, vector<16x32xf32> -> vector<16x32xf32>
    %c0_114 = arith.constant 0 : index
    %c0_115 = arith.constant 0 : index
    %191 = vector.load %arg18[%c0_114, %c0_115] : memref<1x32xf32, #tpu.memory_space<vmem>>, vector<1x32xf32>
    %192 = vector.broadcast %191 : vector<1x32xf32> to vector<16x32xf32>
    %193 = arith.mulf %190, %192 : vector<16x32xf32>
    %c0_116 = arith.constant 0 : index
    %c0_117 = arith.constant 0 : index
    %194 = vector.load %arg19[%c0_116, %c0_117] : memref<1x32xf32, #tpu.memory_space<vmem>>, vector<1x32xf32>
    %195 = vector.broadcast %194 : vector<1x32xf32> to vector<16x32xf32>
    %196 = arith.addf %193, %195 : vector<16x32xf32>
    %197 = arith.addf %187, %196 : vector<16x32xf32>
    %cst_118 = arith.constant 0.000000e+00 : f32
    %198 = vector.broadcast %cst_118 : f32 to vector<16x32xf32>
    %199 = arith.maximumf %197, %198 : vector<16x32xf32>
    %200 = arith.truncf %199 : vector<16x32xf32> to vector<16x32xbf16>
    %201 = tpu.iota {dimensions = array<i32: 0>} : vector<8x16xi32>
    %202 = tpu.iota {dimensions = array<i32: 1>} : vector<8x16xi32>
    %c2_i32_119 = arith.constant 2 : i32
    %203 = vector.broadcast %c2_i32_119 : i32 to vector<8x16xi32>
    %204 = arith.muli %203, %201 : vector<8x16xi32>
    %c1_i32_120 = arith.constant 1 : i32
    %205 = vector.broadcast %c1_i32_120 : i32 to vector<8x16xi32>
    %206 = arith.subi %204, %205 : vector<8x16xi32>
    %207 = arith.cmpi eq, %202, %206 : vector<8x16xi32>
    %cst_121 = arith.constant 1.000000e+00 : f32
    %cst_122 = arith.constant 0.000000e+00 : f32
    %208 = vector.broadcast %cst_121 : f32 to vector<8x16xf32>
    %209 = vector.broadcast %cst_122 : f32 to vector<8x16xf32>
    %210 = arith.select %207, %208, %209 : vector<8x16xi1>, vector<8x16xf32>
    %211 = arith.truncf %210 : vector<8x16xf32> to vector<8x16xbf16>
    %cst_123 = arith.constant dense<0.000000e+00> : vector<8x32xf32>
    %212 = tpu.matmul %211, %200, %cst_123 {dimension_numbers = #tpu.dot_dimension_numbers<[1], [0], [0], [1], [0, 0, 1, 1], [], []>} : vector<8x16xbf16>, vector<16x32xbf16>, vector<8x32xf32> -> vector<8x32xf32>
    %213 = arith.cmpi eq, %202, %204 : vector<8x16xi32>
    %cst_124 = arith.constant 1.000000e+00 : f32
    %cst_125 = arith.constant 0.000000e+00 : f32
    %214 = vector.broadcast %cst_124 : f32 to vector<8x16xf32>
    %215 = vector.broadcast %cst_125 : f32 to vector<8x16xf32>
    %216 = arith.select %213, %214, %215 : vector<8x16xi1>, vector<8x16xf32>
    %217 = arith.truncf %216 : vector<8x16xf32> to vector<8x16xbf16>
    %cst_126 = arith.constant dense<0.000000e+00> : vector<8x32xf32>
    %218 = tpu.matmul %217, %200, %cst_126 {dimension_numbers = #tpu.dot_dimension_numbers<[1], [0], [0], [1], [0, 0, 1, 1], [], []>} : vector<8x16xbf16>, vector<16x32xbf16>, vector<8x32xf32> -> vector<8x32xf32>
    %c1_i32_127 = arith.constant 1 : i32
    %219 = vector.broadcast %c1_i32_127 : i32 to vector<8x16xi32>
    %220 = arith.addi %204, %219 : vector<8x16xi32>
    %221 = arith.cmpi eq, %202, %220 : vector<8x16xi32>
    %cst_128 = arith.constant 1.000000e+00 : f32
    %cst_129 = arith.constant 0.000000e+00 : f32
    %222 = vector.broadcast %cst_128 : f32 to vector<8x16xf32>
    %223 = vector.broadcast %cst_129 : f32 to vector<8x16xf32>
    %224 = arith.select %221, %222, %223 : vector<8x16xi1>, vector<8x16xf32>
    %225 = arith.truncf %224 : vector<8x16xf32> to vector<8x16xbf16>
    %cst_130 = arith.constant dense<0.000000e+00> : vector<8x32xf32>
    %226 = tpu.matmul %225, %200, %cst_130 {dimension_numbers = #tpu.dot_dimension_numbers<[1], [0], [0], [1], [0, 0, 1, 1], [], []>} : vector<8x16xbf16>, vector<16x32xbf16>, vector<8x32xf32> -> vector<8x32xf32>
    %227 = arith.truncf %212 : vector<8x32xf32> to vector<8x32xbf16>
    %c0_131 = arith.constant 0 : index
    %c0_132 = arith.constant 0 : index
    %c0_133 = arith.constant 0 : index
    %228 = vector.load %arg20[%c0_131, %c0_132, %c0_133] : memref<3x32x32xbf16, #tpu.memory_space<vmem>>, vector<1x32x32xbf16>
    %229 = vector.shape_cast %228 : vector<1x32x32xbf16> to vector<32x32xbf16>
    %cst_134 = arith.constant dense<0.000000e+00> : vector<8x32xf32>
    %230 = tpu.matmul %227, %229, %cst_134 {dimension_numbers = #tpu.dot_dimension_numbers<[1], [0], [0], [1], [0, 0, 1, 1], [], []>} : vector<8x32xbf16>, vector<32x32xbf16>, vector<8x32xf32> -> vector<8x32xf32>
    %231 = arith.truncf %218 : vector<8x32xf32> to vector<8x32xbf16>
    %c1_135 = arith.constant 1 : index
    %c0_136 = arith.constant 0 : index
    %c0_137 = arith.constant 0 : index
    %232 = vector.load %arg20[%c1_135, %c0_136, %c0_137] : memref<3x32x32xbf16, #tpu.memory_space<vmem>>, vector<1x32x32xbf16>
    %233 = vector.shape_cast %232 : vector<1x32x32xbf16> to vector<32x32xbf16>
    %cst_138 = arith.constant dense<0.000000e+00> : vector<8x32xf32>
    %234 = tpu.matmul %231, %233, %cst_138 {dimension_numbers = #tpu.dot_dimension_numbers<[1], [0], [0], [1], [0, 0, 1, 1], [], []>} : vector<8x32xbf16>, vector<32x32xbf16>, vector<8x32xf32> -> vector<8x32xf32>
    %235 = arith.addf %230, %234 : vector<8x32xf32>
    %236 = arith.truncf %226 : vector<8x32xf32> to vector<8x32xbf16>
    %c2_139 = arith.constant 2 : index
    %c0_140 = arith.constant 0 : index
    %c0_141 = arith.constant 0 : index
    %237 = vector.load %arg20[%c2_139, %c0_140, %c0_141] : memref<3x32x32xbf16, #tpu.memory_space<vmem>>, vector<1x32x32xbf16>
    %238 = vector.shape_cast %237 : vector<1x32x32xbf16> to vector<32x32xbf16>
    %cst_142 = arith.constant dense<0.000000e+00> : vector<8x32xf32>
    %239 = tpu.matmul %236, %238, %cst_142 {dimension_numbers = #tpu.dot_dimension_numbers<[1], [0], [0], [1], [0, 0, 1, 1], [], []>} : vector<8x32xbf16>, vector<32x32xbf16>, vector<8x32xf32> -> vector<8x32xf32>
    %240 = arith.addf %235, %239 : vector<8x32xf32>
    %c0_143 = arith.constant 0 : index
    %c0_144 = arith.constant 0 : index
    %241 = vector.load %arg21[%c0_143, %c0_144] : memref<1x32xf32, #tpu.memory_space<vmem>>, vector<1x32xf32>
    %242 = vector.broadcast %241 : vector<1x32xf32> to vector<8x32xf32>
    %243 = arith.mulf %240, %242 : vector<8x32xf32>
    %c0_145 = arith.constant 0 : index
    %c0_146 = arith.constant 0 : index
    %244 = vector.load %arg22[%c0_145, %c0_146] : memref<1x32xf32, #tpu.memory_space<vmem>>, vector<1x32xf32>
    %245 = vector.broadcast %244 : vector<1x32xf32> to vector<8x32xf32>
    %246 = arith.addf %243, %245 : vector<8x32xf32>
    %cst_147 = arith.constant 0.000000e+00 : f32
    %247 = vector.broadcast %cst_147 : f32 to vector<8x32xf32>
    %248 = arith.maximumf %246, %247 : vector<8x32xf32>
    %249 = tpu.iota {dimensions = array<i32: 0>} : vector<8x8xi32>
    %250 = tpu.iota {dimensions = array<i32: 1>} : vector<8x8xi32>
    %251 = arith.truncf %248 : vector<8x32xf32> to vector<8x32xbf16>
    %c1_i32_148 = arith.constant 1 : i32
    %252 = vector.broadcast %c1_i32_148 : i32 to vector<8x8xi32>
    %253 = arith.subi %249, %252 : vector<8x8xi32>
    %254 = arith.cmpi eq, %250, %253 : vector<8x8xi32>
    %cst_149 = arith.constant 1.000000e+00 : f32
    %cst_150 = arith.constant 0.000000e+00 : f32
    %255 = vector.broadcast %cst_149 : f32 to vector<8x8xf32>
    %256 = vector.broadcast %cst_150 : f32 to vector<8x8xf32>
    %257 = arith.select %254, %255, %256 : vector<8x8xi1>, vector<8x8xf32>
    %258 = arith.truncf %257 : vector<8x8xf32> to vector<8x8xbf16>
    %cst_151 = arith.constant dense<0.000000e+00> : vector<8x32xf32>
    %259 = tpu.matmul %258, %251, %cst_151 {dimension_numbers = #tpu.dot_dimension_numbers<[1], [0], [0], [1], [0, 0, 1, 1], [], []>} : vector<8x8xbf16>, vector<8x32xbf16>, vector<8x32xf32> -> vector<8x32xf32>
    %c1_i32_152 = arith.constant 1 : i32
    %260 = vector.broadcast %c1_i32_152 : i32 to vector<8x8xi32>
    %261 = arith.addi %249, %260 : vector<8x8xi32>
    %262 = arith.cmpi eq, %250, %261 : vector<8x8xi32>
    %cst_153 = arith.constant 1.000000e+00 : f32
    %cst_154 = arith.constant 0.000000e+00 : f32
    %263 = vector.broadcast %cst_153 : f32 to vector<8x8xf32>
    %264 = vector.broadcast %cst_154 : f32 to vector<8x8xf32>
    %265 = arith.select %262, %263, %264 : vector<8x8xi1>, vector<8x8xf32>
    %266 = arith.truncf %265 : vector<8x8xf32> to vector<8x8xbf16>
    %cst_155 = arith.constant dense<0.000000e+00> : vector<8x32xf32>
    %267 = tpu.matmul %266, %251, %cst_155 {dimension_numbers = #tpu.dot_dimension_numbers<[1], [0], [0], [1], [0, 0, 1, 1], [], []>} : vector<8x8xbf16>, vector<8x32xbf16>, vector<8x32xf32> -> vector<8x32xf32>
    %268 = arith.truncf %259 : vector<8x32xf32> to vector<8x32xbf16>
    %c0_156 = arith.constant 0 : index
    %c0_157 = arith.constant 0 : index
    %c0_158 = arith.constant 0 : index
    %269 = vector.load %arg23[%c0_156, %c0_157, %c0_158] : memref<3x32x32xbf16, #tpu.memory_space<vmem>>, vector<1x32x32xbf16>
    %270 = vector.shape_cast %269 : vector<1x32x32xbf16> to vector<32x32xbf16>
    %cst_159 = arith.constant dense<0.000000e+00> : vector<8x32xf32>
    %271 = tpu.matmul %268, %270, %cst_159 {dimension_numbers = #tpu.dot_dimension_numbers<[1], [0], [0], [1], [0, 0, 1, 1], [], []>} : vector<8x32xbf16>, vector<32x32xbf16>, vector<8x32xf32> -> vector<8x32xf32>
    %c1_160 = arith.constant 1 : index
    %c0_161 = arith.constant 0 : index
    %c0_162 = arith.constant 0 : index
    %272 = vector.load %arg23[%c1_160, %c0_161, %c0_162] : memref<3x32x32xbf16, #tpu.memory_space<vmem>>, vector<1x32x32xbf16>
    %273 = vector.shape_cast %272 : vector<1x32x32xbf16> to vector<32x32xbf16>
    %cst_163 = arith.constant dense<0.000000e+00> : vector<8x32xf32>
    %274 = tpu.matmul %251, %273, %cst_163 {dimension_numbers = #tpu.dot_dimension_numbers<[1], [0], [0], [1], [0, 0, 1, 1], [], []>} : vector<8x32xbf16>, vector<32x32xbf16>, vector<8x32xf32> -> vector<8x32xf32>
    %275 = arith.addf %271, %274 : vector<8x32xf32>
    %276 = arith.truncf %267 : vector<8x32xf32> to vector<8x32xbf16>
    %c2_164 = arith.constant 2 : index
    %c0_165 = arith.constant 0 : index
    %c0_166 = arith.constant 0 : index
    %277 = vector.load %arg23[%c2_164, %c0_165, %c0_166] : memref<3x32x32xbf16, #tpu.memory_space<vmem>>, vector<1x32x32xbf16>
    %278 = vector.shape_cast %277 : vector<1x32x32xbf16> to vector<32x32xbf16>
    %cst_167 = arith.constant dense<0.000000e+00> : vector<8x32xf32>
    %279 = tpu.matmul %276, %278, %cst_167 {dimension_numbers = #tpu.dot_dimension_numbers<[1], [0], [0], [1], [0, 0, 1, 1], [], []>} : vector<8x32xbf16>, vector<32x32xbf16>, vector<8x32xf32> -> vector<8x32xf32>
    %280 = arith.addf %275, %279 : vector<8x32xf32>
    %c0_168 = arith.constant 0 : index
    %c0_169 = arith.constant 0 : index
    %281 = vector.load %arg24[%c0_168, %c0_169] : memref<1x32xf32, #tpu.memory_space<vmem>>, vector<1x32xf32>
    %282 = vector.broadcast %281 : vector<1x32xf32> to vector<8x32xf32>
    %283 = arith.mulf %280, %282 : vector<8x32xf32>
    %c0_170 = arith.constant 0 : index
    %c0_171 = arith.constant 0 : index
    %284 = vector.load %arg25[%c0_170, %c0_171] : memref<1x32xf32, #tpu.memory_space<vmem>>, vector<1x32xf32>
    %285 = vector.broadcast %284 : vector<1x32xf32> to vector<8x32xf32>
    %286 = arith.addf %283, %285 : vector<8x32xf32>
    %287 = arith.truncf %218 : vector<8x32xf32> to vector<8x32xbf16>
    %c0_172 = arith.constant 0 : index
    %c0_173 = arith.constant 0 : index
    %288 = vector.load %arg26[%c0_172, %c0_173] : memref<32x32xbf16, #tpu.memory_space<vmem>>, vector<32x32xbf16>
    %cst_174 = arith.constant dense<0.000000e+00> : vector<8x32xf32>
    %289 = tpu.matmul %287, %288, %cst_174 {dimension_numbers = #tpu.dot_dimension_numbers<[1], [0], [0], [1], [0, 0, 1, 1], [], []>} : vector<8x32xbf16>, vector<32x32xbf16>, vector<8x32xf32> -> vector<8x32xf32>
    %c0_175 = arith.constant 0 : index
    %c0_176 = arith.constant 0 : index
    %290 = vector.load %arg27[%c0_175, %c0_176] : memref<1x32xf32, #tpu.memory_space<vmem>>, vector<1x32xf32>
    %291 = vector.broadcast %290 : vector<1x32xf32> to vector<8x32xf32>
    %292 = arith.mulf %289, %291 : vector<8x32xf32>
    %c0_177 = arith.constant 0 : index
    %c0_178 = arith.constant 0 : index
    %293 = vector.load %arg28[%c0_177, %c0_178] : memref<1x32xf32, #tpu.memory_space<vmem>>, vector<1x32xf32>
    %294 = vector.broadcast %293 : vector<1x32xf32> to vector<8x32xf32>
    %295 = arith.addf %292, %294 : vector<8x32xf32>
    %296 = arith.addf %286, %295 : vector<8x32xf32>
    %cst_179 = arith.constant 0.000000e+00 : f32
    %297 = vector.broadcast %cst_179 : f32 to vector<8x32xf32>
    %298 = arith.maximumf %296, %297 : vector<8x32xf32>
    %299 = arith.truncf %298 : vector<8x32xf32> to vector<8x32xbf16>
    %c0_180 = arith.constant 0 : index
    %c0_181 = arith.constant 0 : index
    %300 = vector.load %arg29[%c0_180, %c0_181] : memref<32x32xbf16, #tpu.memory_space<vmem>>, vector<32x32xbf16>
    %cst_182 = arith.constant dense<0.000000e+00> : vector<8x32xf32>
    %301 = tpu.matmul %299, %300, %cst_182 {dimension_numbers = #tpu.dot_dimension_numbers<[1], [0], [0], [1], [0, 0, 1, 1], [], []>} : vector<8x32xbf16>, vector<32x32xbf16>, vector<8x32xf32> -> vector<8x32xf32>
    %c0_183 = arith.constant 0 : index
    %c0_184 = arith.constant 0 : index
    %302 = vector.load %arg30[%c0_183, %c0_184] : memref<1x32xf32, #tpu.memory_space<vmem>>, vector<1x32xf32>
    %303 = vector.broadcast %302 : vector<1x32xf32> to vector<8x32xf32>
    %304 = arith.addf %301, %303 : vector<8x32xf32>
    %305 = arith.truncf %304 : vector<8x32xf32> to vector<8x32xbf16>
    %c0_185 = arith.constant 0 : index
    %c0_186 = arith.constant 0 : index
    %306 = vector.load %arg34[%c0_185, %c0_186] : memref<32x96xbf16, #tpu.memory_space<vmem>>, vector<32x96xbf16>
    %cst_187 = arith.constant dense<0.000000e+00> : vector<8x96xf32>
    %307 = tpu.matmul %305, %306, %cst_187 {dimension_numbers = #tpu.dot_dimension_numbers<[1], [0], [0], [1], [0, 0, 1, 1], [], []>} : vector<8x32xbf16>, vector<32x96xbf16>, vector<8x96xf32> -> vector<8x96xf32>
    %c0_188 = arith.constant 0 : index
    %c0_189 = arith.constant 0 : index
    %308 = vector.load %arg35[%c0_188, %c0_189] : memref<1x96xf32, #tpu.memory_space<vmem>>, vector<1x96xf32>
    %309 = vector.broadcast %308 : vector<1x96xf32> to vector<8x96xf32>
    %310 = arith.addf %307, %309 : vector<8x96xf32>
    %311 = vector.extract_strided_slice %310 {offsets = [0, 0], sizes = [8, 32], strides = [1, 1]} : vector<8x96xf32> to vector<8x32xf32>
    %312 = vector.extract_strided_slice %310 {offsets = [0, 32], sizes = [8, 32], strides = [1, 1]} : vector<8x96xf32> to vector<8x32xf32>
    %313 = vector.extract_strided_slice %310 {offsets = [0, 64], sizes = [8, 32], strides = [1, 1]} : vector<8x96xf32> to vector<8x32xf32>
    %c0_190 = arith.constant 0 : index
    %c0_191 = arith.constant 0 : index
    %314 = vector.load %arg33[%c0_190, %c0_191] : memref<64x32xf32, #tpu.memory_space<vmem>>, vector<64x32xf32>
    %c0_192 = arith.constant 0 : index
    %c0_193 = arith.constant 0 : index
    %315 = vector.load %arg31[%c0_192, %c0_193] : memref<64x8xbf16, #tpu.memory_space<vmem>>, vector<64x8xbf16>
    %316 = arith.truncf %311 : vector<8x32xf32> to vector<8x32xbf16>
    %cst_194 = arith.constant dense<0.000000e+00> : vector<64x32xf32>
    %317 = tpu.matmul %315, %316, %cst_194 {dimension_numbers = #tpu.dot_dimension_numbers<[1], [0], [0], [1], [0, 0, 1, 1], [], []>} : vector<64x8xbf16>, vector<8x32xbf16>, vector<64x32xf32> -> vector<64x32xf32>
    %318 = arith.mulf %317, %314 : vector<64x32xf32>
    %319 = arith.truncf %318 : vector<64x32xf32> to vector<64x32xbf16>
    %320 = arith.truncf %312 : vector<8x32xf32> to vector<8x32xbf16>
    %cst_195 = arith.constant dense<0.000000e+00> : vector<64x8xf32>
    %321 = tpu.matmul %319, %320, %cst_195 {dimension_numbers = #tpu.dot_dimension_numbers<[1], [1], [0], [0], [0, 0, 1, 0], [], []>} : vector<64x32xbf16>, vector<8x32xbf16>, vector<64x8xf32> -> vector<64x8xf32>
    %cst_196 = arith.constant dense<0xFF800000> : vector<64xf32>
    %322 = vector.multi_reduction <maximumf>, %321, %cst_196 [1] : vector<64x8xf32> to vector<64xf32>
    %323 = vector.shape_cast %322 : vector<64xf32> to vector<64x1xf32>
    %324 = vector.broadcast %323 : vector<64x1xf32> to vector<64x8xf32>
    %325 = arith.subf %321, %324 : vector<64x8xf32>
    %326 = math.exp %325 : vector<64x8xf32>
    %cst_197 = arith.constant dense<0.000000e+00> : vector<64xf32>
    %327 = vector.multi_reduction <add>, %326, %cst_197 [1] : vector<64x8xf32> to vector<64xf32>
    %328 = vector.shape_cast %327 : vector<64xf32> to vector<64x1xf32>
    %329 = tpu.reciprocal %328 {approx = true} : vector<64x1xf32> -> vector<64x1xf32>
    %330 = vector.broadcast %329 : vector<64x1xf32> to vector<64x8xf32>
    %331 = arith.mulf %326, %330 : vector<64x8xf32>
    %332 = arith.truncf %331 : vector<64x8xf32> to vector<64x8xbf16>
    %333 = arith.truncf %313 : vector<8x32xf32> to vector<8x32xbf16>
    %cst_198 = arith.constant dense<0.000000e+00> : vector<64x32xf32>
    %334 = tpu.matmul %332, %333, %cst_198 {dimension_numbers = #tpu.dot_dimension_numbers<[1], [0], [0], [1], [0, 0, 1, 1], [], []>} : vector<64x8xbf16>, vector<8x32xbf16>, vector<64x32xf32> -> vector<64x32xf32>
    %335 = arith.mulf %334, %314 : vector<64x32xf32>
    %c0_199 = arith.constant 0 : index
    %c0_200 = arith.constant 0 : index
    %336 = vector.load %arg32[%c0_199, %c0_200] : memref<8x64xbf16, #tpu.memory_space<vmem>>, vector<8x64xbf16>
    %337 = arith.truncf %335 : vector<64x32xf32> to vector<64x32xbf16>
    %cst_201 = arith.constant dense<0.000000e+00> : vector<8x32xf32>
    %338 = tpu.matmul %336, %337, %cst_201 {dimension_numbers = #tpu.dot_dimension_numbers<[1], [0], [0], [1], [0, 0, 1, 1], [], []>} : vector<8x64xbf16>, vector<64x32xbf16>, vector<8x32xf32> -> vector<8x32xf32>
    %339 = arith.truncf %338 : vector<8x32xf32> to vector<8x32xbf16>
    %c0_202 = arith.constant 0 : index
    %c0_203 = arith.constant 0 : index
    %340 = vector.load %arg36[%c0_202, %c0_203] : memref<32x32xbf16, #tpu.memory_space<vmem>>, vector<32x32xbf16>
    %cst_204 = arith.constant dense<0.000000e+00> : vector<8x32xf32>
    %341 = tpu.matmul %339, %340, %cst_204 {dimension_numbers = #tpu.dot_dimension_numbers<[1], [0], [0], [1], [0, 0, 1, 1], [], []>} : vector<8x32xbf16>, vector<32x32xbf16>, vector<8x32xf32> -> vector<8x32xf32>
    %c0_205 = arith.constant 0 : index
    %c0_206 = arith.constant 0 : index
    %342 = vector.load %arg37[%c0_205, %c0_206] : memref<1x32xf32, #tpu.memory_space<vmem>>, vector<1x32xf32>
    %343 = vector.broadcast %342 : vector<1x32xf32> to vector<8x32xf32>
    %344 = arith.addf %341, %343 : vector<8x32xf32>
    %345 = arith.addf %304, %344 : vector<8x32xf32>
    %c0_207 = arith.constant 0 : index
    %c0_208 = arith.constant 0 : index
    %346 = vector.load %arg38[%c0_207, %c0_208] : memref<1x32xf32, #tpu.memory_space<vmem>>, vector<1x32xf32>
    %c0_209 = arith.constant 0 : index
    %c0_210 = arith.constant 0 : index
    %347 = vector.load %arg39[%c0_209, %c0_210] : memref<1x32xf32, #tpu.memory_space<vmem>>, vector<1x32xf32>
    %cst_211 = arith.constant dense<0.000000e+00> : vector<8xf32>
    %348 = vector.multi_reduction <add>, %345, %cst_211 [1] : vector<8x32xf32> to vector<8xf32>
    %349 = vector.shape_cast %348 : vector<8xf32> to vector<8x1xf32>
    %cst_212 = arith.constant 3.200000e+01 : f32
    %350 = vector.broadcast %cst_212 : f32 to vector<8x1xf32>
    %351 = arith.divf %349, %350 : vector<8x1xf32>
    %352 = vector.broadcast %351 : vector<8x1xf32> to vector<8x32xf32>
    %353 = arith.subf %345, %352 : vector<8x32xf32>
    %354 = arith.mulf %353, %353 : vector<8x32xf32>
    %cst_213 = arith.constant dense<0.000000e+00> : vector<8xf32>
    %355 = vector.multi_reduction <add>, %354, %cst_213 [1] : vector<8x32xf32> to vector<8xf32>
    %356 = vector.shape_cast %355 : vector<8xf32> to vector<8x1xf32>
    %cst_214 = arith.constant 3.200000e+01 : f32
    %357 = vector.broadcast %cst_214 : f32 to vector<8x1xf32>
    %358 = arith.divf %356, %357 : vector<8x1xf32>
    %cst_215 = arith.constant 9.99999974E-6 : f32
    %359 = vector.broadcast %cst_215 : f32 to vector<8x1xf32>
    %360 = arith.addf %358, %359 : vector<8x1xf32>
    %361 = math.rsqrt %360 : vector<8x1xf32>
    %362 = vector.broadcast %361 : vector<8x1xf32> to vector<8x32xf32>
    %363 = arith.mulf %353, %362 : vector<8x32xf32>
    %364 = vector.broadcast %346 : vector<1x32xf32> to vector<8x32xf32>
    %365 = arith.mulf %363, %364 : vector<8x32xf32>
    %366 = vector.broadcast %347 : vector<1x32xf32> to vector<8x32xf32>
    %367 = arith.addf %365, %366 : vector<8x32xf32>
    %368 = arith.truncf %367 : vector<8x32xf32> to vector<8x32xbf16>
    %c0_216 = arith.constant 0 : index
    %c0_217 = arith.constant 0 : index
    %369 = vector.load %arg40[%c0_216, %c0_217] : memref<32x64xbf16, #tpu.memory_space<vmem>>, vector<32x64xbf16>
    %cst_218 = arith.constant dense<0.000000e+00> : vector<8x64xf32>
    %370 = tpu.matmul %368, %369, %cst_218 {dimension_numbers = #tpu.dot_dimension_numbers<[1], [0], [0], [1], [0, 0, 1, 1], [], []>} : vector<8x32xbf16>, vector<32x64xbf16>, vector<8x64xf32> -> vector<8x64xf32>
    %c0_219 = arith.constant 0 : index
    %c0_220 = arith.constant 0 : index
    %371 = vector.load %arg41[%c0_219, %c0_220] : memref<1x64xf32, #tpu.memory_space<vmem>>, vector<1x64xf32>
    %372 = vector.broadcast %371 : vector<1x64xf32> to vector<8x64xf32>
    %373 = arith.addf %370, %372 : vector<8x64xf32>
    %cst_221 = arith.constant 0.000000e+00 : f32
    %374 = vector.broadcast %cst_221 : f32 to vector<8x64xf32>
    %375 = arith.maximumf %373, %374 : vector<8x64xf32>
    %376 = arith.truncf %375 : vector<8x64xf32> to vector<8x64xbf16>
    %c0_222 = arith.constant 0 : index
    %c0_223 = arith.constant 0 : index
    %377 = vector.load %arg42[%c0_222, %c0_223] : memref<64x32xbf16, #tpu.memory_space<vmem>>, vector<64x32xbf16>
    %cst_224 = arith.constant dense<0.000000e+00> : vector<8x32xf32>
    %378 = tpu.matmul %376, %377, %cst_224 {dimension_numbers = #tpu.dot_dimension_numbers<[1], [0], [0], [1], [0, 0, 1, 1], [], []>} : vector<8x64xbf16>, vector<64x32xbf16>, vector<8x32xf32> -> vector<8x32xf32>
    %c0_225 = arith.constant 0 : index
    %c0_226 = arith.constant 0 : index
    %379 = vector.load %arg43[%c0_225, %c0_226] : memref<1x32xf32, #tpu.memory_space<vmem>>, vector<1x32xf32>
    %380 = vector.broadcast %379 : vector<1x32xf32> to vector<8x32xf32>
    %381 = arith.addf %378, %380 : vector<8x32xf32>
    %382 = arith.addf %367, %381 : vector<8x32xf32>
    %c0_227 = arith.constant 0 : index
    %c0_228 = arith.constant 0 : index
    %383 = vector.load %arg44[%c0_227, %c0_228] : memref<1x32xf32, #tpu.memory_space<vmem>>, vector<1x32xf32>
    %c0_229 = arith.constant 0 : index
    %c0_230 = arith.constant 0 : index
    %384 = vector.load %arg45[%c0_229, %c0_230] : memref<1x32xf32, #tpu.memory_space<vmem>>, vector<1x32xf32>
    %cst_231 = arith.constant dense<0.000000e+00> : vector<8xf32>
    %385 = vector.multi_reduction <add>, %382, %cst_231 [1] : vector<8x32xf32> to vector<8xf32>
    %386 = vector.shape_cast %385 : vector<8xf32> to vector<8x1xf32>
    %cst_232 = arith.constant 3.200000e+01 : f32
    %387 = vector.broadcast %cst_232 : f32 to vector<8x1xf32>
    %388 = arith.divf %386, %387 : vector<8x1xf32>
    %389 = vector.broadcast %388 : vector<8x1xf32> to vector<8x32xf32>
    %390 = arith.subf %382, %389 : vector<8x32xf32>
    %391 = arith.mulf %390, %390 : vector<8x32xf32>
    %cst_233 = arith.constant dense<0.000000e+00> : vector<8xf32>
    %392 = vector.multi_reduction <add>, %391, %cst_233 [1] : vector<8x32xf32> to vector<8xf32>
    %393 = vector.shape_cast %392 : vector<8xf32> to vector<8x1xf32>
    %cst_234 = arith.constant 3.200000e+01 : f32
    %394 = vector.broadcast %cst_234 : f32 to vector<8x1xf32>
    %395 = arith.divf %393, %394 : vector<8x1xf32>
    %cst_235 = arith.constant 9.99999974E-6 : f32
    %396 = vector.broadcast %cst_235 : f32 to vector<8x1xf32>
    %397 = arith.addf %395, %396 : vector<8x1xf32>
    %398 = math.rsqrt %397 : vector<8x1xf32>
    %399 = vector.broadcast %398 : vector<8x1xf32> to vector<8x32xf32>
    %400 = arith.mulf %390, %399 : vector<8x32xf32>
    %401 = vector.broadcast %383 : vector<1x32xf32> to vector<8x32xf32>
    %402 = arith.mulf %400, %401 : vector<8x32xf32>
    %403 = vector.broadcast %384 : vector<1x32xf32> to vector<8x32xf32>
    %404 = arith.addf %402, %403 : vector<8x32xf32>
    %405 = arith.truncf %404 : vector<8x32xf32> to vector<8x32xbf16>
    %c0_236 = arith.constant 0 : index
    %c0_237 = arith.constant 0 : index
    %406 = vector.load %arg46[%c0_236, %c0_237] : memref<32x96xbf16, #tpu.memory_space<vmem>>, vector<32x96xbf16>
    %cst_238 = arith.constant dense<0.000000e+00> : vector<8x96xf32>
    %407 = tpu.matmul %405, %406, %cst_238 {dimension_numbers = #tpu.dot_dimension_numbers<[1], [0], [0], [1], [0, 0, 1, 1], [], []>} : vector<8x32xbf16>, vector<32x96xbf16>, vector<8x96xf32> -> vector<8x96xf32>
    %c0_239 = arith.constant 0 : index
    %c0_240 = arith.constant 0 : index
    %408 = vector.load %arg47[%c0_239, %c0_240] : memref<1x96xf32, #tpu.memory_space<vmem>>, vector<1x96xf32>
    %409 = vector.broadcast %408 : vector<1x96xf32> to vector<8x96xf32>
    %410 = arith.addf %407, %409 : vector<8x96xf32>
    %411 = vector.extract_strided_slice %410 {offsets = [0, 0], sizes = [8, 32], strides = [1, 1]} : vector<8x96xf32> to vector<8x32xf32>
    %412 = vector.extract_strided_slice %410 {offsets = [0, 32], sizes = [8, 32], strides = [1, 1]} : vector<8x96xf32> to vector<8x32xf32>
    %413 = vector.extract_strided_slice %410 {offsets = [0, 64], sizes = [8, 32], strides = [1, 1]} : vector<8x96xf32> to vector<8x32xf32>
    %c0_241 = arith.constant 0 : index
    %c0_242 = arith.constant 0 : index
    %414 = vector.load %arg33[%c0_241, %c0_242] : memref<64x32xf32, #tpu.memory_space<vmem>>, vector<64x32xf32>
    %c0_243 = arith.constant 0 : index
    %c0_244 = arith.constant 0 : index
    %415 = vector.load %arg31[%c0_243, %c0_244] : memref<64x8xbf16, #tpu.memory_space<vmem>>, vector<64x8xbf16>
    %416 = arith.truncf %411 : vector<8x32xf32> to vector<8x32xbf16>
    %cst_245 = arith.constant dense<0.000000e+00> : vector<64x32xf32>
    %417 = tpu.matmul %415, %416, %cst_245 {dimension_numbers = #tpu.dot_dimension_numbers<[1], [0], [0], [1], [0, 0, 1, 1], [], []>} : vector<64x8xbf16>, vector<8x32xbf16>, vector<64x32xf32> -> vector<64x32xf32>
    %418 = arith.mulf %417, %414 : vector<64x32xf32>
    %419 = arith.truncf %418 : vector<64x32xf32> to vector<64x32xbf16>
    %420 = arith.truncf %412 : vector<8x32xf32> to vector<8x32xbf16>
    %cst_246 = arith.constant dense<0.000000e+00> : vector<64x8xf32>
    %421 = tpu.matmul %419, %420, %cst_246 {dimension_numbers = #tpu.dot_dimension_numbers<[1], [1], [0], [0], [0, 0, 1, 0], [], []>} : vector<64x32xbf16>, vector<8x32xbf16>, vector<64x8xf32> -> vector<64x8xf32>
    %cst_247 = arith.constant dense<0xFF800000> : vector<64xf32>
    %422 = vector.multi_reduction <maximumf>, %421, %cst_247 [1] : vector<64x8xf32> to vector<64xf32>
    %423 = vector.shape_cast %422 : vector<64xf32> to vector<64x1xf32>
    %424 = vector.broadcast %423 : vector<64x1xf32> to vector<64x8xf32>
    %425 = arith.subf %421, %424 : vector<64x8xf32>
    %426 = math.exp %425 : vector<64x8xf32>
    %cst_248 = arith.constant dense<0.000000e+00> : vector<64xf32>
    %427 = vector.multi_reduction <add>, %426, %cst_248 [1] : vector<64x8xf32> to vector<64xf32>
    %428 = vector.shape_cast %427 : vector<64xf32> to vector<64x1xf32>
    %429 = tpu.reciprocal %428 {approx = true} : vector<64x1xf32> -> vector<64x1xf32>
    %430 = vector.broadcast %429 : vector<64x1xf32> to vector<64x8xf32>
    %431 = arith.mulf %426, %430 : vector<64x8xf32>
    %432 = arith.truncf %431 : vector<64x8xf32> to vector<64x8xbf16>
    %433 = arith.truncf %413 : vector<8x32xf32> to vector<8x32xbf16>
    %cst_249 = arith.constant dense<0.000000e+00> : vector<64x32xf32>
    %434 = tpu.matmul %432, %433, %cst_249 {dimension_numbers = #tpu.dot_dimension_numbers<[1], [0], [0], [1], [0, 0, 1, 1], [], []>} : vector<64x8xbf16>, vector<8x32xbf16>, vector<64x32xf32> -> vector<64x32xf32>
    %435 = arith.mulf %434, %414 : vector<64x32xf32>
    %c0_250 = arith.constant 0 : index
    %c0_251 = arith.constant 0 : index
    %436 = vector.load %arg32[%c0_250, %c0_251] : memref<8x64xbf16, #tpu.memory_space<vmem>>, vector<8x64xbf16>
    %437 = arith.truncf %435 : vector<64x32xf32> to vector<64x32xbf16>
    %cst_252 = arith.constant dense<0.000000e+00> : vector<8x32xf32>
    %438 = tpu.matmul %436, %437, %cst_252 {dimension_numbers = #tpu.dot_dimension_numbers<[1], [0], [0], [1], [0, 0, 1, 1], [], []>} : vector<8x64xbf16>, vector<64x32xbf16>, vector<8x32xf32> -> vector<8x32xf32>
    %439 = arith.truncf %438 : vector<8x32xf32> to vector<8x32xbf16>
    %c0_253 = arith.constant 0 : index
    %c0_254 = arith.constant 0 : index
    %440 = vector.load %arg48[%c0_253, %c0_254] : memref<32x32xbf16, #tpu.memory_space<vmem>>, vector<32x32xbf16>
    %cst_255 = arith.constant dense<0.000000e+00> : vector<8x32xf32>
    %441 = tpu.matmul %439, %440, %cst_255 {dimension_numbers = #tpu.dot_dimension_numbers<[1], [0], [0], [1], [0, 0, 1, 1], [], []>} : vector<8x32xbf16>, vector<32x32xbf16>, vector<8x32xf32> -> vector<8x32xf32>
    %c0_256 = arith.constant 0 : index
    %c0_257 = arith.constant 0 : index
    %442 = vector.load %arg49[%c0_256, %c0_257] : memref<1x32xf32, #tpu.memory_space<vmem>>, vector<1x32xf32>
    %443 = vector.broadcast %442 : vector<1x32xf32> to vector<8x32xf32>
    %444 = arith.addf %441, %443 : vector<8x32xf32>
    %445 = arith.addf %404, %444 : vector<8x32xf32>
    %c0_258 = arith.constant 0 : index
    %c0_259 = arith.constant 0 : index
    %446 = vector.load %arg50[%c0_258, %c0_259] : memref<1x32xf32, #tpu.memory_space<vmem>>, vector<1x32xf32>
    %c0_260 = arith.constant 0 : index
    %c0_261 = arith.constant 0 : index
    %447 = vector.load %arg51[%c0_260, %c0_261] : memref<1x32xf32, #tpu.memory_space<vmem>>, vector<1x32xf32>
    %cst_262 = arith.constant dense<0.000000e+00> : vector<8xf32>
    %448 = vector.multi_reduction <add>, %445, %cst_262 [1] : vector<8x32xf32> to vector<8xf32>
    %449 = vector.shape_cast %448 : vector<8xf32> to vector<8x1xf32>
    %cst_263 = arith.constant 3.200000e+01 : f32
    %450 = vector.broadcast %cst_263 : f32 to vector<8x1xf32>
    %451 = arith.divf %449, %450 : vector<8x1xf32>
    %452 = vector.broadcast %451 : vector<8x1xf32> to vector<8x32xf32>
    %453 = arith.subf %445, %452 : vector<8x32xf32>
    %454 = arith.mulf %453, %453 : vector<8x32xf32>
    %cst_264 = arith.constant dense<0.000000e+00> : vector<8xf32>
    %455 = vector.multi_reduction <add>, %454, %cst_264 [1] : vector<8x32xf32> to vector<8xf32>
    %456 = vector.shape_cast %455 : vector<8xf32> to vector<8x1xf32>
    %cst_265 = arith.constant 3.200000e+01 : f32
    %457 = vector.broadcast %cst_265 : f32 to vector<8x1xf32>
    %458 = arith.divf %456, %457 : vector<8x1xf32>
    %cst_266 = arith.constant 9.99999974E-6 : f32
    %459 = vector.broadcast %cst_266 : f32 to vector<8x1xf32>
    %460 = arith.addf %458, %459 : vector<8x1xf32>
    %461 = math.rsqrt %460 : vector<8x1xf32>
    %462 = vector.broadcast %461 : vector<8x1xf32> to vector<8x32xf32>
    %463 = arith.mulf %453, %462 : vector<8x32xf32>
    %464 = vector.broadcast %446 : vector<1x32xf32> to vector<8x32xf32>
    %465 = arith.mulf %463, %464 : vector<8x32xf32>
    %466 = vector.broadcast %447 : vector<1x32xf32> to vector<8x32xf32>
    %467 = arith.addf %465, %466 : vector<8x32xf32>
    %468 = arith.truncf %467 : vector<8x32xf32> to vector<8x32xbf16>
    %c0_267 = arith.constant 0 : index
    %c0_268 = arith.constant 0 : index
    %469 = vector.load %arg52[%c0_267, %c0_268] : memref<32x64xbf16, #tpu.memory_space<vmem>>, vector<32x64xbf16>
    %cst_269 = arith.constant dense<0.000000e+00> : vector<8x64xf32>
    %470 = tpu.matmul %468, %469, %cst_269 {dimension_numbers = #tpu.dot_dimension_numbers<[1], [0], [0], [1], [0, 0, 1, 1], [], []>} : vector<8x32xbf16>, vector<32x64xbf16>, vector<8x64xf32> -> vector<8x64xf32>
    %c0_270 = arith.constant 0 : index
    %c0_271 = arith.constant 0 : index
    %471 = vector.load %arg53[%c0_270, %c0_271] : memref<1x64xf32, #tpu.memory_space<vmem>>, vector<1x64xf32>
    %472 = vector.broadcast %471 : vector<1x64xf32> to vector<8x64xf32>
    %473 = arith.addf %470, %472 : vector<8x64xf32>
    %cst_272 = arith.constant 0.000000e+00 : f32
    %474 = vector.broadcast %cst_272 : f32 to vector<8x64xf32>
    %475 = arith.maximumf %473, %474 : vector<8x64xf32>
    %476 = arith.truncf %475 : vector<8x64xf32> to vector<8x64xbf16>
    %c0_273 = arith.constant 0 : index
    %c0_274 = arith.constant 0 : index
    %477 = vector.load %arg54[%c0_273, %c0_274] : memref<64x32xbf16, #tpu.memory_space<vmem>>, vector<64x32xbf16>
    %cst_275 = arith.constant dense<0.000000e+00> : vector<8x32xf32>
    %478 = tpu.matmul %476, %477, %cst_275 {dimension_numbers = #tpu.dot_dimension_numbers<[1], [0], [0], [1], [0, 0, 1, 1], [], []>} : vector<8x64xbf16>, vector<64x32xbf16>, vector<8x32xf32> -> vector<8x32xf32>
    %c0_276 = arith.constant 0 : index
    %c0_277 = arith.constant 0 : index
    %479 = vector.load %arg55[%c0_276, %c0_277] : memref<1x32xf32, #tpu.memory_space<vmem>>, vector<1x32xf32>
    %480 = vector.broadcast %479 : vector<1x32xf32> to vector<8x32xf32>
    %481 = arith.addf %478, %480 : vector<8x32xf32>
    %482 = arith.addf %467, %481 : vector<8x32xf32>
    %c0_278 = arith.constant 0 : index
    %c0_279 = arith.constant 0 : index
    %483 = vector.load %arg56[%c0_278, %c0_279] : memref<1x32xf32, #tpu.memory_space<vmem>>, vector<1x32xf32>
    %c0_280 = arith.constant 0 : index
    %c0_281 = arith.constant 0 : index
    %484 = vector.load %arg57[%c0_280, %c0_281] : memref<1x32xf32, #tpu.memory_space<vmem>>, vector<1x32xf32>
    %cst_282 = arith.constant dense<0.000000e+00> : vector<8xf32>
    %485 = vector.multi_reduction <add>, %482, %cst_282 [1] : vector<8x32xf32> to vector<8xf32>
    %486 = vector.shape_cast %485 : vector<8xf32> to vector<8x1xf32>
    %cst_283 = arith.constant 3.200000e+01 : f32
    %487 = vector.broadcast %cst_283 : f32 to vector<8x1xf32>
    %488 = arith.divf %486, %487 : vector<8x1xf32>
    %489 = vector.broadcast %488 : vector<8x1xf32> to vector<8x32xf32>
    %490 = arith.subf %482, %489 : vector<8x32xf32>
    %491 = arith.mulf %490, %490 : vector<8x32xf32>
    %cst_284 = arith.constant dense<0.000000e+00> : vector<8xf32>
    %492 = vector.multi_reduction <add>, %491, %cst_284 [1] : vector<8x32xf32> to vector<8xf32>
    %493 = vector.shape_cast %492 : vector<8xf32> to vector<8x1xf32>
    %cst_285 = arith.constant 3.200000e+01 : f32
    %494 = vector.broadcast %cst_285 : f32 to vector<8x1xf32>
    %495 = arith.divf %493, %494 : vector<8x1xf32>
    %cst_286 = arith.constant 9.99999974E-6 : f32
    %496 = vector.broadcast %cst_286 : f32 to vector<8x1xf32>
    %497 = arith.addf %495, %496 : vector<8x1xf32>
    %498 = math.rsqrt %497 : vector<8x1xf32>
    %499 = vector.broadcast %498 : vector<8x1xf32> to vector<8x32xf32>
    %500 = arith.mulf %490, %499 : vector<8x32xf32>
    %501 = vector.broadcast %483 : vector<1x32xf32> to vector<8x32xf32>
    %502 = arith.mulf %500, %501 : vector<8x32xf32>
    %503 = vector.broadcast %484 : vector<1x32xf32> to vector<8x32xf32>
    %504 = arith.addf %502, %503 : vector<8x32xf32>
    %505 = arith.truncf %504 : vector<8x32xf32> to vector<8x32xbf16>
    %c0_287 = arith.constant 0 : index
    %c0_288 = arith.constant 0 : index
    %506 = vector.load %arg58[%c0_287, %c0_288] : memref<32x80xbf16, #tpu.memory_space<vmem>>, vector<32x80xbf16>
    %cst_289 = arith.constant dense<0.000000e+00> : vector<8x80xf32>
    %507 = tpu.matmul %505, %506, %cst_289 {dimension_numbers = #tpu.dot_dimension_numbers<[1], [0], [0], [1], [0, 0, 1, 1], [], []>} : vector<8x32xbf16>, vector<32x80xbf16>, vector<8x80xf32> -> vector<8x80xf32>
    %c0_290 = arith.constant 0 : index
    %c0_291 = arith.constant 0 : index
    %508 = vector.load %arg59[%c0_290, %c0_291] : memref<1x80xf32, #tpu.memory_space<vmem>>, vector<1x80xf32>
    %509 = vector.broadcast %508 : vector<1x80xf32> to vector<8x80xf32>
    %510 = arith.addf %507, %509 : vector<8x80xf32>
    %c0_292 = arith.constant 0 : index
    %c0_293 = arith.constant 0 : index
    %c0_294 = arith.constant 0 : index
    %511 = vector.load %arg60[%c0_292, %c0_293, %c0_294] : memref<1x8x80xf32, #tpu.memory_space<vmem>>, vector<1x8x80xf32>
    %512 = vector.shape_cast %511 : vector<1x8x80xf32> to vector<8x80xf32>
    %513 = vector.shape_cast %510 : vector<8x80xf32> to vector<1x8x80xf32>
    tpu.vector_store %arg60[%c0_292, %c0_293, %c0_294], %513 {strides = array<i32>} : memref<1x8x80xf32, #tpu.memory_space<vmem>>, vector<1x8x80xf32>,
    return
  }
  func.func @transform_0(%arg0: i32) -> (i32, i32, i32) {
    %c0_i32 = arith.constant 0 : i32
    %c0_i32_0 = arith.constant 0 : i32
    %c0_i32_1 = arith.constant 0 : i32
    return %arg0, %c0_i32, %c0_i32_0 : i32, i32, i32
  }
  func.func @transform_1(%arg0: i32) -> (i32, i32, i32) {
    %c0_i32 = arith.constant 0 : i32
    %c0_i32_0 = arith.constant 0 : i32
    %c0_i32_1 = arith.constant 0 : i32
    %c0_i32_2 = arith.constant 0 : i32
    return %c0_i32, %c0_i32_0, %c0_i32_1 : i32, i32, i32
  }
  func.func @transform_2(%arg0: i32) -> (i32, i32) {
    %c0_i32 = arith.constant 0 : i32
    %c0_i32_0 = arith.constant 0 : i32
    %c0_i32_1 = arith.constant 0 : i32
    return %c0_i32, %c0_i32_0 : i32, i32
  }
  func.func @transform_3(%arg0: i32) -> (i32, i32) {
    %c0_i32 = arith.constant 0 : i32
    %c0_i32_0 = arith.constant 0 : i32
    %c0_i32_1 = arith.constant 0 : i32
    return %c0_i32, %c0_i32_0 : i32, i32
  }
  func.func @transform_4(%arg0: i32) -> (i32, i32, i32) {
    %c0_i32 = arith.constant 0 : i32
    %c0_i32_0 = arith.constant 0 : i32
    %c0_i32_1 = arith.constant 0 : i32
    %c0_i32_2 = arith.constant 0 : i32
    return %c0_i32, %c0_i32_0, %c0_i32_1 : i32, i32, i32
  }
  func.func @transform_5(%arg0: i32) -> (i32, i32) {
    %c0_i32 = arith.constant 0 : i32
    %c0_i32_0 = arith.constant 0 : i32
    %c0_i32_1 = arith.constant 0 : i32
    return %c0_i32, %c0_i32_0 : i32, i32
  }
  func.func @transform_6(%arg0: i32) -> (i32, i32) {
    %c0_i32 = arith.constant 0 : i32
    %c0_i32_0 = arith.constant 0 : i32
    %c0_i32_1 = arith.constant 0 : i32
    return %c0_i32, %c0_i32_0 : i32, i32
  }
  func.func @transform_7(%arg0: i32) -> (i32, i32) {
    %c0_i32 = arith.constant 0 : i32
    %c0_i32_0 = arith.constant 0 : i32
    %c0_i32_1 = arith.constant 0 : i32
    return %c0_i32, %c0_i32_0 : i32, i32
  }
  func.func @transform_8(%arg0: i32) -> (i32, i32) {
    %c0_i32 = arith.constant 0 : i32
    %c0_i32_0 = arith.constant 0 : i32
    %c0_i32_1 = arith.constant 0 : i32
    return %c0_i32, %c0_i32_0 : i32, i32
  }
  func.func @transform_9(%arg0: i32) -> (i32, i32) {
    %c0_i32 = arith.constant 0 : i32
    %c0_i32_0 = arith.constant 0 : i32
    %c0_i32_1 = arith.constant 0 : i32
    return %c0_i32, %c0_i32_0 : i32, i32
  }
  func.func @transform_10(%arg0: i32) -> (i32, i32, i32) {
    %c0_i32 = arith.constant 0 : i32
    %c0_i32_0 = arith.constant 0 : i32
    %c0_i32_1 = arith.constant 0 : i32
    %c0_i32_2 = arith.constant 0 : i32
    return %c0_i32, %c0_i32_0, %c0_i32_1 : i32, i32, i32
  }
  func.func @transform_11(%arg0: i32) -> (i32, i32) {
    %c0_i32 = arith.constant 0 : i32
    %c0_i32_0 = arith.constant 0 : i32
    %c0_i32_1 = arith.constant 0 : i32
    return %c0_i32, %c0_i32_0 : i32, i32
  }
  func.func @transform_12(%arg0: i32) -> (i32, i32) {
    %c0_i32 = arith.constant 0 : i32
    %c0_i32_0 = arith.constant 0 : i32
    %c0_i32_1 = arith.constant 0 : i32
    return %c0_i32, %c0_i32_0 : i32, i32
  }
  func.func @transform_13(%arg0: i32) -> (i32, i32, i32) {
    %c0_i32 = arith.constant 0 : i32
    %c0_i32_0 = arith.constant 0 : i32
    %c0_i32_1 = arith.constant 0 : i32
    %c0_i32_2 = arith.constant 0 : i32
    return %c0_i32, %c0_i32_0, %c0_i32_1 : i32, i32, i32
  }
  func.func @transform_14(%arg0: i32) -> (i32, i32) {
    %c0_i32 = arith.constant 0 : i32
    %c0_i32_0 = arith.constant 0 : i32
    %c0_i32_1 = arith.constant 0 : i32
    return %c0_i32, %c0_i32_0 : i32, i32
  }
  func.func @transform_15(%arg0: i32) -> (i32, i32) {
    %c0_i32 = arith.constant 0 : i32
    %c0_i32_0 = arith.constant 0 : i32
    %c0_i32_1 = arith.constant 0 : i32
    return %c0_i32, %c0_i32_0 : i32, i32
  }
  func.func @transform_16(%arg0: i32) -> (i32, i32) {
    %c0_i32 = arith.constant 0 : i32
    %c0_i32_0 = arith.constant 0 : i32
    %c0_i32_1 = arith.constant 0 : i32
    return %c0_i32, %c0_i32_0 : i32, i32
  }
  func.func @transform_17(%arg0: i32) -> (i32, i32) {
    %c0_i32 = arith.constant 0 : i32
    %c0_i32_0 = arith.constant 0 : i32
    %c0_i32_1 = arith.constant 0 : i32
    return %c0_i32, %c0_i32_0 : i32, i32
  }
  func.func @transform_18(%arg0: i32) -> (i32, i32) {
    %c0_i32 = arith.constant 0 : i32
    %c0_i32_0 = arith.constant 0 : i32
    %c0_i32_1 = arith.constant 0 : i32
    return %c0_i32, %c0_i32_0 : i32, i32
  }
  func.func @transform_19(%arg0: i32) -> (i32, i32, i32) {
    %c0_i32 = arith.constant 0 : i32
    %c0_i32_0 = arith.constant 0 : i32
    %c0_i32_1 = arith.constant 0 : i32
    %c0_i32_2 = arith.constant 0 : i32
    return %c0_i32, %c0_i32_0, %c0_i32_1 : i32, i32, i32
  }
  func.func @transform_20(%arg0: i32) -> (i32, i32) {
    %c0_i32 = arith.constant 0 : i32
    %c0_i32_0 = arith.constant 0 : i32
    %c0_i32_1 = arith.constant 0 : i32
    return %c0_i32, %c0_i32_0 : i32, i32
  }
  func.func @transform_21(%arg0: i32) -> (i32, i32) {
    %c0_i32 = arith.constant 0 : i32
    %c0_i32_0 = arith.constant 0 : i32
    %c0_i32_1 = arith.constant 0 : i32
    return %c0_i32, %c0_i32_0 : i32, i32
  }
  func.func @transform_22(%arg0: i32) -> (i32, i32, i32) {
    %c0_i32 = arith.constant 0 : i32
    %c0_i32_0 = arith.constant 0 : i32
    %c0_i32_1 = arith.constant 0 : i32
    %c0_i32_2 = arith.constant 0 : i32
    return %c0_i32, %c0_i32_0, %c0_i32_1 : i32, i32, i32
  }
  func.func @transform_23(%arg0: i32) -> (i32, i32) {
    %c0_i32 = arith.constant 0 : i32
    %c0_i32_0 = arith.constant 0 : i32
    %c0_i32_1 = arith.constant 0 : i32
    return %c0_i32, %c0_i32_0 : i32, i32
  }
  func.func @transform_24(%arg0: i32) -> (i32, i32) {
    %c0_i32 = arith.constant 0 : i32
    %c0_i32_0 = arith.constant 0 : i32
    %c0_i32_1 = arith.constant 0 : i32
    return %c0_i32, %c0_i32_0 : i32, i32
  }
  func.func @transform_25(%arg0: i32) -> (i32, i32) {
    %c0_i32 = arith.constant 0 : i32
    %c0_i32_0 = arith.constant 0 : i32
    %c0_i32_1 = arith.constant 0 : i32
    return %c0_i32, %c0_i32_0 : i32, i32
  }
  func.func @transform_26(%arg0: i32) -> (i32, i32) {
    %c0_i32 = arith.constant 0 : i32
    %c0_i32_0 = arith.constant 0 : i32
    %c0_i32_1 = arith.constant 0 : i32
    return %c0_i32, %c0_i32_0 : i32, i32
  }
  func.func @transform_27(%arg0: i32) -> (i32, i32) {
    %c0_i32 = arith.constant 0 : i32
    %c0_i32_0 = arith.constant 0 : i32
    %c0_i32_1 = arith.constant 0 : i32
    return %c0_i32, %c0_i32_0 : i32, i32
  }
  func.func @transform_28(%arg0: i32) -> (i32, i32) {
    %c0_i32 = arith.constant 0 : i32
    %c0_i32_0 = arith.constant 0 : i32
    %c0_i32_1 = arith.constant 0 : i32
    return %c0_i32, %c0_i32_0 : i32, i32
  }
  func.func @transform_29(%arg0: i32) -> (i32, i32) {
    %c0_i32 = arith.constant 0 : i32
    %c0_i32_0 = arith.constant 0 : i32
    %c0_i32_1 = arith.constant 0 : i32
    return %c0_i32, %c0_i32_0 : i32, i32
  }
  func.func @transform_30(%arg0: i32) -> (i32, i32) {
    %c0_i32 = arith.constant 0 : i32
    %c0_i32_0 = arith.constant 0 : i32
    %c0_i32_1 = arith.constant 0 : i32
    return %c0_i32, %c0_i32_0 : i32, i32
  }
  func.func @transform_31(%arg0: i32) -> (i32, i32) {
    %c0_i32 = arith.constant 0 : i32
    %c0_i32_0 = arith.constant 0 : i32
    %c0_i32_1 = arith.constant 0 : i32
    return %c0_i32, %c0_i32_0 : i32, i32
  }
  func.func @transform_32(%arg0: i32) -> (i32, i32) {
    %c0_i32 = arith.constant 0 : i32
    %c0_i32_0 = arith.constant 0 : i32
    %c0_i32_1 = arith.constant 0 : i32
    return %c0_i32, %c0_i32_0 : i32, i32
  }
  func.func @transform_33(%arg0: i32) -> (i32, i32) {
    %c0_i32 = arith.constant 0 : i32
    %c0_i32_0 = arith.constant 0 : i32
    %c0_i32_1 = arith.constant 0 : i32
    return %c0_i32, %c0_i32_0 : i32, i32
  }
  func.func @transform_34(%arg0: i32) -> (i32, i32) {
    %c0_i32 = arith.constant 0 : i32
    %c0_i32_0 = arith.constant 0 : i32
    %c0_i32_1 = arith.constant 0 : i32
    return %c0_i32, %c0_i32_0 : i32, i32
  }
  func.func @transform_35(%arg0: i32) -> (i32, i32) {
    %c0_i32 = arith.constant 0 : i32
    %c0_i32_0 = arith.constant 0 : i32
    %c0_i32_1 = arith.constant 0 : i32
    return %c0_i32, %c0_i32_0 : i32, i32
  }
  func.func @transform_36(%arg0: i32) -> (i32, i32) {
    %c0_i32 = arith.constant 0 : i32
    %c0_i32_0 = arith.constant 0 : i32
    %c0_i32_1 = arith.constant 0 : i32
    return %c0_i32, %c0_i32_0 : i32, i32
  }
  func.func @transform_37(%arg0: i32) -> (i32, i32) {
    %c0_i32 = arith.constant 0 : i32
    %c0_i32_0 = arith.constant 0 : i32
    %c0_i32_1 = arith.constant 0 : i32
    return %c0_i32, %c0_i32_0 : i32, i32
  }
  func.func @transform_38(%arg0: i32) -> (i32, i32) {
    %c0_i32 = arith.constant 0 : i32
    %c0_i32_0 = arith.constant 0 : i32
    %c0_i32_1 = arith.constant 0 : i32
    return %c0_i32, %c0_i32_0 : i32, i32
  }
  func.func @transform_39(%arg0: i32) -> (i32, i32) {
    %c0_i32 = arith.constant 0 : i32
    %c0_i32_0 = arith.constant 0 : i32
    %c0_i32_1 = arith.constant 0 : i32
    return %c0_i32, %c0_i32_0 : i32, i32
  }
  func.func @transform_40(%arg0: i32) -> (i32, i32) {
    %c0_i32 = arith.constant 0 : i32
    %c0_i32_0 = arith.constant 0 : i32
    %c0_i32_1 = arith.constant 0 : i32
    return %c0_i32, %c0_i32_0 : i32, i32
  }
  func.func @transform_41(%arg0: i32) -> (i32, i32) {
    %c0_i32 = arith.constant 0 : i32
    %c0_i32_0 = arith.constant 0 : i32
    %c0_i32_1 = arith.constant 0 : i32
    return %c0_i32, %c0_i32_0 : i32, i32
  }
  func.func @transform_42(%arg0: i32) -> (i32, i32) {
    %c0_i32 = arith.constant 0 : i32
    %c0_i32_0 = arith.constant 0 : i32
    %c0_i32_1 = arith.constant 0 : i32
    return %c0_i32, %c0_i32_0 : i32, i32
  }
  func.func @transform_43(%arg0: i32) -> (i32, i32) {
    %c0_i32 = arith.constant 0 : i32
    %c0_i32_0 = arith.constant 0 : i32
    %c0_i32_1 = arith.constant 0 : i32
    return %c0_i32, %c0_i32_0 : i32, i32
  }
  func.func @transform_44(%arg0: i32) -> (i32, i32) {
    %c0_i32 = arith.constant 0 : i32
    %c0_i32_0 = arith.constant 0 : i32
    %c0_i32_1 = arith.constant 0 : i32
    return %c0_i32, %c0_i32_0 : i32, i32
  }
  func.func @transform_45(%arg0: i32) -> (i32, i32) {
    %c0_i32 = arith.constant 0 : i32
    %c0_i32_0 = arith.constant 0 : i32
    %c0_i32_1 = arith.constant 0 : i32
    return %c0_i32, %c0_i32_0 : i32, i32
  }
  func.func @transform_46(%arg0: i32) -> (i32, i32) {
    %c0_i32 = arith.constant 0 : i32
    %c0_i32_0 = arith.constant 0 : i32
    %c0_i32_1 = arith.constant 0 : i32
    return %c0_i32, %c0_i32_0 : i32, i32
  }
  func.func @transform_47(%arg0: i32) -> (i32, i32) {
    %c0_i32 = arith.constant 0 : i32
    %c0_i32_0 = arith.constant 0 : i32
    %c0_i32_1 = arith.constant 0 : i32
    return %c0_i32, %c0_i32_0 : i32, i32
  }
  func.func @transform_48(%arg0: i32) -> (i32, i32) {
    %c0_i32 = arith.constant 0 : i32
    %c0_i32_0 = arith.constant 0 : i32
    %c0_i32_1 = arith.constant 0 : i32
    return %c0_i32, %c0_i32_0 : i32, i32
  }
  func.func @transform_49(%arg0: i32) -> (i32, i32) {
    %c0_i32 = arith.constant 0 : i32
    %c0_i32_0 = arith.constant 0 : i32
    %c0_i32_1 = arith.constant 0 : i32
    return %c0_i32, %c0_i32_0 : i32, i32
  }
  func.func @transform_50(%arg0: i32) -> (i32, i32) {
    %c0_i32 = arith.constant 0 : i32
    %c0_i32_0 = arith.constant 0 : i32
    %c0_i32_1 = arith.constant 0 : i32
    return %c0_i32, %c0_i32_0 : i32, i32
  }
  func.func @transform_51(%arg0: i32) -> (i32, i32) {
    %c0_i32 = arith.constant 0 : i32
    %c0_i32_0 = arith.constant 0 : i32
    %c0_i32_1 = arith.constant 0 : i32
    return %c0_i32, %c0_i32_0 : i32, i32
  }
  func.func @transform_52(%arg0: i32) -> (i32, i32) {
    %c0_i32 = arith.constant 0 : i32
    %c0_i32_0 = arith.constant 0 : i32
    %c0_i32_1 = arith.constant 0 : i32
    return %c0_i32, %c0_i32_0 : i32, i32
  }
  func.func @transform_53(%arg0: i32) -> (i32, i32) {
    %c0_i32 = arith.constant 0 : i32
    %c0_i32_0 = arith.constant 0 : i32
    %c0_i32_1 = arith.constant 0 : i32
    return %c0_i32, %c0_i32_0 : i32, i32
  }
  func.func @transform_54(%arg0: i32) -> (i32, i32) {
    %c0_i32 = arith.constant 0 : i32
    %c0_i32_0 = arith.constant 0 : i32
    %c0_i32_1 = arith.constant 0 : i32
    return %c0_i32, %c0_i32_0 : i32, i32
  }
  func.func @transform_55(%arg0: i32) -> (i32, i32) {
    %c0_i32 = arith.constant 0 : i32
    %c0_i32_0 = arith.constant 0 : i32
    %c0_i32_1 = arith.constant 0 : i32
    return %c0_i32, %c0_i32_0 : i32, i32
  }
  func.func @transform_56(%arg0: i32) -> (i32, i32) {
    %c0_i32 = arith.constant 0 : i32
    %c0_i32_0 = arith.constant 0 : i32
    %c0_i32_1 = arith.constant 0 : i32
    return %c0_i32, %c0_i32_0 : i32, i32
  }
  func.func @transform_57(%arg0: i32) -> (i32, i32) {
    %c0_i32 = arith.constant 0 : i32
    %c0_i32_0 = arith.constant 0 : i32
    %c0_i32_1 = arith.constant 0 : i32
    return %c0_i32, %c0_i32_0 : i32, i32
  }
  func.func @transform_58(%arg0: i32) -> (i32, i32) {
    %c0_i32 = arith.constant 0 : i32
    %c0_i32_0 = arith.constant 0 : i32
    %c0_i32_1 = arith.constant 0 : i32
    return %c0_i32, %c0_i32_0 : i32, i32
  }
  func.func @transform_59(%arg0: i32) -> (i32, i32, i32) {
    %c0_i32 = arith.constant 0 : i32
    %c0_i32_0 = arith.constant 0 : i32
    %c0_i32_1 = arith.constant 0 : i32
    return %arg0, %c0_i32, %c0_i32_0 : i32, i32, i32
  }
}

</mosaic_0001>

<llo_original>
// kernel: eq.13
$region0: #{eq.13}
  %s0 = inlined_call_operand.vmem [shape: s32[8,4], index: 0, kind: input, shape index: {}]
  %s1 = inlined_call_operand.vmem [shape: s32[32], index: 1, kind: output, shape index: {}]
  $region1: #{eq.13} parent=0
    #allocation0 [shape = 'u8[4096]{0}', space=vmem, size = 0x1000, scoped, tag = 'scoped mem for output reshape']
    %v2 = vld [vmem:[%s0] sm:$0x1]
    %vm3 = vcmask 31744
    %4 = vst.msk [vmem:[#allocation0] sm:$0x1] %vm3, %v2
    %s5 = scalar_lea.vmem %s0, 7
    %v6 = vld [vmem:[%s5] sm:$0x1]
    %7 = vrot.lane.b32.xlu0 %v6, 28
    %v8 = vpop.permute.xlu0 %7
    %vm9 = vcmask 261344
    %10 = vst.msk [vmem:[#allocation0] sm:$0x1] %vm9, %v8
    %s11 = scalar_lea.vmem %s0, 6
    %v12 = vld [vmem:[%s11] sm:$0x1]
    %13 = vrot.lane.b32.xlu0 %v12, 24
    %v14 = vpop.permute.xlu0 %13
    %vm15 = vcmask 228544
    %16 = vst.msk [vmem:[#allocation0] sm:$0x1] %vm15, %v14
    %s17 = scalar_lea.vmem %s0, 5
    %v18 = vld [vmem:[%s17] sm:$0x1]
    %19 = vrot.lane.b32.xlu0 %v18, 20
    %v20 = vpop.permute.xlu0 %19
    %vm21 = vcmask 195744
    %22 = vst.msk [vmem:[#allocation0] sm:$0x1] %vm21, %v20
    %s23 = scalar_lea.vmem %s0, 4
    %v24 = vld [vmem:[%s23] sm:$0x1]
    %25 = vrot.lane.b32.xlu0 %v24, 16
    %v26 = vpop.permute.xlu0 %25
    %vm27 = vcmask 162944
    %28 = vst.msk [vmem:[#allocation0] sm:$0x1] %vm27, %v26
    %s29 = scalar_lea.vmem %s0, 3
    %v30 = vld [vmem:[%s29] sm:$0x1]
    %31 = vrot.lane.b32.xlu0 %v30, 12
    %v32 = vpop.permute.xlu0 %31
    %vm33 = vcmask 130144
    %34 = vst.msk [vmem:[#allocation0] sm:$0x1] %vm33, %v32
    %s35 = scalar_lea.vmem %s0, 2
    %v36 = vld [vmem:[%s35] sm:$0x1]
    %37 = vrot.lane.b32.xlu0 %v36, 8
    %v38 = vpop.permute.xlu0 %37
    %vm39 = vcmask 97344
    %40 = vst.msk [vmem:[#allocation0] sm:$0x1] %vm39, %v38
    %s41 = scalar_lea.vmem %s0, 1
    %v42 = vld [vmem:[%s41] sm:$0x1]
    %43 = vrot.lane.b32.xlu0 %v42, 4
    %v44 = vpop.permute.xlu0 %43
    %vm45 = vcmask 64544
    %46 = vst.msk [vmem:[#allocation0] sm:$0x1] %vm45, %v44
    %s48 = ssub.s32 2, 1
    %v49 = vld [vmem:[#allocation0] sm:%s48]
    %s51 = ssub.s32 2, 1
    %52 = vst [vmem:[%s1] sm:%s51] %v49

// kernel: eq.10
$region0: #{eq.10}
  %s0 = inlined_call_operand.vmem [shape: s32[8,8], index: 0, kind: input, shape index: {}]
  %s1 = inlined_call_operand.vmem [shape: s32[64], index: 1, kind: output, shape index: {}]
  $region1: #{eq.10} parent=0
    #allocation0 [shape = 'u8[4096]{0}', space=vmem, size = 0x1000, scoped, tag = 'scoped mem for output reshape']
    %v2 = vld [vmem:[%s0] sm:$0x1]
    %vm3 = vcmask 64512
    %4 = vst.msk [vmem:[#allocation0] sm:$0x1] %vm3, %v2
    %s5 = scalar_lea.vmem %s0, 7
    %v6 = vld [vmem:[%s5] sm:$0x1]
    %7 = vrot.lane.b32.xlu0 %v6, 56
    %v8 = vpop.permute.xlu0 %7
    %vm9 = vcmask 523712
    %10 = vst.msk [vmem:[#allocation0] sm:$0x1] %vm9, %v8
    %s11 = scalar_lea.vmem %s0, 6
    %v12 = vld [vmem:[%s11] sm:$0x1]
    %13 = vrot.lane.b32.xlu0 %v12, 48
    %v14 = vpop.permute.xlu0 %13
    %vm15 = vcmask 458112
    %16 = vst.msk [vmem:[#allocation0] sm:$0x1] %vm15, %v14
    %s17 = scalar_lea.vmem %s0, 5
    %v18 = vld [vmem:[%s17] sm:$0x1]
    %19 = vrot.lane.b32.xlu0 %v18, 40
    %v20 = vpop.permute.xlu0 %19
    %vm21 = vcmask 392512
    %22 = vst.msk [vmem:[#allocation0] sm:$0x1] %vm21, %v20
    %s23 = scalar_lea.vmem %s0, 4
    %v24 = vld [vmem:[%s23] sm:$0x1]
    %25 = vrot.lane.b32.xlu0 %v24, 32
    %v26 = vpop.permute.xlu0 %25
    %vm27 = vcmask 326912
    %28 = vst.msk [vmem:[#allocation0] sm:$0x1] %vm27, %v26
    %s29 = scalar_lea.vmem %s0, 3
    %v30 = vld [vmem:[%s29] sm:$0x1]
    %31 = vrot.lane.b32.xlu0 %v30, 24
    %v32 = vpop.permute.xlu0 %31
    %vm33 = vcmask 261312
    %34 = vst.msk [vmem:[#allocation0] sm:$0x1] %vm33, %v32
    %s35 = scalar_lea.vmem %s0, 2
    %v36 = vld [vmem:[%s35] sm:$0x1]
    %37 = vrot.lane.b32.xlu0 %v36, 16
    %v38 = vpop.permute.xlu0 %37
    %vm39 = vcmask 195712
    %40 = vst.msk [vmem:[#allocation0] sm:$0x1] %vm39, %v38
    %s41 = scalar_lea.vmem %s0, 1
    %v42 = vld [vmem:[%s41] sm:$0x1]
    %43 = vrot.lane.b32.xlu0 %v42, 8
    %v44 = vpop.permute.xlu0 %43
    %vm45 = vcmask 130112
    %46 = vst.msk [vmem:[#allocation0] sm:$0x1] %vm45, %v44
    %s48 = ssub.s32 2, 1
    %v49 = vld [vmem:[#allocation0] sm:%s48]
    %s51 = ssub.s32 2, 1
    %52 = vst [vmem:[%s1] sm:%s51] %v49

// kernel: proposed_model_forward.1
$region0: #{proposed_model_forward.1}
  #allocation0 [shape = 'u32[]', space=smem, size = 0x4, offset = 0x4, fixed_abs, tag = 'smem constant byte address 0x4 - core index']
  #allocation1 [shape = 'u32[72,128]{1,0:T(1,128)}', space=vmem, size = 0x9000, scoped, tag = 'internal scratch']
  %s0 = inlined_call_operand.smem [shape: u32[60], index: -1, kind: input, shape index: {}]
  %s1 = sld [smem:[%s0]]
  %s2 = scalar_lea.smem %s0, 1
  %s3 = sld [smem:[%s2]]
  %s4 = scalar_lea.smem %s0, 2
  %s5 = sld [smem:[%s4]]
  %s6 = scalar_lea.smem %s0, 3
  %s7 = sld [smem:[%s6]]
  %s8 = scalar_lea.smem %s0, 4
  %s9 = sld [smem:[%s8]]
  %s10 = scalar_lea.smem %s0, 5
  %s11 = sld [smem:[%s10]]
  %s12 = scalar_lea.smem %s0, 6
  %s13 = sld [smem:[%s12]]
  %s14 = scalar_lea.smem %s0, 7
  %s15 = sld [smem:[%s14]]
  %s16 = scalar_lea.smem %s0, 8
  %s17 = sld [smem:[%s16]]
  %s18 = scalar_lea.smem %s0, 9
  %s19 = sld [smem:[%s18]]
  %s20 = scalar_lea.smem %s0, 10
  %s21 = sld [smem:[%s20]]
  %s22 = scalar_lea.smem %s0, 11
  %s23 = sld [smem:[%s22]]
  %s24 = scalar_lea.smem %s0, 12
  %s25 = sld [smem:[%s24]]
  %s26 = scalar_lea.smem %s0, 13
  %s27 = sld [smem:[%s26]]
  %s28 = scalar_lea.smem %s0, 14
  %s29 = sld [smem:[%s28]]
  %s30 = scalar_lea.smem %s0, 15
  %s31 = sld [smem:[%s30]]
  %s32 = scalar_lea.smem %s0, 16
  %s33 = sld [smem:[%s32]]
  %s34 = scalar_lea.smem %s0, 17
  %s35 = sld [smem:[%s34]]
  %s36 = scalar_lea.smem %s0, 18
  %s37 = sld [smem:[%s36]]
  %s38 = scalar_lea.smem %s0, 19
  %s39 = sld [smem:[%s38]]
  %s40 = scalar_lea.smem %s0, 20
  %s41 = sld [smem:[%s40]]
  %s42 = scalar_lea.smem %s0, 21
  %s43 = sld [smem:[%s42]]
  %s44 = scalar_lea.smem %s0, 22
  %s45 = sld [smem:[%s44]]
  %s46 = scalar_lea.smem %s0, 23
  %s47 = sld [smem:[%s46]]
  %s48 = scalar_lea.smem %s0, 24
  %s49 = sld [smem:[%s48]]
  %s50 = scalar_lea.smem %s0, 25
  %s51 = sld [smem:[%s50]]
  %s52 = scalar_lea.smem %s0, 26
  %s53 = sld [smem:[%s52]]
  %s54 = scalar_lea.smem %s0, 27
  %s55 = sld [smem:[%s54]]
  %s56 = scalar_lea.smem %s0, 28
  %s57 = sld [smem:[%s56]]
  %s58 = scalar_lea.smem %s0, 29
  %s59 = sld [smem:[%s58]]
  %s60 = scalar_lea.smem %s0, 30
  %s61 = sld [smem:[%s60]]
  %s62 = scalar_lea.smem %s0, 31
  %s63 = sld [smem:[%s62]]
  %s64 = scalar_lea.smem %s0, 32
  %s65 = sld [smem:[%s64]]
  %s66 = scalar_lea.smem %s0, 33
  %s67 = sld [smem:[%s66]]
  %s68 = scalar_lea.smem %s0, 34
  %s69 = sld [smem:[%s68]]
  %s70 = scalar_lea.smem %s0, 35
  %s71 = sld [smem:[%s70]]
  %s72 = scalar_lea.smem %s0, 36
  %s73 = sld [smem:[%s72]]
  %s74 = scalar_lea.smem %s0, 37
  %s75 = sld [smem:[%s74]]
  %s76 = scalar_lea.smem %s0, 38
  %s77 = sld [smem:[%s76]]
  %s78 = scalar_lea.smem %s0, 39
  %s79 = sld [smem:[%s78]]
  %s80 = scalar_lea.smem %s0, 40
  %s81 = sld [smem:[%s80]]
  %s82 = scalar_lea.smem %s0, 41
  %s83 = sld [smem:[%s82]]
  %s84 = scalar_lea.smem %s0, 42
  %s85 = sld [smem:[%s84]]
  %s86 = scalar_lea.smem %s0, 43
  %s87 = sld [smem:[%s86]]
  %s88 = scalar_lea.smem %s0, 44
  %s89 = sld [smem:[%s88]]
  %s90 = scalar_lea.smem %s0, 45
  %s91 = sld [smem:[%s90]]
  %s92 = scalar_lea.smem %s0, 46
  %s93 = sld [smem:[%s92]]
  %s94 = scalar_lea.smem %s0, 47
  %s95 = sld [smem:[%s94]]
  %s96 = scalar_lea.smem %s0, 48
  %s97 = sld [smem:[%s96]]
  %s98 = scalar_lea.smem %s0, 49
  %s99 = sld [smem:[%s98]]
  %s100 = scalar_lea.smem %s0, 50
  %s101 = sld [smem:[%s100]]
  %s102 = scalar_lea.smem %s0, 51
  %s103 = sld [smem:[%s102]]
  %s104 = scalar_lea.smem %s0, 52
  %s105 = sld [smem:[%s104]]
  %s106 = scalar_lea.smem %s0, 53
  %s107 = sld [smem:[%s106]]
  %s108 = scalar_lea.smem %s0, 54
  %s109 = sld [smem:[%s108]]
  %s110 = scalar_lea.smem %s0, 55
  %s111 = sld [smem:[%s110]]
  %s112 = scalar_lea.smem %s0, 56
  %s113 = sld [smem:[%s112]]
  %s114 = scalar_lea.smem %s0, 57
  %s115 = sld [smem:[%s114]]
  %s116 = scalar_lea.smem %s0, 58
  %s117 = sld [smem:[%s116]]
  %s118 = scalar_lea.smem %s0, 59
  %s119 = sld [smem:[%s118]]
  %s120 = sld [smem:[#allocation0]]
  $region333: #{proposed_model_forward.1} parent=0
    _
  %s122 = ssub.s32 1, %s120
  %s123 = scalar_select 0, %s122, %s120
  $region1: #{proposed_model_forward.1} parent=0
    #allocation2 [shape = 'u8[512]{0}', space=vmem, size = 0x400, scoped, tag = 'input window, operand 36, single buffered']
    #allocation3 [shape = 's32[2]{0}', space=sflag, size = 0x8, scoped, tag = 'scoped memory for proposed_model_forward.1']
    #allocation4 [shape = 's32[2]{0}', space=sflag, size = 0x8, scoped, tag = 'scoped memory for proposed_model_forward.1']
    #allocation5 [shape = 'u8[512]{0}', space=vmem, size = 0x400, scoped, tag = 'input window, operand 37, single buffered']
    #allocation6 [shape = 's32[1]{0}', space=sflag, size = 0x4, scoped, tag = 'scoped memory for proposed_model_forward.1']
    #allocation7 [shape = 'u8[512]{0}', space=vmem, size = 0x400, scoped, tag = 'input window, operand 38, single buffered']
    #allocation8 [shape = 'u8[512]{0}', space=vmem, size = 0x400, scoped, tag = 'input window, operand 40, single buffered']
    #allocation9 [shape = 's32[1]{0}', space=sflag, size = 0x4, scoped, tag = 'scoped memory for proposed_model_forward.1']
    #allocation10 [shape = 'u8[512]{0}', space=vmem, size = 0x400, scoped, tag = 'input window, operand 42, single buffered']
    #allocation11 [shape = 'u8[512]{0}', space=vmem, size = 0x400, scoped, tag = 'input window, operand 43, single buffered']
    #allocation12 [shape = 's32[1]{0}', space=sflag, size = 0x4, scoped, tag = 'scoped memory for proposed_model_forward.1']
    #allocation13 [shape = 'u8[512]{0}', space=vmem, size = 0x400, scoped, tag = 'input window, operand 44, single buffered']
    #allocation14 [shape = 'u8[512]{0}', space=vmem, size = 0x400, scoped, tag = 'input window, operand 46, single buffered']
    #allocation15 [shape = 's32[1]{0}', space=sflag, size = 0x4, scoped, tag = 'scoped memory for proposed_model_forward.1']
    #allocation16 [shape = 'u8[512]{0}', space=vmem, size = 0x400, scoped, tag = 'input window, operand 48, single buffered']
    #allocation17 [shape = 'u8[512]{0}', space=vmem, size = 0x400, scoped, tag = 'input window, operand 49, single buffered']
    #allocation18 [shape = 's32[1]{0}', space=sflag, size = 0x4, scoped, tag = 'scoped memory for proposed_model_forward.1']
    #allocation19 [shape = 'u8[512]{0}', space=vmem, size = 0x400, scoped, tag = 'input window, operand 50, single buffered']
    #allocation20 [shape = 'u8[512]{0}', space=vmem, size = 0x400, scoped, tag = 'input window, operand 52, single buffered']
    #allocation21 [shape = 's32[1]{0}', space=sflag, size = 0x4, scoped, tag = 'scoped memory for proposed_model_forward.1']
    #allocation22 [shape = 'u8[512]{0}', space=vmem, size = 0x400, scoped, tag = 'input window, operand 54, single buffered']
    #allocation23 [shape = 'u8[512]{0}', space=vmem, size = 0x400, scoped, tag = 'input window, operand 55, single buffered']
    #allocation24 [shape = 's32[1]{0}', space=sflag, size = 0x4, scoped, tag = 'scoped memory for proposed_model_forward.1']
    #allocation25 [shape = 'u8[512]{0}', space=vmem, size = 0x400, scoped, tag = 'input window, operand 56, single buffered']
    #allocation26 [shape = 'u8[512]{0}', space=vmem, size = 0x400, scoped, tag = 'input window, operand 58, single buffered']
    #allocation27 [shape = 's32[1]{0}', space=sflag, size = 0x4, scoped, tag = 'scoped memory for proposed_model_forward.1']
    #allocation28 [shape = 'u8[8192]{0}', space=vmem, size = 0x2000, scoped, tag = 'output window, operand 0']
    %124 = vsyncpa [#allocation3], 0
    %125 = vsyncpa [#allocation6], 0
    %126 = vsyncpa [#allocation9], 0
    %127 = vsyncpa [#allocation12], 0
    %128 = vsyncpa [#allocation15], 0
    %129 = vsyncpa [#allocation18], 0
    %130 = vsyncpa [#allocation21], 0
    %131 = vsyncpa [#allocation24], 0
    %132 = vsyncpa [#allocation27], 0
    %133 = vsyncpa [#allocation4], 0
    %s134 = scalar_lea.sflag [#allocation4], 1
    %135 = vsyncpa %s134, 0
    loop: start=0, step=1, limit=4
    $region2: #{proposed_model_forward.1} parent=1 // loop_pre_header
      _
    $region3: #{proposed_model_forward.1} parent=1 // loop_header
      %s137 = sphi 0, %s141
      %p138 = scmp.ge.s32.totalorder %s137, 4
      %s147 = sphi 0, %s149
      %s150 = sphi 0, %s147
      %s151 = sphi 0, %s150
      %s167 = sphi 0, %s151
      %s171 = sphi 0, %s171
      %s173 = sphi 0, %s171
      %s174 = sphi 0, %s173
      %s188 = sphi 0, %s174
      %s192 = sphi 0, %s192
      %s194 = sphi 0, %s192
      %s195 = sphi 0, %s194
      %s209 = sphi 0, %s195
      %s213 = sphi 0, %s213
      %s215 = sphi 0, %s213
      %s216 = sphi 0, %s215
      %s230 = sphi 0, %s216
      %s234 = sphi 0, %s234
      %s236 = sphi 0, %s234
      %s237 = sphi 0, %s236
      %s251 = sphi 0, %s237
      %s255 = sphi 0, %s255
      %s257 = sphi 0, %s255
      %s258 = sphi 0, %s257
      %s272 = sphi 0, %s258
      %s276 = sphi 0, %s276
      %s278 = sphi 0, %s276
      %s279 = sphi 0, %s278
      %s293 = sphi 0, %s279
      %s297 = sphi 0, %s297
      %s299 = sphi 0, %s297
      %s300 = sphi 0, %s299
      %s314 = sphi 0, %s300
      %s318 = sphi 0, %s318
      %s320 = sphi 0, %s318
      %s321 = sphi 0, %s320
      %s335 = sphi 0, %s321
      %s339 = sphi 0, %s339
      %s341 = sphi 0, %s339
      %s342 = sphi 0, %s341
      %s356 = sphi 0, %s342
      %s360 = sphi 0, %s360
      %s362 = sphi 0, %s360
      %s363 = sphi 0, %s362
      %s377 = sphi 0, %s363
      %s381 = sphi 0, %s381
      %s383 = sphi 0, %s381
      %s384 = sphi 0, %s383
      %s398 = sphi 0, %s384
      %s402 = sphi 0, %s402
      %s404 = sphi 0, %s402
      %s405 = sphi 0, %s404
      %s419 = sphi 0, %s405
      %s423 = sphi 0, %s423
      %s425 = sphi 0, %s423
      %s426 = sphi 0, %s425
      %s440 = sphi 0, %s426
      %s444 = sphi 0, %s444
      %s446 = sphi 0, %s444
      %s447 = sphi 0, %s446
      %s461 = sphi 0, %s447
      %s465 = sphi 0, %s465
      %s467 = sphi 0, %s465
      %s468 = sphi 0, %s467
      %s482 = sphi 0, %s468
      %s486 = sphi 0, %s486
      %s488 = sphi 0, %s486
      %s489 = sphi 0, %s488
      %s503 = sphi 0, %s489
      %s507 = sphi 0, %s507
      %s509 = sphi 0, %s507
      %s510 = sphi 0, %s509
      %s524 = sphi 0, %s510
      %s528 = sphi 0, %s528
      %s530 = sphi 0, %s528
      %s531 = sphi 0, %s530
      %s545 = sphi 0, %s531
      %s549 = sphi 0, %s549
      %s551 = sphi 0, %s549
      %s552 = sphi 0, %s551
      %s566 = sphi 0, %s552
      %s570 = sphi 0, %s570
      %s572 = sphi 0, %s570
      %s573 = sphi 0, %s572
      %s587 = sphi 0, %s573
      %s591 = sphi 0, %s591
      %s593 = sphi 0, %s591
      %s594 = sphi 0, %s593
      %s608 = sphi 0, %s594
      %s612 = sphi 0, %s612
      %s614 = sphi 0, %s612
      %s615 = sphi 0, %s614
      %s629 = sphi 0, %s615
      %s633 = sphi 0, %s633
      %s635 = sphi 0, %s633
      %s636 = sphi 0, %s635
      %s650 = sphi 0, %s636
      %s654 = sphi 0, %s654
      %s656 = sphi 0, %s654
      %s657 = sphi 0, %s656
      %s671 = sphi 0, %s657
      %s675 = sphi 0, %s675
      %s677 = sphi 0, %s675
      %s678 = sphi 0, %s677
      %s692 = sphi 0, %s678
      %s696 = sphi 0, %s696
      %s698 = sphi 0, %s696
      %s699 = sphi 0, %s698
      %s713 = sphi 0, %s699
      %s717 = sphi 0, %s717
      %s719 = sphi 0, %s717
      %s720 = sphi 0, %s719
      %s734 = sphi 0, %s720
      %s738 = sphi 0, %s738
      %s740 = sphi 0, %s738
      %s741 = sphi 0, %s740
      %s755 = sphi 0, %s741
      %s759 = sphi 0, %s759
      %s761 = sphi 0, %s759
      %s762 = sphi 0, %s761
      %s776 = sphi 0, %s762
      %s780 = sphi 0, %s780
      %s782 = sphi 0, %s780
      %s783 = sphi 0, %s782
      %s797 = sphi 0, %s783
      %s801 = sphi 0, %s801
      %s803 = sphi 0, %s801
      %s804 = sphi 0, %s803
      %s818 = sphi 0, %s804
      %s822 = sphi 0, %s822
      %s824 = sphi 0, %s822
      %s825 = sphi 0, %s824
      %s839 = sphi 0, %s825
      %s843 = sphi 0, %s843
      %s845 = sphi 0, %s843
      %s846 = sphi 0, %s845
      %s860 = sphi 0, %s846
      %s864 = sphi 0, %s864
      %s866 = sphi 0, %s864
      %s867 = sphi 0, %s866
      %s881 = sphi 0, %s867
      %s885 = sphi 0, %s885
      %s887 = sphi 0, %s885
      %s888 = sphi 0, %s887
      %s902 = sphi 0, %s888
      %s906 = sphi 0, %s906
      %s908 = sphi 0, %s906
      %s909 = sphi 0, %s908
      %s923 = sphi 0, %s909
      %s927 = sphi 0, %s927
      %s929 = sphi 0, %s927
      %s930 = sphi 0, %s929
      %s944 = sphi 0, %s930
      %s948 = sphi 0, %s948
      %s950 = sphi 0, %s948
      %s951 = sphi 0, %s950
      %s965 = sphi 0, %s951
      %s969 = sphi 0, %s969
      %s971 = sphi 0, %s969
      %s972 = sphi 0, %s971
      %s986 = sphi 0, %s972
      %s990 = sphi 0, %s990
      %s992 = sphi 0, %s990
      %s993 = sphi 0, %s992
      %s1007 = sphi 0, %s993
      %s1011 = sphi 0, %s1011
      %s1013 = sphi 0, %s1011
      %s1014 = sphi 0, %s1013
      %s1028 = sphi 0, %s1014
      %s1032 = sphi 0, %s1032
      %s1034 = sphi 0, %s1032
      %s1035 = sphi 0, %s1034
      %s1049 = sphi 0, %s1035
      %s1053 = sphi 0, %s1053
      %s1055 = sphi 0, %s1053
      %s1056 = sphi 0, %s1055
      %s1070 = sphi 0, %s1056
      %s1074 = sphi 0, %s1074
      %s1076 = sphi 0, %s1074
      %s1077 = sphi 0, %s1076
      %s1091 = sphi 0, %s1077
      %s1095 = sphi 0, %s1095
      %s1097 = sphi 0, %s1095
      %s1098 = sphi 0, %s1097
      %s1112 = sphi 0, %s1098
      %s1116 = sphi 0, %s1116
      %s1118 = sphi 0, %s1116
      %s1119 = sphi 0, %s1118
      %s1133 = sphi 0, %s1119
      %s1137 = sphi 0, %s1137
      %s1139 = sphi 0, %s1137
      %s1140 = sphi 0, %s1139
      %s1154 = sphi 0, %s1140
      %s1158 = sphi 0, %s1158
      %s1160 = sphi 0, %s1158
      %s1161 = sphi 0, %s1160
      %s1175 = sphi 0, %s1161
      %s1179 = sphi 0, %s1179
      %s1181 = sphi 0, %s1179
      %s1182 = sphi 0, %s1181
      %s1196 = sphi 0, %s1182
      %s1200 = sphi 0, %s1200
      %s1202 = sphi 0, %s1200
      %s1203 = sphi 0, %s1202
      %s1217 = sphi 0, %s1203
      %s1221 = sphi 0, %s1221
      %s1223 = sphi 0, %s1221
      %s1224 = sphi 0, %s1223
      %s1238 = sphi 0, %s1224
      %s1242 = sphi 0, %s1242
      %s1244 = sphi 0, %s1242
      %s1245 = sphi 0, %s1244
      %s1259 = sphi 0, %s1245
      %s1263 = sphi 0, %s1263
      %s1265 = sphi 0, %s1263
      %s1266 = sphi 0, %s1265
      %s1280 = sphi 0, %s1266
      %s1284 = sphi 0, %s1284
      %s1286 = sphi 0, %s1284
      %s1287 = sphi 0, %s1286
      %s1301 = sphi 0, %s1287
      %s1305 = sphi 0, %s1305
      %s1307 = sphi 0, %s1305
      %s1308 = sphi 0, %s1307
      %s1322 = sphi 0, %s1308
      %s1326 = sphi 0, %s1326
      %s1328 = sphi 0, %s1326
      %s1329 = sphi 0, %s1328
      %s1343 = sphi 0, %s1329
      %s1347 = sphi 0, %s1347
      %s1349 = sphi 0, %s1347
      %s1350 = sphi 0, %s1349
      %s1364 = sphi 0, %s1350
      %s1368 = sphi 0, %s1368
      %s1370 = sphi 0, %s1368
      %s1371 = sphi 0, %s1370
      %s1385 = sphi 0, %s1371
      %s1391 = sphi 0, %s1393
      %s1394 = sphi 0, %s1391
      %s1395 = sphi 0, %s1394
      %s1411 = sphi 0, %s1395
    $region4: #{proposed_model_forward.1} parent=1 // loop_header_branch
      %140 = sbr.rel (%p138) target = $region8
    $region5: #{proposed_model_forward.1} parent=1 // loop_body
      %s142 = ssub.s32 %s137, 1
      %s143 = ssub.s32 %s137, 2
      %s144 = sadd.s32 %s137, 1
      %s145 = ssub.s32 %s137, %s144
      %p146 = scmp.eq.s32.totalorder %s145, 0
      %s148 = sadd.s32 %s147, 1
      %s149 = scalar_select %p146, %s147, %s148
      %p152 = pneg %p146
      %p153 = scmp.eq.s32.totalorder %s137, 1
      %p154 = por %p152, %p153
      %p155 = scmp.ne.s32.totalorder %s147, %s150
      %p156 = scmp.eq.s32.totalorder %s137, 0
      %p157 = por %p155, %p156
      %p158 = scmp.ne.s32.totalorder %s147, %s150
      %p159 = scmp.eq.s32.totalorder %s142, 1
      %p160 = por %p158, %p159
      %p161 = scmp.ne.s32.totalorder %s150, %s151
      %p162 = scmp.eq.s32.totalorder %s142, 0
      %p163 = por %p161, %p162
      %p164 = scmp.ne.s32.totalorder %s150, %s151
      %p165 = scmp.eq.s32.totalorder %s143, 1
      %p166 = por %p164, %p165
      %p168 = scmp.ne.s32.totalorder %s151, %s167
      %p169 = scmp.eq.s32.totalorder %s143, 0
      %p170 = por %p168, %p169
      %s172 = sadd.s32 %s171, 1
      %p175 = scmp.eq.s32.totalorder %s137, 1
      %p176 = scmp.ne.s32.totalorder %s171, %s173
      %p177 = scmp.eq.s32.totalorder %s137, 0
      %p178 = por %p176, %p177
      %p179 = scmp.ne.s32.totalorder %s171, %s173
      %p180 = scmp.eq.s32.totalorder %s142, 1
      %p181 = por %p179, %p180
      %p182 = scmp.ne.s32.totalorder %s173, %s174
      %p183 = scmp.eq.s32.totalorder %s142, 0
      %p184 = por %p182, %p183
      %p185 = scmp.ne.s32.totalorder %s173, %s174
      %p186 = scmp.eq.s32.totalorder %s143, 1
      %p187 = por %p185, %p186
      %p189 = scmp.ne.s32.totalorder %s174, %s188
      %p190 = scmp.eq.s32.totalorder %s143, 0
      %p191 = por %p189, %p190
      %s193 = sadd.s32 %s192, 1
      %p196 = scmp.eq.s32.totalorder %s137, 1
      %p197 = scmp.ne.s32.totalorder %s192, %s194
      %p198 = scmp.eq.s32.totalorder %s137, 0
      %p199 = por %p197, %p198
      %p200 = scmp.ne.s32.totalorder %s192, %s194
      %p201 = scmp.eq.s32.totalorder %s142, 1
      %p202 = por %p200, %p201
      %p203 = scmp.ne.s32.totalorder %s194, %s195
      %p204 = scmp.eq.s32.totalorder %s142, 0
      %p205 = por %p203, %p204
      %p206 = scmp.ne.s32.totalorder %s194, %s195
      %p207 = scmp.eq.s32.totalorder %s143, 1
      %p208 = por %p206, %p207
      %p210 = scmp.ne.s32.totalorder %s195, %s209
      %p211 = scmp.eq.s32.totalorder %s143, 0
      %p212 = por %p210, %p211
      %s214 = sadd.s32 %s213, 1
      %p217 = scmp.eq.s32.totalorder %s137, 1
      %p218 = scmp.ne.s32.totalorder %s213, %s215
      %p219 = scmp.eq.s32.totalorder %s137, 0
      %p220 = por %p218, %p219
      %p221 = scmp.ne.s32.totalorder %s213, %s215
      %p222 = scmp.eq.s32.totalorder %s142, 1
      %p223 = por %p221, %p222
      %p224 = scmp.ne.s32.totalorder %s215, %s216
      %p225 = scmp.eq.s32.totalorder %s142, 0
      %p226 = por %p224, %p225
      %p227 = scmp.ne.s32.totalorder %s215, %s216
      %p228 = scmp.eq.s32.totalorder %s143, 1
      %p229 = por %p227, %p228
      %p231 = scmp.ne.s32.totalorder %s216, %s230
      %p232 = scmp.eq.s32.totalorder %s143, 0
      %p233 = por %p231, %p232
      %s235 = sadd.s32 %s234, 1
      %p238 = scmp.eq.s32.totalorder %s137, 1
      %p239 = scmp.ne.s32.totalorder %s234, %s236
      %p240 = scmp.eq.s32.totalorder %s137, 0
      %p241 = por %p239, %p240
      %p242 = scmp.ne.s32.totalorder %s234, %s236
      %p243 = scmp.eq.s32.totalorder %s142, 1
      %p244 = por %p242, %p243
      %p245 = scmp.ne.s32.totalorder %s236, %s237
      %p246 = scmp.eq.s32.totalorder %s142, 0
      %p247 = por %p245, %p246
      %p248 = scmp.ne.s32.totalorder %s236, %s237
      %p249 = scmp.eq.s32.totalorder %s143, 1
      %p250 = por %p248, %p249
      %p252 = scmp.ne.s32.totalorder %s237, %s251
      %p253 = scmp.eq.s32.totalorder %s143, 0
      %p254 = por %p252, %p253
      %s256 = sadd.s32 %s255, 1
      %p259 = scmp.eq.s32.totalorder %s137, 1
      %p260 = scmp.ne.s32.totalorder %s255, %s257
      %p261 = scmp.eq.s32.totalorder %s137, 0
      %p262 = por %p260, %p261
      %p263 = scmp.ne.s32.totalorder %s255, %s257
      %p264 = scmp.eq.s32.totalorder %s142, 1
      %p265 = por %p263, %p264
      %p266 = scmp.ne.s32.totalorder %s257, %s258
      %p267 = scmp.eq.s32.totalorder %s142, 0
      %p268 = por %p266, %p267
      %p269 = scmp.ne.s32.totalorder %s257, %s258
      %p270 = scmp.eq.s32.totalorder %s143, 1
      %p271 = por %p269, %p270
      %p273 = scmp.ne.s32.totalorder %s258, %s272
      %p274 = scmp.eq.s32.totalorder %s143, 0
      %p275 = por %p273, %p274
      %s277 = sadd.s32 %s276, 1
      %p280 = scmp.eq.s32.totalorder %s137, 1
      %p281 = scmp.ne.s32.totalorder %s276, %s278
      %p282 = scmp.eq.s32.totalorder %s137, 0
      %p283 = por %p281, %p282
      %p284 = scmp.ne.s32.totalorder %s276, %s278
      %p285 = scmp.eq.s32.totalorder %s142, 1
      %p286 = por %p284, %p285
      %p287 = scmp.ne.s32.totalorder %s278, %s279
      %p288 = scmp.eq.s32.totalorder %s142, 0
      %p289 = por %p287, %p288
      %p290 = scmp.ne.s32.totalorder %s278, %s279
      %p291 = scmp.eq.s32.totalorder %s143, 1
      %p292 = por %p290, %p291
      %p294 = scmp.ne.s32.totalorder %s279, %s293
      %p295 = scmp.eq.s32.totalorder %s143, 0
      %p296 = por %p294, %p295
      %s298 = sadd.s32 %s297, 1
      %p301 = scmp.eq.s32.totalorder %s137, 1
      %p302 = scmp.ne.s32.totalorder %s297, %s299
      %p303 = scmp.eq.s32.totalorder %s137, 0
      %p304 = por %p302, %p303
      %p305 = scmp.ne.s32.totalorder %s297, %s299
      %p306 = scmp.eq.s32.totalorder %s142, 1
      %p307 = por %p305, %p306
      %p308 = scmp.ne.s32.totalorder %s299, %s300
      %p309 = scmp.eq.s32.totalorder %s142, 0
      %p310 = por %p308, %p309
      %p311 = scmp.ne.s32.totalorder %s299, %s300
      %p312 = scmp.eq.s32.totalorder %s143, 1
      %p313 = por %p311, %p312
      %p315 = scmp.ne.s32.totalorder %s300, %s314
      %p316 = scmp.eq.s32.totalorder %s143, 0
      %p317 = por %p315, %p316
      %s319 = sadd.s32 %s318, 1
      %p322 = scmp.eq.s32.totalorder %s137, 1
      %p323 = scmp.ne.s32.totalorder %s318, %s320
      %p324 = scmp.eq.s32.totalorder %s137, 0
      %p325 = por %p323, %p324
      %p326 = scmp.ne.s32.totalorder %s318, %s320
      %p327 = scmp.eq.s32.totalorder %s142, 1
      %p328 = por %p326, %p327
      %p329 = scmp.ne.s32.totalorder %s320, %s321
      %p330 = scmp.eq.s32.totalorder %s142, 0
      %p331 = por %p329, %p330
      %p332 = scmp.ne.s32.totalorder %s320, %s321
      %p333 = scmp.eq.s32.totalorder %s143, 1
      %p334 = por %p332, %p333
      %p336 = scmp.ne.s32.totalorder %s321, %s335
      %p337 = scmp.eq.s32.totalorder %s143, 0
      %p338 = por %p336, %p337
      %s340 = sadd.s32 %s339, 1
      %p343 = scmp.eq.s32.totalorder %s137, 1
      %p344 = scmp.ne.s32.totalorder %s339, %s341
      %p345 = scmp.eq.s32.totalorder %s137, 0
      %p346 = por %p344, %p345
      %p347 = scmp.ne.s32.totalorder %s339, %s341
      %p348 = scmp.eq.s32.totalorder %s142, 1
      %p349 = por %p347, %p348
      %p350 = scmp.ne.s32.totalorder %s341, %s342
      %p351 = scmp.eq.s32.totalorder %s142, 0
      %p352 = por %p350, %p351
      %p353 = scmp.ne.s32.totalorder %s341, %s342
      %p354 = scmp.eq.s32.totalorder %s143, 1
      %p355 = por %p353, %p354
      %p357 = scmp.ne.s32.totalorder %s342, %s356
      %p358 = scmp.eq.s32.totalorder %s143, 0
      %p359 = por %p357, %p358
      %s361 = sadd.s32 %s360, 1
      %p364 = scmp.eq.s32.totalorder %s137, 1
      %p365 = scmp.ne.s32.totalorder %s360, %s362
      %p366 = scmp.eq.s32.totalorder %s137, 0
      %p367 = por %p365, %p366
      %p368 = scmp.ne.s32.totalorder %s360, %s362
      %p369 = scmp.eq.s32.totalorder %s142, 1
      %p370 = por %p368, %p369
      %p371 = scmp.ne.s32.totalorder %s362, %s363
      %p372 = scmp.eq.s32.totalorder %s142, 0
      %p373 = por %p371, %p372
      %p374 = scmp.ne.s32.totalorder %s362, %s363
      %p375 = scmp.eq.s32.totalorder %s143, 1
      %p376 = por %p374, %p375
      %p378 = scmp.ne.s32.totalorder %s363, %s377
      %p379 = scmp.eq.s32.totalorder %s143, 0
      %p380 = por %p378, %p379
      %s382 = sadd.s32 %s381, 1
      %p385 = scmp.eq.s32.totalorder %s137, 1
      %p386 = scmp.ne.s32.totalorder %s381, %s383
      %p387 = scmp.eq.s32.totalorder %s137, 0
      %p388 = por %p386, %p387
      %p389 = scmp.ne.s32.totalorder %s381, %s383
      %p390 = scmp.eq.s32.totalorder %s142, 1
      %p391 = por %p389, %p390
      %p392 = scmp.ne.s32.totalorder %s383, %s384
      %p393 = scmp.eq.s32.totalorder %s142, 0
      %p394 = por %p392, %p393
      %p395 = scmp.ne.s32.totalorder %s383, %s384
      %p396 = scmp.eq.s32.totalorder %s143, 1
      %p397 = por %p395, %p396
      %p399 = scmp.ne.s32.totalorder %s384, %s398
      %p400 = scmp.eq.s32.totalorder %s143, 0
      %p401 = por %p399, %p400
      %s403 = sadd.s32 %s402, 1
      %p406 = scmp.eq.s32.totalorder %s137, 1
      %p407 = scmp.ne.s32.totalorder %s402, %s404
      %p408 = scmp.eq.s32.totalorder %s137, 0
      %p409 = por %p407, %p408
      %p410 = scmp.ne.s32.totalorder %s402, %s404
      %p411 = scmp.eq.s32.totalorder %s142, 1
      %p412 = por %p410, %p411
      %p413 = scmp.ne.s32.totalorder %s404, %s405
      %p414 = scmp.eq.s32.totalorder %s142, 0
      %p415 = por %p413, %p414
      %p416 = scmp.ne.s32.totalorder %s404, %s405
      %p417 = scmp.eq.s32.totalorder %s143, 1
      %p418 = por %p416, %p417
      %p420 = scmp.ne.s32.totalorder %s405, %s419
      %p421 = scmp.eq.s32.totalorder %s143, 0
      %p422 = por %p420, %p421
      %s424 = sadd.s32 %s423, 1
      %p427 = scmp.eq.s32.totalorder %s137, 1
      %p428 = scmp.ne.s32.totalorder %s423, %s425
      %p429 = scmp.eq.s32.totalorder %s137, 0
      %p430 = por %p428, %p429
      %p431 = scmp.ne.s32.totalorder %s423, %s425
      %p432 = scmp.eq.s32.totalorder %s142, 1
      %p433 = por %p431, %p432
      %p434 = scmp.ne.s32.totalorder %s425, %s426
      %p435 = scmp.eq.s32.totalorder %s142, 0
      %p436 = por %p434, %p435
      %p437 = scmp.ne.s32.totalorder %s425, %s426
      %p438 = scmp.eq.s32.totalorder %s143, 1
      %p439 = por %p437, %p438
      %p441 = scmp.ne.s32.totalorder %s426, %s440
      %p442 = scmp.eq.s32.totalorder %s143, 0
      %p443 = por %p441, %p442
      %s445 = sadd.s32 %s444, 1
      %p448 = scmp.eq.s32.totalorder %s137, 1
      %p449 = scmp.ne.s32.totalorder %s444, %s446
      %p450 = scmp.eq.s32.totalorder %s137, 0
      %p451 = por %p449, %p450
      %p452 = scmp.ne.s32.totalorder %s444, %s446
      %p453 = scmp.eq.s32.totalorder %s142, 1
      %p454 = por %p452, %p453
      %p455 = scmp.ne.s32.totalorder %s446, %s447
      %p456 = scmp.eq.s32.totalorder %s142, 0
      %p457 = por %p455, %p456
      %p458 = scmp.ne.s32.totalorder %s446, %s447
      %p459 = scmp.eq.s32.totalorder %s143, 1
      %p460 = por %p458, %p459
      %p462 = scmp.ne.s32.totalorder %s447, %s461
      %p463 = scmp.eq.s32.totalorder %s143, 0
      %p464 = por %p462, %p463
      %s466 = sadd.s32 %s465, 1
      %p469 = scmp.eq.s32.totalorder %s137, 1
      %p470 = scmp.ne.s32.totalorder %s465, %s467
      %p471 = scmp.eq.s32.totalorder %s137, 0
      %p472 = por %p470, %p471
      %p473 = scmp.ne.s32.totalorder %s465, %s467
      %p474 = scmp.eq.s32.totalorder %s142, 1
      %p475 = por %p473, %p474
      %p476 = scmp.ne.s32.totalorder %s467, %s468
      %p477 = scmp.eq.s32.totalorder %s142, 0
      %p478 = por %p476, %p477
      %p479 = scmp.ne.s32.totalorder %s467, %s468
      %p480 = scmp.eq.s32.totalorder %s143, 1
      %p481 = por %p479, %p480
      %p483 = scmp.ne.s32.totalorder %s468, %s482
      %p484 = scmp.eq.s32.totalorder %s143, 0
      %p485 = por %p483, %p484
      %s487 = sadd.s32 %s486, 1
      %p490 = scmp.eq.s32.totalorder %s137, 1
      %p491 = scmp.ne.s32.totalorder %s486, %s488
      %p492 = scmp.eq.s32.totalorder %s137, 0
      %p493 = por %p491, %p492
      %p494 = scmp.ne.s32.totalorder %s486, %s488
      %p495 = scmp.eq.s32.totalorder %s142, 1
      %p496 = por %p494, %p495
      %p497 = scmp.ne.s32.totalorder %s488, %s489
      %p498 = scmp.eq.s32.totalorder %s142, 0
      %p499 = por %p497, %p498
      %p500 = scmp.ne.s32.totalorder %s488, %s489
      %p501 = scmp.eq.s32.totalorder %s143, 1
      %p502 = por %p500, %p501
      %p504 = scmp.ne.s32.totalorder %s489, %s503
      %p505 = scmp.eq.s32.totalorder %s143, 0
      %p506 = por %p504, %p505
      %s508 = sadd.s32 %s507, 1
      %p511 = scmp.eq.s32.totalorder %s137, 1
      %p512 = scmp.ne.s32.totalorder %s507, %s509
      %p513 = scmp.eq.s32.totalorder %s137, 0
      %p514 = por %p512, %p513
      %p515 = scmp.ne.s32.totalorder %s507, %s509
      %p516 = scmp.eq.s32.totalorder %s142, 1
      %p517 = por %p515, %p516
      %p518 = scmp.ne.s32.totalorder %s509, %s510
      %p519 = scmp.eq.s32.totalorder %s142, 0
      %p520 = por %p518, %p519
      %p521 = scmp.ne.s32.totalorder %s509, %s510
      %p522 = scmp.eq.s32.totalorder %s143, 1
      %p523 = por %p521, %p522
      %p525 = scmp.ne.s32.totalorder %s510, %s524
      %p526 = scmp.eq.s32.totalorder %s143, 0
      %p527 = por %p525, %p526
      %s529 = sadd.s32 %s528, 1
      %p532 = scmp.eq.s32.totalorder %s137, 1
      %p533 = scmp.ne.s32.totalorder %s528, %s530
      %p534 = scmp.eq.s32.totalorder %s137, 0
      %p535 = por %p533, %p534
      %p536 = scmp.ne.s32.totalorder %s528, %s530
      %p537 = scmp.eq.s32.totalorder %s142, 1
      %p538 = por %p536, %p537
      %p539 = scmp.ne.s32.totalorder %s530, %s531
      %p540 = scmp.eq.s32.totalorder %s142, 0
      %p541 = por %p539, %p540
      %p542 = scmp.ne.s32.totalorder %s530, %s531
      %p543 = scmp.eq.s32.totalorder %s143, 1
      %p544 = por %p542, %p543
      %p546 = scmp.ne.s32.totalorder %s531, %s545
      %p547 = scmp.eq.s32.totalorder %s143, 0
      %p548 = por %p546, %p547
      %s550 = sadd.s32 %s549, 1
      %p553 = scmp.eq.s32.totalorder %s137, 1
      %p554 = scmp.ne.s32.totalorder %s549, %s551
      %p555 = scmp.eq.s32.totalorder %s137, 0
      %p556 = por %p554, %p555
      %p557 = scmp.ne.s32.totalorder %s549, %s551
      %p558 = scmp.eq.s32.totalorder %s142, 1
      %p559 = por %p557, %p558
      %p560 = scmp.ne.s32.totalorder %s551, %s552
      %p561 = scmp.eq.s32.totalorder %s142, 0
      %p562 = por %p560, %p561
      %p563 = scmp.ne.s32.totalorder %s551, %s552
      %p564 = scmp.eq.s32.totalorder %s143, 1
      %p565 = por %p563, %p564
      %p567 = scmp.ne.s32.totalorder %s552, %s566
      %p568 = scmp.eq.s32.totalorder %s143, 0
      %p569 = por %p567, %p568
      %s571 = sadd.s32 %s570, 1
      %p574 = scmp.eq.s32.totalorder %s137, 1
      %p575 = scmp.ne.s32.totalorder %s570, %s572
      %p576 = scmp.eq.s32.totalorder %s137, 0
      %p577 = por %p575, %p576
      %p578 = scmp.ne.s32.totalorder %s570, %s572
      %p579 = scmp.eq.s32.totalorder %s142, 1
      %p580 = por %p578, %p579
      %p581 = scmp.ne.s32.totalorder %s572, %s573
      %p582 = scmp.eq.s32.totalorder %s142, 0
      %p583 = por %p581, %p582
      %p584 = scmp.ne.s32.totalorder %s572, %s573
      %p585 = scmp.eq.s32.totalorder %s143, 1
      %p586 = por %p584, %p585
      %p588 = scmp.ne.s32.totalorder %s573, %s587
      %p589 = scmp.eq.s32.totalorder %s143, 0
      %p590 = por %p588, %p589
      %s592 = sadd.s32 %s591, 1
      %p595 = scmp.eq.s32.totalorder %s137, 1
      %p596 = scmp.ne.s32.totalorder %s591, %s593
      %p597 = scmp.eq.s32.totalorder %s137, 0
      %p598 = por %p596, %p597
      %p599 = scmp.ne.s32.totalorder %s591, %s593
      %p600 = scmp.eq.s32.totalorder %s142, 1
      %p601 = por %p599, %p600
      %p602 = scmp.ne.s32.totalorder %s593, %s594
      %p603 = scmp.eq.s32.totalorder %s142, 0
      %p604 = por %p602, %p603
      %p605 = scmp.ne.s32.totalorder %s593, %s594
      %p606 = scmp.eq.s32.totalorder %s143, 1
      %p607 = por %p605, %p606
      %p609 = scmp.ne.s32.totalorder %s594, %s608
      %p610 = scmp.eq.s32.totalorder %s143, 0
      %p611 = por %p609, %p610
      %s613 = sadd.s32 %s612, 1
      %p616 = scmp.eq.s32.totalorder %s137, 1
      %p617 = scmp.ne.s32.totalorder %s612, %s614
      %p618 = scmp.eq.s32.totalorder %s137, 0
      %p619 = por %p617, %p618
      %p620 = scmp.ne.s32.totalorder %s612, %s614
      %p621 = scmp.eq.s32.totalorder %s142, 1
      %p622 = por %p620, %p621
      %p623 = scmp.ne.s32.totalorder %s614, %s615
      %p624 = scmp.eq.s32.totalorder %s142, 0
      %p625 = por %p623, %p624
      %p626 = scmp.ne.s32.totalorder %s614, %s615
      %p627 = scmp.eq.s32.totalorder %s143, 1
      %p628 = por %p626, %p627
      %p630 = scmp.ne.s32.totalorder %s615, %s629
      %p631 = scmp.eq.s32.totalorder %s143, 0
      %p632 = por %p630, %p631
      %s634 = sadd.s32 %s633, 1
      %p637 = scmp.eq.s32.totalorder %s137, 1
      %p638 = scmp.ne.s32.totalorder %s633, %s635
      %p639 = scmp.eq.s32.totalorder %s137, 0
      %p640 = por %p638, %p639
      %p641 = scmp.ne.s32.totalorder %s633, %s635
      %p642 = scmp.eq.s32.totalorder %s142, 1
      %p643 = por %p641, %p642
      %p644 = scmp.ne.s32.totalorder %s635, %s636
      %p645 = scmp.eq.s32.totalorder %s142, 0
      %p646 = por %p644, %p645
      %p647 = scmp.ne.s32.totalorder %s635, %s636
      %p648 = scmp.eq.s32.totalorder %s143, 1
      %p649 = por %p647, %p648
      %p651 = scmp.ne.s32.totalorder %s636, %s650
      %p652 = scmp.eq.s32.totalorder %s143, 0
      %p653 = por %p651, %p652
      %s655 = sadd.s32 %s654, 1
      %p658 = scmp.eq.s32.totalorder %s137, 1
      %p659 = scmp.ne.s32.totalorder %s654, %s656
      %p660 = scmp.eq.s32.totalorder %s137, 0
      %p661 = por %p659, %p660
      %p662 = scmp.ne.s32.totalorder %s654, %s656
      %p663 = scmp.eq.s32.totalorder %s142, 1
      %p664 = por %p662, %p663
      %p665 = scmp.ne.s32.totalorder %s656, %s657
      %p666 = scmp.eq.s32.totalorder %s142, 0
      %p667 = por %p665, %p666
      %p668 = scmp.ne.s32.totalorder %s656, %s657
      %p669 = scmp.eq.s32.totalorder %s143, 1
      %p670 = por %p668, %p669
      %p672 = scmp.ne.s32.totalorder %s657, %s671
      %p673 = scmp.eq.s32.totalorder %s143, 0
      %p674 = por %p672, %p673
      %s676 = sadd.s32 %s675, 1
      %p679 = scmp.eq.s32.totalorder %s137, 1
      %p680 = scmp.ne.s32.totalorder %s675, %s677
      %p681 = scmp.eq.s32.totalorder %s137, 0
      %p682 = por %p680, %p681
      %p683 = scmp.ne.s32.totalorder %s675, %s677
      %p684 = scmp.eq.s32.totalorder %s142, 1
      %p685 = por %p683, %p684
      %p686 = scmp.ne.s32.totalorder %s677, %s678
      %p687 = scmp.eq.s32.totalorder %s142, 0
      %p688 = por %p686, %p687
      %p689 = scmp.ne.s32.totalorder %s677, %s678
      %p690 = scmp.eq.s32.totalorder %s143, 1
      %p691 = por %p689, %p690
      %p693 = scmp.ne.s32.totalorder %s678, %s692
      %p694 = scmp.eq.s32.totalorder %s143, 0
      %p695 = por %p693, %p694
      %s697 = sadd.s32 %s696, 1
      %p700 = scmp.eq.s32.totalorder %s137, 1
      %p701 = scmp.ne.s32.totalorder %s696, %s698
      %p702 = scmp.eq.s32.totalorder %s137, 0
      %p703 = por %p701, %p702
      %p704 = scmp.ne.s32.totalorder %s696, %s698
      %p705 = scmp.eq.s32.totalorder %s142, 1
      %p706 = por %p704, %p705
      %p707 = scmp.ne.s32.totalorder %s698, %s699
      %p708 = scmp.eq.s32.totalorder %s142, 0
      %p709 = por %p707, %p708
      %p710 = scmp.ne.s32.totalorder %s698, %s699
      %p711 = scmp.eq.s32.totalorder %s143, 1
      %p712 = por %p710, %p711
      %p714 = scmp.ne.s32.totalorder %s699, %s713
      %p715 = scmp.eq.s32.totalorder %s143, 0
      %p716 = por %p714, %p715
      %s718 = sadd.s32 %s717, 1
      %p721 = scmp.eq.s32.totalorder %s137, 1
      %p722 = scmp.ne.s32.totalorder %s717, %s719
      %p723 = scmp.eq.s32.totalorder %s137, 0
      %p724 = por %p722, %p723
      %p725 = scmp.ne.s32.totalorder %s717, %s719
      %p726 = scmp.eq.s32.totalorder %s142, 1
      %p727 = por %p725, %p726
      %p728 = scmp.ne.s32.totalorder %s719, %s720
      %p729 = scmp.eq.s32.totalorder %s142, 0
      %p730 = por %p728, %p729
      %p731 = scmp.ne.s32.totalorder %s719, %s720
      %p732 = scmp.eq.s32.totalorder %s143, 1
      %p733 = por %p731, %p732
      %p735 = scmp.ne.s32.totalorder %s720, %s734
      %p736 = scmp.eq.s32.totalorder %s143, 0
      %p737 = por %p735, %p736
      %s739 = sadd.s32 %s738, 1
      %p742 = scmp.eq.s32.totalorder %s137, 1
      %p743 = scmp.ne.s32.totalorder %s738, %s740
      %p744 = scmp.eq.s32.totalorder %s137, 0
      %p745 = por %p743, %p744
      %p746 = scmp.ne.s32.totalorder %s738, %s740
      %p747 = scmp.eq.s32.totalorder %s142, 1
      %p748 = por %p746, %p747
      %p749 = scmp.ne.s32.totalorder %s740, %s741
      %p750 = scmp.eq.s32.totalorder %s142, 0
      %p751 = por %p749, %p750
      %p752 = scmp.ne.s32.totalorder %s740, %s741
      %p753 = scmp.eq.s32.totalorder %s143, 1
      %p754 = por %p752, %p753
      %p756 = scmp.ne.s32.totalorder %s741, %s755
      %p757 = scmp.eq.s32.totalorder %s143, 0
      %p758 = por %p756, %p757
      %s760 = sadd.s32 %s759, 1
      %p763 = scmp.eq.s32.totalorder %s137, 1
      %p764 = scmp.ne.s32.totalorder %s759, %s761
      %p765 = scmp.eq.s32.totalorder %s137, 0
      %p766 = por %p764, %p765
      %p767 = scmp.ne.s32.totalorder %s759, %s761
      %p768 = scmp.eq.s32.totalorder %s142, 1
      %p769 = por %p767, %p768
      %p770 = scmp.ne.s32.totalorder %s761, %s762
      %p771 = scmp.eq.s32.totalorder %s142, 0
      %p772 = por %p770, %p771
      %p773 = scmp.ne.s32.totalorder %s761, %s762
      %p774 = scmp.eq.s32.totalorder %s143, 1
      %p775 = por %p773, %p774
      %p777 = scmp.ne.s32.totalorder %s762, %s776
      %p778 = scmp.eq.s32.totalorder %s143, 0
      %p779 = por %p777, %p778
      %s781 = sadd.s32 %s780, 1
      %p784 = scmp.eq.s32.totalorder %s137, 1
      %p785 = scmp.ne.s32.totalorder %s780, %s782
      %p786 = scmp.eq.s32.totalorder %s137, 0
      %p787 = por %p785, %p786
      %p788 = scmp.ne.s32.totalorder %s780, %s782
      %p789 = scmp.eq.s32.totalorder %s142, 1
      %p790 = por %p788, %p789
      %p791 = scmp.ne.s32.totalorder %s782, %s783
      %p792 = scmp.eq.s32.totalorder %s142, 0
      %p793 = por %p791, %p792
      %p794 = scmp.ne.s32.totalorder %s782, %s783
      %p795 = scmp.eq.s32.totalorder %s143, 1
      %p796 = por %p794, %p795
      %p798 = scmp.ne.s32.totalorder %s783, %s797
      %p799 = scmp.eq.s32.totalorder %s143, 0
      %p800 = por %p798, %p799
      %s802 = sadd.s32 %s801, 1
      %p805 = scmp.eq.s32.totalorder %s137, 1
      %p806 = scmp.ne.s32.totalorder %s801, %s803
      %p807 = scmp.eq.s32.totalorder %s137, 0
      %p808 = por %p806, %p807
      %p809 = scmp.ne.s32.totalorder %s801, %s803
      %p810 = scmp.eq.s32.totalorder %s142, 1
      %p811 = por %p809, %p810
      %p812 = scmp.ne.s32.totalorder %s803, %s804
      %p813 = scmp.eq.s32.totalorder %s142, 0
      %p814 = por %p812, %p813
      %p815 = scmp.ne.s32.totalorder %s803, %s804
      %p816 = scmp.eq.s32.totalorder %s143, 1
      %p817 = por %p815, %p816
      %p819 = scmp.ne.s32.totalorder %s804, %s818
      %p820 = scmp.eq.s32.totalorder %s143, 0
      %p821 = por %p819, %p820
      %s823 = sadd.s32 %s822, 1
      %p826 = scmp.eq.s32.totalorder %s137, 1
      %p827 = scmp.ne.s32.totalorder %s822, %s824
      %p828 = scmp.eq.s32.totalorder %s137, 0
      %p829 = por %p827, %p828
      %p830 = scmp.ne.s32.totalorder %s822, %s824
      %p831 = scmp.eq.s32.totalorder %s142, 1
      %p832 = por %p830, %p831
      %p833 = scmp.ne.s32.totalorder %s824, %s825
      %p834 = scmp.eq.s32.totalorder %s142, 0
      %p835 = por %p833, %p834
      %p836 = scmp.ne.s32.totalorder %s824, %s825
      %p837 = scmp.eq.s32.totalorder %s143, 1
      %p838 = por %p836, %p837
      %p840 = scmp.ne.s32.totalorder %s825, %s839
      %p841 = scmp.eq.s32.totalorder %s143, 0
      %p842 = por %p840, %p841
      %s844 = sadd.s32 %s843, 1
      %p847 = scmp.eq.s32.totalorder %s137, 1
      %p848 = scmp.ne.s32.totalorder %s843, %s845
      %p849 = scmp.eq.s32.totalorder %s137, 0
      %p850 = por %p848, %p849
      %p851 = scmp.ne.s32.totalorder %s843, %s845
      %p852 = scmp.eq.s32.totalorder %s142, 1
      %p853 = por %p851, %p852
      %p854 = scmp.ne.s32.totalorder %s845, %s846
      %p855 = scmp.eq.s32.totalorder %s142, 0
      %p856 = por %p854, %p855
      %p857 = scmp.ne.s32.totalorder %s845, %s846
      %p858 = scmp.eq.s32.totalorder %s143, 1
      %p859 = por %p857, %p858
      %p861 = scmp.ne.s32.totalorder %s846, %s860
      %p862 = scmp.eq.s32.totalorder %s143, 0
      %p863 = por %p861, %p862
      %s865 = sadd.s32 %s864, 1
      %p868 = scmp.eq.s32.totalorder %s137, 1
      %p869 = scmp.ne.s32.totalorder %s864, %s866
      %p870 = scmp.eq.s32.totalorder %s137, 0
      %p871 = por %p869, %p870
      %p872 = scmp.ne.s32.totalorder %s864, %s866
      %p873 = scmp.eq.s32.totalorder %s142, 1
      %p874 = por %p872, %p873
      %p875 = scmp.ne.s32.totalorder %s866, %s867
      %p876 = scmp.eq.s32.totalorder %s142, 0
      %p877 = por %p875, %p876
      %p878 = scmp.ne.s32.totalorder %s866, %s867
      %p879 = scmp.eq.s32.totalorder %s143, 1
      %p880 = por %p878, %p879
      %p882 = scmp.ne.s32.totalorder %s867, %s881
      %p883 = scmp.eq.s32.totalorder %s143, 0
      %p884 = por %p882, %p883
      %s886 = sadd.s32 %s885, 1
      %p889 = scmp.eq.s32.totalorder %s137, 1
      %p890 = scmp.ne.s32.totalorder %s885, %s887
      %p891 = scmp.eq.s32.totalorder %s137, 0
      %p892 = por %p890, %p891
      %p893 = scmp.ne.s32.totalorder %s885, %s887
      %p894 = scmp.eq.s32.totalorder %s142, 1
      %p895 = por %p893, %p894
      %p896 = scmp.ne.s32.totalorder %s887, %s888
      %p897 = scmp.eq.s32.totalorder %s142, 0
      %p898 = por %p896, %p897
      %p899 = scmp.ne.s32.totalorder %s887, %s888
      %p900 = scmp.eq.s32.totalorder %s143, 1
      %p901 = por %p899, %p900
      %p903 = scmp.ne.s32.totalorder %s888, %s902
      %p904 = scmp.eq.s32.totalorder %s143, 0
      %p905 = por %p903, %p904
      %s907 = sadd.s32 %s906, 1
      %p910 = scmp.eq.s32.totalorder %s137, 1
      %p911 = scmp.ne.s32.totalorder %s906, %s908
      %p912 = scmp.eq.s32.totalorder %s137, 0
      %p913 = por %p911, %p912
      %p914 = scmp.ne.s32.totalorder %s906, %s908
      %p915 = scmp.eq.s32.totalorder %s142, 1
      %p916 = por %p914, %p915
      %p917 = scmp.ne.s32.totalorder %s908, %s909
      %p918 = scmp.eq.s32.totalorder %s142, 0
      %p919 = por %p917, %p918
      %p920 = scmp.ne.s32.totalorder %s908, %s909
      %p921 = scmp.eq.s32.totalorder %s143, 1
      %p922 = por %p920, %p921
      %p924 = scmp.ne.s32.totalorder %s909, %s923
      %p925 = scmp.eq.s32.totalorder %s143, 0
      %p926 = por %p924, %p925
      %s928 = sadd.s32 %s927, 1
      %p931 = scmp.eq.s32.totalorder %s137, 1
      %p932 = scmp.ne.s32.totalorder %s927, %s929
      %p933 = scmp.eq.s32.totalorder %s137, 0
      %p934 = por %p932, %p933
      %p935 = scmp.ne.s32.totalorder %s927, %s929
      %p936 = scmp.eq.s32.totalorder %s142, 1
      %p937 = por %p935, %p936
      %p938 = scmp.ne.s32.totalorder %s929, %s930
      %p939 = scmp.eq.s32.totalorder %s142, 0
      %p940 = por %p938, %p939
      %p941 = scmp.ne.s32.totalorder %s929, %s930
      %p942 = scmp.eq.s32.totalorder %s143, 1
      %p943 = por %p941, %p942
      %p945 = scmp.ne.s32.totalorder %s930, %s944
      %p946 = scmp.eq.s32.totalorder %s143, 0
      %p947 = por %p945, %p946
      %s949 = sadd.s32 %s948, 1
      %p952 = scmp.eq.s32.totalorder %s137, 1
      %p953 = scmp.ne.s32.totalorder %s948, %s950
      %p954 = scmp.eq.s32.totalorder %s137, 0
      %p955 = por %p953, %p954
      %p956 = scmp.ne.s32.totalorder %s948, %s950
      %p957 = scmp.eq.s32.totalorder %s142, 1
      %p958 = por %p956, %p957
      %p959 = scmp.ne.s32.totalorder %s950, %s951
      %p960 = scmp.eq.s32.totalorder %s142, 0
      %p961 = por %p959, %p960
      %p962 = scmp.ne.s32.totalorder %s950, %s951
      %p963 = scmp.eq.s32.totalorder %s143, 1
      %p964 = por %p962, %p963
      %p966 = scmp.ne.s32.totalorder %s951, %s965
      %p967 = scmp.eq.s32.totalorder %s143, 0
      %p968 = por %p966, %p967
      %s970 = sadd.s32 %s969, 1
      %p973 = scmp.eq.s32.totalorder %s137, 1
      %p974 = scmp.ne.s32.totalorder %s969, %s971
      %p975 = scmp.eq.s32.totalorder %s137, 0
      %p976 = por %p974, %p975
      %p977 = scmp.ne.s32.totalorder %s969, %s971
      %p978 = scmp.eq.s32.totalorder %s142, 1
      %p979 = por %p977, %p978
      %p980 = scmp.ne.s32.totalorder %s971, %s972
      %p981 = scmp.eq.s32.totalorder %s142, 0
      %p982 = por %p980, %p981
      %p983 = scmp.ne.s32.totalorder %s971, %s972
      %p984 = scmp.eq.s32.totalorder %s143, 1
      %p985 = por %p983, %p984
      %p987 = scmp.ne.s32.totalorder %s972, %s986
      %p988 = scmp.eq.s32.totalorder %s143, 0
      %p989 = por %p987, %p988
      %s991 = sadd.s32 %s990, 1
      %p994 = scmp.eq.s32.totalorder %s137, 1
      %p995 = scmp.ne.s32.totalorder %s990, %s992
      %p996 = scmp.eq.s32.totalorder %s137, 0
      %p997 = por %p995, %p996
      %p998 = scmp.ne.s32.totalorder %s990, %s992
      %p999 = scmp.eq.s32.totalorder %s142, 1
      %p1000 = por %p998, %p999
      %p1001 = scmp.ne.s32.totalorder %s992, %s993
      %p1002 = scmp.eq.s32.totalorder %s142, 0
      %p1003 = por %p1001, %p1002
      %p1004 = scmp.ne.s32.totalorder %s992, %s993
      %p1005 = scmp.eq.s32.totalorder %s143, 1
      %p1006 = por %p1004, %p1005
      %p1008 = scmp.ne.s32.totalorder %s993, %s1007
      %p1009 = scmp.eq.s32.totalorder %s143, 0
      %p1010 = por %p1008, %p1009
      %s1012 = sadd.s32 %s1011, 1
      %p1015 = scmp.eq.s32.totalorder %s137, 1
      %p1016 = scmp.ne.s32.totalorder %s1011, %s1013
      %p1017 = scmp.eq.s32.totalorder %s137, 0
      %p1018 = por %p1016, %p1017
      %p1019 = scmp.ne.s32.totalorder %s1011, %s1013
      %p1020 = scmp.eq.s32.totalorder %s142, 1
      %p1021 = por %p1019, %p1020
      %p1022 = scmp.ne.s32.totalorder %s1013, %s1014
      %p1023 = scmp.eq.s32.totalorder %s142, 0
      %p1024 = por %p1022, %p1023
      %p1025 = scmp.ne.s32.totalorder %s1013, %s1014
      %p1026 = scmp.eq.s32.totalorder %s143, 1
      %p1027 = por %p1025, %p1026
      %p1029 = scmp.ne.s32.totalorder %s1014, %s1028
      %p1030 = scmp.eq.s32.totalorder %s143, 0
      %p1031 = por %p1029, %p1030
      %s1033 = sadd.s32 %s1032, 1
      %p1036 = scmp.eq.s32.totalorder %s137, 1
      %p1037 = scmp.ne.s32.totalorder %s1032, %s1034
      %p1038 = scmp.eq.s32.totalorder %s137, 0
      %p1039 = por %p1037, %p1038
      %p1040 = scmp.ne.s32.totalorder %s1032, %s1034
      %p1041 = scmp.eq.s32.totalorder %s142, 1
      %p1042 = por %p1040, %p1041
      %p1043 = scmp.ne.s32.totalorder %s1034, %s1035
      %p1044 = scmp.eq.s32.totalorder %s142, 0
      %p1045 = por %p1043, %p1044
      %p1046 = scmp.ne.s32.totalorder %s1034, %s1035
      %p1047 = scmp.eq.s32.totalorder %s143, 1
      %p1048 = por %p1046, %p1047
      %p1050 = scmp.ne.s32.totalorder %s1035, %s1049
      %p1051 = scmp.eq.s32.totalorder %s143, 0
      %p1052 = por %p1050, %p1051
      %s1054 = sadd.s32 %s1053, 1
      %p1057 = scmp.eq.s32.totalorder %s137, 1
      %p1058 = scmp.ne.s32.totalorder %s1053, %s1055
      %p1059 = scmp.eq.s32.totalorder %s137, 0
      %p1060 = por %p1058, %p1059
      %p1061 = scmp.ne.s32.totalorder %s1053, %s1055
      %p1062 = scmp.eq.s32.totalorder %s142, 1
      %p1063 = por %p1061, %p1062
      %p1064 = scmp.ne.s32.totalorder %s1055, %s1056
      %p1065 = scmp.eq.s32.totalorder %s142, 0
      %p1066 = por %p1064, %p1065
      %p1067 = scmp.ne.s32.totalorder %s1055, %s1056
      %p1068 = scmp.eq.s32.totalorder %s143, 1
      %p1069 = por %p1067, %p1068
      %p1071 = scmp.ne.s32.totalorder %s1056, %s1070
      %p1072 = scmp.eq.s32.totalorder %s143, 0
      %p1073 = por %p1071, %p1072
      %s1075 = sadd.s32 %s1074, 1
      %p1078 = scmp.eq.s32.totalorder %s137, 1
      %p1079 = scmp.ne.s32.totalorder %s1074, %s1076
      %p1080 = scmp.eq.s32.totalorder %s137, 0
      %p1081 = por %p1079, %p1080
      %p1082 = scmp.ne.s32.totalorder %s1074, %s1076
      %p1083 = scmp.eq.s32.totalorder %s142, 1
      %p1084 = por %p1082, %p1083
      %p1085 = scmp.ne.s32.totalorder %s1076, %s1077
      %p1086 = scmp.eq.s32.totalorder %s142, 0
      %p1087 = por %p1085, %p1086
      %p1088 = scmp.ne.s32.totalorder %s1076, %s1077
      %p1089 = scmp.eq.s32.totalorder %s143, 1
      %p1090 = por %p1088, %p1089
      %p1092 = scmp.ne.s32.totalorder %s1077, %s1091
      %p1093 = scmp.eq.s32.totalorder %s143, 0
      %p1094 = por %p1092, %p1093
      %s1096 = sadd.s32 %s1095, 1
      %p1099 = scmp.eq.s32.totalorder %s137, 1
      %p1100 = scmp.ne.s32.totalorder %s1095, %s1097
      %p1101 = scmp.eq.s32.totalorder %s137, 0
      %p1102 = por %p1100, %p1101
      %p1103 = scmp.ne.s32.totalorder %s1095, %s1097
      %p1104 = scmp.eq.s32.totalorder %s142, 1
      %p1105 = por %p1103, %p1104
      %p1106 = scmp.ne.s32.totalorder %s1097, %s1098
      %p1107 = scmp.eq.s32.totalorder %s142, 0
      %p1108 = por %p1106, %p1107
      %p1109 = scmp.ne.s32.totalorder %s1097, %s1098
      %p1110 = scmp.eq.s32.totalorder %s143, 1
      %p1111 = por %p1109, %p1110
      %p1113 = scmp.ne.s32.totalorder %s1098, %s1112
      %p1114 = scmp.eq.s32.totalorder %s143, 0
      %p1115 = por %p1113, %p1114
      %s1117 = sadd.s32 %s1116, 1
      %p1120 = scmp.eq.s32.totalorder %s137, 1
      %p1121 = scmp.ne.s32.totalorder %s1116, %s1118
      %p1122 = scmp.eq.s32.totalorder %s137, 0
      %p1123 = por %p1121, %p1122
      %p1124 = scmp.ne.s32.totalorder %s1116, %s1118
      %p1125 = scmp.eq.s32.totalorder %s142, 1
      %p1126 = por %p1124, %p1125
      %p1127 = scmp.ne.s32.totalorder %s1118, %s1119
      %p1128 = scmp.eq.s32.totalorder %s142, 0
      %p1129 = por %p1127, %p1128
      %p1130 = scmp.ne.s32.totalorder %s1118, %s1119
      %p1131 = scmp.eq.s32.totalorder %s143, 1
      %p1132 = por %p1130, %p1131
      %p1134 = scmp.ne.s32.totalorder %s1119, %s1133
      %p1135 = scmp.eq.s32.totalorder %s143, 0
      %p1136 = por %p1134, %p1135
      %s1138 = sadd.s32 %s1137, 1
      %p1141 = scmp.eq.s32.totalorder %s137, 1
      %p1142 = scmp.ne.s32.totalorder %s1137, %s1139
      %p1143 = scmp.eq.s32.totalorder %s137, 0
      %p1144 = por %p1142, %p1143
      %p1145 = scmp.ne.s32.totalorder %s1137, %s1139
      %p1146 = scmp.eq.s32.totalorder %s142, 1
      %p1147 = por %p1145, %p1146
      %p1148 = scmp.ne.s32.totalorder %s1139, %s1140
      %p1149 = scmp.eq.s32.totalorder %s142, 0
      %p1150 = por %p1148, %p1149
      %p1151 = scmp.ne.s32.totalorder %s1139, %s1140
      %p1152 = scmp.eq.s32.totalorder %s143, 1
      %p1153 = por %p1151, %p1152
      %p1155 = scmp.ne.s32.totalorder %s1140, %s1154
      %p1156 = scmp.eq.s32.totalorder %s143, 0
      %p1157 = por %p1155, %p1156
      %s1159 = sadd.s32 %s1158, 1
      %p1162 = scmp.eq.s32.totalorder %s137, 1
      %p1163 = scmp.ne.s32.totalorder %s1158, %s1160
      %p1164 = scmp.eq.s32.totalorder %s137, 0
      %p1165 = por %p1163, %p1164
      %p1166 = scmp.ne.s32.totalorder %s1158, %s1160
      %p1167 = scmp.eq.s32.totalorder %s142, 1
      %p1168 = por %p1166, %p1167
      %p1169 = scmp.ne.s32.totalorder %s1160, %s1161
      %p1170 = scmp.eq.s32.totalorder %s142, 0
      %p1171 = por %p1169, %p1170
      %p1172 = scmp.ne.s32.totalorder %s1160, %s1161
      %p1173 = scmp.eq.s32.totalorder %s143, 1
      %p1174 = por %p1172, %p1173
      %p1176 = scmp.ne.s32.totalorder %s1161, %s1175
      %p1177 = scmp.eq.s32.totalorder %s143, 0
      %p1178 = por %p1176, %p1177
      %s1180 = sadd.s32 %s1179, 1
      %p1183 = scmp.eq.s32.totalorder %s137, 1
      %p1184 = scmp.ne.s32.totalorder %s1179, %s1181
      %p1185 = scmp.eq.s32.totalorder %s137, 0
      %p1186 = por %p1184, %p1185
      %p1187 = scmp.ne.s32.totalorder %s1179, %s1181
      %p1188 = scmp.eq.s32.totalorder %s142, 1
      %p1189 = por %p1187, %p1188
      %p1190 = scmp.ne.s32.totalorder %s1181, %s1182
      %p1191 = scmp.eq.s32.totalorder %s142, 0
      %p1192 = por %p1190, %p1191
      %p1193 = scmp.ne.s32.totalorder %s1181, %s1182
      %p1194 = scmp.eq.s32.totalorder %s143, 1
      %p1195 = por %p1193, %p1194
      %p1197 = scmp.ne.s32.totalorder %s1182, %s1196
      %p1198 = scmp.eq.s32.totalorder %s143, 0
      %p1199 = por %p1197, %p1198
      %s1201 = sadd.s32 %s1200, 1
      %p1204 = scmp.eq.s32.totalorder %s137, 1
      %p1205 = scmp.ne.s32.totalorder %s1200, %s1202
      %p1206 = scmp.eq.s32.totalorder %s137, 0
      %p1207 = por %p1205, %p1206
      %p1208 = scmp.ne.s32.totalorder %s1200, %s1202
      %p1209 = scmp.eq.s32.totalorder %s142, 1
      %p1210 = por %p1208, %p1209
      %p1211 = scmp.ne.s32.totalorder %s1202, %s1203
      %p1212 = scmp.eq.s32.totalorder %s142, 0
      %p1213 = por %p1211, %p1212
      %p1214 = scmp.ne.s32.totalorder %s1202, %s1203
      %p1215 = scmp.eq.s32.totalorder %s143, 1
      %p1216 = por %p1214, %p1215
      %p1218 = scmp.ne.s32.totalorder %s1203, %s1217
      %p1219 = scmp.eq.s32.totalorder %s143, 0
      %p1220 = por %p1218, %p1219
      %s1222 = sadd.s32 %s1221, 1
      %p1225 = scmp.eq.s32.totalorder %s137, 1
      %p1226 = scmp.ne.s32.totalorder %s1221, %s1223
      %p1227 = scmp.eq.s32.totalorder %s137, 0
      %p1228 = por %p1226, %p1227
      %p1229 = scmp.ne.s32.totalorder %s1221, %s1223
      %p1230 = scmp.eq.s32.totalorder %s142, 1
      %p1231 = por %p1229, %p1230
      %p1232 = scmp.ne.s32.totalorder %s1223, %s1224
      %p1233 = scmp.eq.s32.totalorder %s142, 0
      %p1234 = por %p1232, %p1233
      %p1235 = scmp.ne.s32.totalorder %s1223, %s1224
      %p1236 = scmp.eq.s32.totalorder %s143, 1
      %p1237 = por %p1235, %p1236
      %p1239 = scmp.ne.s32.totalorder %s1224, %s1238
      %p1240 = scmp.eq.s32.totalorder %s143, 0
      %p1241 = por %p1239, %p1240
      %s1243 = sadd.s32 %s1242, 1
      %p1246 = scmp.eq.s32.totalorder %s137, 1
      %p1247 = scmp.ne.s32.totalorder %s1242, %s1244
      %p1248 = scmp.eq.s32.totalorder %s137, 0
      %p1249 = por %p1247, %p1248
      %p1250 = scmp.ne.s32.totalorder %s1242, %s1244
      %p1251 = scmp.eq.s32.totalorder %s142, 1
      %p1252 = por %p1250, %p1251
      %p1253 = scmp.ne.s32.totalorder %s1244, %s1245
      %p1254 = scmp.eq.s32.totalorder %s142, 0
      %p1255 = por %p1253, %p1254
      %p1256 = scmp.ne.s32.totalorder %s1244, %s1245
      %p1257 = scmp.eq.s32.totalorder %s143, 1
      %p1258 = por %p1256, %p1257
      %p1260 = scmp.ne.s32.totalorder %s1245, %s1259
      %p1261 = scmp.eq.s32.totalorder %s143, 0
      %p1262 = por %p1260, %p1261
      %s1264 = sadd.s32 %s1263, 1
      %p1267 = scmp.eq.s32.totalorder %s137, 1
      %p1268 = scmp.ne.s32.totalorder %s1263, %s1265
      %p1269 = scmp.eq.s32.totalorder %s137, 0
      %p1270 = por %p1268, %p1269
      %p1271 = scmp.ne.s32.totalorder %s1263, %s1265
      %p1272 = scmp.eq.s32.totalorder %s142, 1
      %p1273 = por %p1271, %p1272
      %p1274 = scmp.ne.s32.totalorder %s1265, %s1266
      %p1275 = scmp.eq.s32.totalorder %s142, 0
      %p1276 = por %p1274, %p1275
      %p1277 = scmp.ne.s32.totalorder %s1265, %s1266
      %p1278 = scmp.eq.s32.totalorder %s143, 1
      %p1279 = por %p1277, %p1278
      %p1281 = scmp.ne.s32.totalorder %s1266, %s1280
      %p1282 = scmp.eq.s32.totalorder %s143, 0
      %p1283 = por %p1281, %p1282
      %s1285 = sadd.s32 %s1284, 1
      %p1288 = scmp.eq.s32.totalorder %s137, 1
      %p1289 = scmp.ne.s32.totalorder %s1284, %s1286
      %p1290 = scmp.eq.s32.totalorder %s137, 0
      %p1291 = por %p1289, %p1290
      %p1292 = scmp.ne.s32.totalorder %s1284, %s1286
      %p1293 = scmp.eq.s32.totalorder %s142, 1
      %p1294 = por %p1292, %p1293
      %p1295 = scmp.ne.s32.totalorder %s1286, %s1287
      %p1296 = scmp.eq.s32.totalorder %s142, 0
      %p1297 = por %p1295, %p1296
      %p1298 = scmp.ne.s32.totalorder %s1286, %s1287
      %p1299 = scmp.eq.s32.totalorder %s143, 1
      %p1300 = por %p1298, %p1299
      %p1302 = scmp.ne.s32.totalorder %s1287, %s1301
      %p1303 = scmp.eq.s32.totalorder %s143, 0
      %p1304 = por %p1302, %p1303
      %s1306 = sadd.s32 %s1305, 1
      %p1309 = scmp.eq.s32.totalorder %s137, 1
      %p1310 = scmp.ne.s32.totalorder %s1305, %s1307
      %p1311 = scmp.eq.s32.totalorder %s137, 0
      %p1312 = por %p1310, %p1311
      %p1313 = scmp.ne.s32.totalorder %s1305, %s1307
      %p1314 = scmp.eq.s32.totalorder %s142, 1
      %p1315 = por %p1313, %p1314
      %p1316 = scmp.ne.s32.totalorder %s1307, %s1308
      %p1317 = scmp.eq.s32.totalorder %s142, 0
      %p1318 = por %p1316, %p1317
      %p1319 = scmp.ne.s32.totalorder %s1307, %s1308
      %p1320 = scmp.eq.s32.totalorder %s143, 1
      %p1321 = por %p1319, %p1320
      %p1323 = scmp.ne.s32.totalorder %s1308, %s1322
      %p1324 = scmp.eq.s32.totalorder %s143, 0
      %p1325 = por %p1323, %p1324
      %s1327 = sadd.s32 %s1326, 1
      %p1330 = scmp.eq.s32.totalorder %s137, 1
      %p1331 = scmp.ne.s32.totalorder %s1326, %s1328
      %p1332 = scmp.eq.s32.totalorder %s137, 0
      %p1333 = por %p1331, %p1332
      %p1334 = scmp.ne.s32.totalorder %s1326, %s1328
      %p1335 = scmp.eq.s32.totalorder %s142, 1
      %p1336 = por %p1334, %p1335
      %p1337 = scmp.ne.s32.totalorder %s1328, %s1329
      %p1338 = scmp.eq.s32.totalorder %s142, 0
      %p1339 = por %p1337, %p1338
      %p1340 = scmp.ne.s32.totalorder %s1328, %s1329
      %p1341 = scmp.eq.s32.totalorder %s143, 1
      %p1342 = por %p1340, %p1341
      %p1344 = scmp.ne.s32.totalorder %s1329, %s1343
      %p1345 = scmp.eq.s32.totalorder %s143, 0
      %p1346 = por %p1344, %p1345
      %s1348 = sadd.s32 %s1347, 1
      %p1351 = scmp.eq.s32.totalorder %s137, 1
      %p1352 = scmp.ne.s32.totalorder %s1347, %s1349
      %p1353 = scmp.eq.s32.totalorder %s137, 0
      %p1354 = por %p1352, %p1353
      %p1355 = scmp.ne.s32.totalorder %s1347, %s1349
      %p1356 = scmp.eq.s32.totalorder %s142, 1
      %p1357 = por %p1355, %p1356
      %p1358 = scmp.ne.s32.totalorder %s1349, %s1350
      %p1359 = scmp.eq.s32.totalorder %s142, 0
      %p1360 = por %p1358, %p1359
      %p1361 = scmp.ne.s32.totalorder %s1349, %s1350
      %p1362 = scmp.eq.s32.totalorder %s143, 1
      %p1363 = por %p1361, %p1362
      %p1365 = scmp.ne.s32.totalorder %s1350, %s1364
      %p1366 = scmp.eq.s32.totalorder %s143, 0
      %p1367 = por %p1365, %p1366
      %s1369 = sadd.s32 %s1368, 1
      %p1372 = scmp.eq.s32.totalorder %s137, 1
      %p1373 = scmp.ne.s32.totalorder %s1368, %s1370
      %p1374 = scmp.eq.s32.totalorder %s137, 0
      %p1375 = por %p1373, %p1374
      %p1376 = scmp.ne.s32.totalorder %s1368, %s1370
      %p1377 = scmp.eq.s32.totalorder %s142, 1
      %p1378 = por %p1376, %p1377
      %p1379 = scmp.ne.s32.totalorder %s1370, %s1371
      %p1380 = scmp.eq.s32.totalorder %s142, 0
      %p1381 = por %p1379, %p1380
      %p1382 = scmp.ne.s32.totalorder %s1370, %s1371
      %p1383 = scmp.eq.s32.totalorder %s143, 1
      %p1384 = por %p1382, %p1383
      %p1386 = scmp.ne.s32.totalorder %s1371, %s1385
      %p1387 = scmp.eq.s32.totalorder %s143, 0
      %p1388 = por %p1386, %p1387
      %s1389 = ssub.s32 %s137, %s144
      %p1390 = scmp.eq.s32.totalorder %s1389, 0
      %s1392 = sadd.s32 %s1391, 1
      %s1393 = scalar_select %p1390, %s1391, %s1392
      %p1396 = pneg %p1390
      %p1397 = scmp.eq.s32.totalorder %s137, 1
      %p1398 = por %p1396, %p1397
      %p1399 = scmp.ne.s32.totalorder %s1391, %s1394
      %p1400 = scmp.eq.s32.totalorder %s137, 0
      %p1401 = por %p1399, %p1400
      %p1402 = scmp.ne.s32.totalorder %s1391, %s1394
      %p1403 = scmp.eq.s32.totalorder %s142, 1
      %p1404 = por %p1402, %p1403
      %p1405 = scmp.ne.s32.totalorder %s1394, %s1395
      %p1406 = scmp.eq.s32.totalorder %s142, 0
      %p1407 = por %p1405, %p1406
      %p1408 = scmp.ne.s32.totalorder %s1394, %s1395
      %p1409 = scmp.eq.s32.totalorder %s143, 1
      %p1410 = por %p1408, %p1409
      %p1412 = scmp.ne.s32.totalorder %s1395, %s1411
      %p1413 = scmp.eq.s32.totalorder %s143, 0
      %p1414 = por %p1412, %p1413
      %p1415 = scmp.le.s32.totalorder 1, %s137
      %p1416 = scmp.lt.s32.totalorder %s137, 3
      %p1417 = pnand %p1415, %p1416
      %p1418 = pneg %p1417
      // Predicated region
      $region9: #{proposed_model_forward.1} parent=5 // pred_check
        _
      $region10: #{proposed_model_forward.1} parent=5 // pred_check_branch
        %1420 = sbr.rel (%p1417) target = $region12
      $region11: #{proposed_model_forward.1} parent=5 // pred_region
        %s1421 = ssub.s32 %s137, 1
        // Predicated region
        $region13: #{proposed_model_forward.1} parent=11 // pred_check
          %p1422 = pneg %p184
        $region14: #{proposed_model_forward.1} parent=11 // pred_check_branch
          %1424 = sbr.rel (%p1422) target = $region16
        $region15: #{proposed_model_forward.1} parent=11 // pred_region
          _
        $region16: #{proposed_model_forward.1} parent=11 // pred_fallthru
          _
        // Predicated region
        $region17: #{proposed_model_forward.1} parent=11 // pred_check
          %p1425 = pneg %p205
        $region18: #{proposed_model_forward.1} parent=11 // pred_check_branch
          %1427 = sbr.rel (%p1425) target = $region20
        $region19: #{proposed_model_forward.1} parent=11 // pred_region
          _
        $region20: #{proposed_model_forward.1} parent=11 // pred_fallthru
          _
        // Predicated region
        $region21: #{proposed_model_forward.1} parent=11 // pred_check
          %p1428 = pneg %p226
        $region22: #{proposed_model_forward.1} parent=11 // pred_check_branch
          %1430 = sbr.rel (%p1428) target = $region24
        $region23: #{proposed_model_forward.1} parent=11 // pred_region
          _
        $region24: #{proposed_model_forward.1} parent=11 // pred_fallthru
          _
        // Predicated region
        $region25: #{proposed_model_forward.1} parent=11 // pred_check
          %p1431 = pneg %p247
        $region26: #{proposed_model_forward.1} parent=11 // pred_check_branch
          %1433 = sbr.rel (%p1431) target = $region28
        $region27: #{proposed_model_forward.1} parent=11 // pred_region
          _
        $region28: #{proposed_model_forward.1} parent=11 // pred_fallthru
          _
        // Predicated region
        $region29: #{proposed_model_forward.1} parent=11 // pred_check
          %p1434 = pneg %p268
        $region30: #{proposed_model_forward.1} parent=11 // pred_check_branch
          %1436 = sbr.rel (%p1434) target = $region32
        $region31: #{proposed_model_forward.1} parent=11 // pred_region
          _
        $region32: #{proposed_model_forward.1} parent=11 // pred_fallthru
          _
        // Predicated region
        $region33: #{proposed_model_forward.1} parent=11 // pred_check
          %p1437 = pneg %p289
        $region34: #{proposed_model_forward.1} parent=11 // pred_check_branch
          %1439 = sbr.rel (%p1437) target = $region36
        $region35: #{proposed_model_forward.1} parent=11 // pred_region
          _
        $region36: #{proposed_model_forward.1} parent=11 // pred_fallthru
          _
        // Predicated region
        $region37: #{proposed_model_forward.1} parent=11 // pred_check
          %p1440 = pneg %p310
        $region38: #{proposed_model_forward.1} parent=11 // pred_check_branch
          %1442 = sbr.rel (%p1440) target = $region40
        $region39: #{proposed_model_forward.1} parent=11 // pred_region
          _
        $region40: #{proposed_model_forward.1} parent=11 // pred_fallthru
          _
        // Predicated region
        $region41: #{proposed_model_forward.1} parent=11 // pred_check
          %p1443 = pneg %p331
        $region42: #{proposed_model_forward.1} parent=11 // pred_check_branch
          %1445 = sbr.rel (%p1443) target = $region44
        $region43: #{proposed_model_forward.1} parent=11 // pred_region
          _
        $region44: #{proposed_model_forward.1} parent=11 // pred_fallthru
          _
        // Predicated region
        $region45: #{proposed_model_forward.1} parent=11 // pred_check
          %p1446 = pneg %p352
        $region46: #{proposed_model_forward.1} parent=11 // pred_check_branch
          %1448 = sbr.rel (%p1446) target = $region48
        $region47: #{proposed_model_forward.1} parent=11 // pred_region
          _
        $region48: #{proposed_model_forward.1} parent=11 // pred_fallthru
          _
        // Predicated region
        $region49: #{proposed_model_forward.1} parent=11 // pred_check
          %p1449 = pneg %p373
        $region50: #{proposed_model_forward.1} parent=11 // pred_check_branch
          %1451 = sbr.rel (%p1449) target = $region52
        $region51: #{proposed_model_forward.1} parent=11 // pred_region
          _
        $region52: #{proposed_model_forward.1} parent=11 // pred_fallthru
          _
        // Predicated region
        $region53: #{proposed_model_forward.1} parent=11 // pred_check
          %p1452 = pneg %p394
        $region54: #{proposed_model_forward.1} parent=11 // pred_check_branch
          %1454 = sbr.rel (%p1452) target = $region56
        $region55: #{proposed_model_forward.1} parent=11 // pred_region
          _
        $region56: #{proposed_model_forward.1} parent=11 // pred_fallthru
          _
        // Predicated region
        $region57: #{proposed_model_forward.1} parent=11 // pred_check
          %p1455 = pneg %p415
        $region58: #{proposed_model_forward.1} parent=11 // pred_check_branch
          %1457 = sbr.rel (%p1455) target = $region60
        $region59: #{proposed_model_forward.1} parent=11 // pred_region
          _
        $region60: #{proposed_model_forward.1} parent=11 // pred_fallthru
          _
        // Predicated region
        $region61: #{proposed_model_forward.1} parent=11 // pred_check
          %p1458 = pneg %p436
        $region62: #{proposed_model_forward.1} parent=11 // pred_check_branch
          %1460 = sbr.rel (%p1458) target = $region64
        $region63: #{proposed_model_forward.1} parent=11 // pred_region
          _
        $region64: #{proposed_model_forward.1} parent=11 // pred_fallthru
          _
        // Predicated region
        $region65: #{proposed_model_forward.1} parent=11 // pred_check
          %p1461 = pneg %p457
        $region66: #{proposed_model_forward.1} parent=11 // pred_check_branch
          %1463 = sbr.rel (%p1461) target = $region68
        $region67: #{proposed_model_forward.1} parent=11 // pred_region
          _
        $region68: #{proposed_model_forward.1} parent=11 // pred_fallthru
          _
        // Predicated region
        $region69: #{proposed_model_forward.1} parent=11 // pred_check
          %p1464 = pneg %p478
        $region70: #{proposed_model_forward.1} parent=11 // pred_check_branch
          %1466 = sbr.rel (%p1464) target = $region72
        $region71: #{proposed_model_forward.1} parent=11 // pred_region
          _
        $region72: #{proposed_model_forward.1} parent=11 // pred_fallthru
          _
        // Predicated region
        $region73: #{proposed_model_forward.1} parent=11 // pred_check
          %p1467 = pneg %p499
        $region74: #{proposed_model_forward.1} parent=11 // pred_check_branch
          %1469 = sbr.rel (%p1467) target = $region76
        $region75: #{proposed_model_forward.1} parent=11 // pred_region
          _
        $region76: #{proposed_model_forward.1} parent=11 // pred_fallthru
          _
        // Predicated region
        $region77: #{proposed_model_forward.1} parent=11 // pred_check
          %p1470 = pneg %p520
        $region78: #{proposed_model_forward.1} parent=11 // pred_check_branch
          %1472 = sbr.rel (%p1470) target = $region80
        $region79: #{proposed_model_forward.1} parent=11 // pred_region
          _
        $region80: #{proposed_model_forward.1} parent=11 // pred_fallthru
          _
        // Predicated region
        $region81: #{proposed_model_forward.1} parent=11 // pred_check
          %p1473 = pneg %p541
        $region82: #{proposed_model_forward.1} parent=11 // pred_check_branch
          %1475 = sbr.rel (%p1473) target = $region84
        $region83: #{proposed_model_forward.1} parent=11 // pred_region
          _
        $region84: #{proposed_model_forward.1} parent=11 // pred_fallthru
          _
        // Predicated region
        $region85: #{proposed_model_forward.1} parent=11 // pred_check
          %p1476 = pneg %p562
        $region86: #{proposed_model_forward.1} parent=11 // pred_check_branch
          %1478 = sbr.rel (%p1476) target = $region88
        $region87: #{proposed_model_forward.1} parent=11 // pred_region
          _
        $region88: #{proposed_model_forward.1} parent=11 // pred_fallthru
          _
        // Predicated region
        $region89: #{proposed_model_forward.1} parent=11 // pred_check
          %p1479 = pneg %p583
        $region90: #{proposed_model_forward.1} parent=11 // pred_check_branch
          %1481 = sbr.rel (%p1479) target = $region92
        $region91: #{proposed_model_forward.1} parent=11 // pred_region
          _
        $region92: #{proposed_model_forward.1} parent=11 // pred_fallthru
          _
        // Predicated region
        $region93: #{proposed_model_forward.1} parent=11 // pred_check
          %p1482 = pneg %p604
        $region94: #{proposed_model_forward.1} parent=11 // pred_check_branch
          %1484 = sbr.rel (%p1482) target = $region96
        $region95: #{proposed_model_forward.1} parent=11 // pred_region
          _
        $region96: #{proposed_model_forward.1} parent=11 // pred_fallthru
          _
        // Predicated region
        $region97: #{proposed_model_forward.1} parent=11 // pred_check
          %p1485 = pneg %p625
        $region98: #{proposed_model_forward.1} parent=11 // pred_check_branch
          %1487 = sbr.rel (%p1485) target = $region100
        $region99: #{proposed_model_forward.1} parent=11 // pred_region
          _
        $region100: #{proposed_model_forward.1} parent=11 // pred_fallthru
          _
        // Predicated region
        $region101: #{proposed_model_forward.1} parent=11 // pred_check
          %p1488 = pneg %p646
        $region102: #{proposed_model_forward.1} parent=11 // pred_check_branch
          %1490 = sbr.rel (%p1488) target = $region104
        $region103: #{proposed_model_forward.1} parent=11 // pred_region
          _
        $region104: #{proposed_model_forward.1} parent=11 // pred_fallthru
          _
        // Predicated region
        $region105: #{proposed_model_forward.1} parent=11 // pred_check
          %p1491 = pneg %p667
        $region106: #{proposed_model_forward.1} parent=11 // pred_check_branch
          %1493 = sbr.rel (%p1491) target = $region108
        $region107: #{proposed_model_forward.1} parent=11 // pred_region
          _
        $region108: #{proposed_model_forward.1} parent=11 // pred_fallthru
          _
        // Predicated region
        $region109: #{proposed_model_forward.1} parent=11 // pred_check
          %p1494 = pneg %p688
        $region110: #{proposed_model_forward.1} parent=11 // pred_check_branch
          %1496 = sbr.rel (%p1494) target = $region112
        $region111: #{proposed_model_forward.1} parent=11 // pred_region
          _
        $region112: #{proposed_model_forward.1} parent=11 // pred_fallthru
          _
        // Predicated region
        $region113: #{proposed_model_forward.1} parent=11 // pred_check
          %p1497 = pneg %p709
        $region114: #{proposed_model_forward.1} parent=11 // pred_check_branch
          %1499 = sbr.rel (%p1497) target = $region116
        $region115: #{proposed_model_forward.1} parent=11 // pred_region
          _
        $region116: #{proposed_model_forward.1} parent=11 // pred_fallthru
          _
        // Predicated region
        $region117: #{proposed_model_forward.1} parent=11 // pred_check
          %p1500 = pneg %p730
        $region118: #{proposed_model_forward.1} parent=11 // pred_check_branch
          %1502 = sbr.rel (%p1500) target = $region120
        $region119: #{proposed_model_forward.1} parent=11 // pred_region
          _
        $region120: #{proposed_model_forward.1} parent=11 // pred_fallthru
          _
        // Predicated region
        $region121: #{proposed_model_forward.1} parent=11 // pred_check
          %p1503 = pneg %p751
        $region122: #{proposed_model_forward.1} parent=11 // pred_check_branch
          %1505 = sbr.rel (%p1503) target = $region124
        $region123: #{proposed_model_forward.1} parent=11 // pred_region
          _
        $region124: #{proposed_model_forward.1} parent=11 // pred_fallthru
          _
        // Predicated region
        $region125: #{proposed_model_forward.1} parent=11 // pred_check
          %p1506 = pneg %p772
        $region126: #{proposed_model_forward.1} parent=11 // pred_check_branch
          %1508 = sbr.rel (%p1506) target = $region128
        $region127: #{proposed_model_forward.1} parent=11 // pred_region
          _
        $region128: #{proposed_model_forward.1} parent=11 // pred_fallthru
          _
        // Predicated region
        $region129: #{proposed_model_forward.1} parent=11 // pred_check
          %p1509 = pneg %p793
        $region130: #{proposed_model_forward.1} parent=11 // pred_check_branch
          %1511 = sbr.rel (%p1509) target = $region132
        $region131: #{proposed_model_forward.1} parent=11 // pred_region
          _
        $region132: #{proposed_model_forward.1} parent=11 // pred_fallthru
          _
        // Predicated region
        $region133: #{proposed_model_forward.1} parent=11 // pred_check
          %p1512 = pneg %p814
        $region134: #{proposed_model_forward.1} parent=11 // pred_check_branch
          %1514 = sbr.rel (%p1512) target = $region136
        $region135: #{proposed_model_forward.1} parent=11 // pred_region
          _
        $region136: #{proposed_model_forward.1} parent=11 // pred_fallthru
          _
        // Predicated region
        $region137: #{proposed_model_forward.1} parent=11 // pred_check
          %p1515 = pneg %p835
        $region138: #{proposed_model_forward.1} parent=11 // pred_check_branch
          %1517 = sbr.rel (%p1515) target = $region140
        $region139: #{proposed_model_forward.1} parent=11 // pred_region
          _
        $region140: #{proposed_model_forward.1} parent=11 // pred_fallthru
          _
        // Predicated region
        $region141: #{proposed_model_forward.1} parent=11 // pred_check
          %p1518 = pneg %p856
        $region142: #{proposed_model_forward.1} parent=11 // pred_check_branch
          %1520 = sbr.rel (%p1518) target = $region144
        $region143: #{proposed_model_forward.1} parent=11 // pred_region
          _
        $region144: #{proposed_model_forward.1} parent=11 // pred_fallthru
          _
        // Predicated region
        $region145: #{proposed_model_forward.1} parent=11 // pred_check
          %p1521 = pneg %p877
        $region146: #{proposed_model_forward.1} parent=11 // pred_check_branch
          %1523 = sbr.rel (%p1521) target = $region148
        $region147: #{proposed_model_forward.1} parent=11 // pred_region
          _
        $region148: #{proposed_model_forward.1} parent=11 // pred_fallthru
          _
        // Predicated region
        $region149: #{proposed_model_forward.1} parent=11 // pred_check
          %p1524 = pneg %p898
        $region150: #{proposed_model_forward.1} parent=11 // pred_check_branch
          %1526 = sbr.rel (%p1524) target = $region152
        $region151: #{proposed_model_forward.1} parent=11 // pred_region
          _
        $region152: #{proposed_model_forward.1} parent=11 // pred_fallthru
          _
        // Predicated region
        $region153: #{proposed_model_forward.1} parent=11 // pred_check
          %p1527 = pneg %p919
        $region154: #{proposed_model_forward.1} parent=11 // pred_check_branch
          %1529 = sbr.rel (%p1527) target = $region156
        $region155: #{proposed_model_forward.1} parent=11 // pred_region
          %1531 = vsyncadd [#allocation3], 0
          %s1533 = sshll.u32 %s73, 4
          %s1534 = int_to_ptr.hbm [resolvable:$true] %s1533
          %s1535 = sshll.u32 [#allocation2], 4
          %s1536 = int_to_ptr.vmem [resolvable:$true] %s1535
          %1538 = dma.hbm_to_vmem [thread:$0]  %s1534, 16, %s1536, [#allocation3]
        $region156: #{proposed_model_forward.1} parent=11 // pred_fallthru
          _
        // Predicated region
        $region157: #{proposed_model_forward.1} parent=11 // pred_check
          %p1539 = pneg %p940
        $region158: #{proposed_model_forward.1} parent=11 // pred_check_branch
          %1541 = sbr.rel (%p1539) target = $region160
        $region159: #{proposed_model_forward.1} parent=11 // pred_region
          %1543 = vsyncadd [#allocation6], 0
          %s1545 = sshll.u32 %s75, 4
          %s1546 = int_to_ptr.hbm [resolvable:$true] %s1545
          %s1547 = sshll.u32 [#allocation5], 4
          %s1548 = int_to_ptr.vmem [resolvable:$true] %s1547
          %1550 = dma.hbm_to_vmem [thread:$0]  %s1546, 16, %s1548, [#allocation6]
        $region160: #{proposed_model_forward.1} parent=11 // pred_fallthru
          _
        // Predicated region
        $region161: #{proposed_model_forward.1} parent=11 // pred_check
          %p1551 = pneg %p961
        $region162: #{proposed_model_forward.1} parent=11 // pred_check_branch
          %1553 = sbr.rel (%p1551) target = $region164
        $region163: #{proposed_model_forward.1} parent=11 // pred_region
          %1555 = vsyncadd [#allocation6], 0
          %s1557 = sshll.u32 %s77, 4
          %s1558 = int_to_ptr.hbm [resolvable:$true] %s1557
          %s1559 = sshll.u32 [#allocation7], 4
          %s1560 = int_to_ptr.vmem [resolvable:$true] %s1559
          %1562 = dma.hbm_to_vmem [thread:$0]  %s1558, 16, %s1560, [#allocation6]
        $region164: #{proposed_model_forward.1} parent=11 // pred_fallthru
          _
        // Predicated region
        $region165: #{proposed_model_forward.1} parent=11 // pred_check
          %p1563 = pneg %p982
        $region166: #{proposed_model_forward.1} parent=11 // pred_check_branch
          %1565 = sbr.rel (%p1563) target = $region168
        $region167: #{proposed_model_forward.1} parent=11 // pred_region
          _
        $region168: #{proposed_model_forward.1} parent=11 // pred_fallthru
          _
        // Predicated region
        $region169: #{proposed_model_forward.1} parent=11 // pred_check
          %p1566 = pneg %p1003
        $region170: #{proposed_model_forward.1} parent=11 // pred_check_branch
          %1568 = sbr.rel (%p1566) target = $region172
        $region171: #{proposed_model_forward.1} parent=11 // pred_region
          %1570 = vsyncadd [#allocation9], 0
          %s1572 = sshll.u32 %s81, 4
          %s1573 = int_to_ptr.hbm [resolvable:$true] %s1572
          %s1574 = sshll.u32 [#allocation8], 4
          %s1575 = int_to_ptr.vmem [resolvable:$true] %s1574
          %1577 = dma.hbm_to_vmem [thread:$0]  %s1573, 16, %s1575, [#allocation9]
        $region172: #{proposed_model_forward.1} parent=11 // pred_fallthru
          _
        // Predicated region
        $region173: #{proposed_model_forward.1} parent=11 // pred_check
          %p1578 = pneg %p1024
        $region174: #{proposed_model_forward.1} parent=11 // pred_check_branch
          %1580 = sbr.rel (%p1578) target = $region176
        $region175: #{proposed_model_forward.1} parent=11 // pred_region
          _
        $region176: #{proposed_model_forward.1} parent=11 // pred_fallthru
          _
        // Predicated region
        $region177: #{proposed_model_forward.1} parent=11 // pred_check
          %p1581 = pneg %p1045
        $region178: #{proposed_model_forward.1} parent=11 // pred_check_branch
          %1583 = sbr.rel (%p1581) target = $region180
        $region179: #{proposed_model_forward.1} parent=11 // pred_region
          %1585 = vsyncadd [#allocation9], 0
          %s1587 = sshll.u32 %s85, 4
          %s1588 = int_to_ptr.hbm [resolvable:$true] %s1587
          %s1589 = sshll.u32 [#allocation10], 4
          %s1590 = int_to_ptr.vmem [resolvable:$true] %s1589
          %1592 = dma.hbm_to_vmem [thread:$0]  %s1588, 16, %s1590, [#allocation9]
        $region180: #{proposed_model_forward.1} parent=11 // pred_fallthru
          _
        // Predicated region
        $region181: #{proposed_model_forward.1} parent=11 // pred_check
          %p1593 = pneg %p1066
        $region182: #{proposed_model_forward.1} parent=11 // pred_check_branch
          %1595 = sbr.rel (%p1593) target = $region184
        $region183: #{proposed_model_forward.1} parent=11 // pred_region
          %1597 = vsyncadd [#allocation12], 0
          %s1599 = sshll.u32 %s87, 4
          %s1600 = int_to_ptr.hbm [resolvable:$true] %s1599
          %s1601 = sshll.u32 [#allocation11], 4
          %s1602 = int_to_ptr.vmem [resolvable:$true] %s1601
          %1604 = dma.hbm_to_vmem [thread:$0]  %s1600, 16, %s1602, [#allocation12]
        $region184: #{proposed_model_forward.1} parent=11 // pred_fallthru
          _
        // Predicated region
        $region185: #{proposed_model_forward.1} parent=11 // pred_check
          %p1605 = pneg %p1087
        $region186: #{proposed_model_forward.1} parent=11 // pred_check_branch
          %1607 = sbr.rel (%p1605) target = $region188
        $region187: #{proposed_model_forward.1} parent=11 // pred_region
          %1609 = vsyncadd [#allocation12], 0
          %s1611 = sshll.u32 %s89, 4
          %s1612 = int_to_ptr.hbm [resolvable:$true] %s1611
          %s1613 = sshll.u32 [#allocation13], 4
          %s1614 = int_to_ptr.vmem [resolvable:$true] %s1613
          %1616 = dma.hbm_to_vmem [thread:$0]  %s1612, 16, %s1614, [#allocation12]
        $region188: #{proposed_model_forward.1} parent=11 // pred_fallthru
          _
        // Predicated region
        $region189: #{proposed_model_forward.1} parent=11 // pred_check
          %p1617 = pneg %p1108
        $region190: #{proposed_model_forward.1} parent=11 // pred_check_branch
          %1619 = sbr.rel (%p1617) target = $region192
        $region191: #{proposed_model_forward.1} parent=11 // pred_region
          _
        $region192: #{proposed_model_forward.1} parent=11 // pred_fallthru
          _
        // Predicated region
        $region193: #{proposed_model_forward.1} parent=11 // pred_check
          %p1620 = pneg %p1129
        $region194: #{proposed_model_forward.1} parent=11 // pred_check_branch
          %1622 = sbr.rel (%p1620) target = $region196
        $region195: #{proposed_model_forward.1} parent=11 // pred_region
          %1624 = vsyncadd [#allocation15], 0
          %s1626 = sshll.u32 %s93, 4
          %s1627 = int_to_ptr.hbm [resolvable:$true] %s1626
          %s1628 = sshll.u32 [#allocation14], 4
          %s1629 = int_to_ptr.vmem [resolvable:$true] %s1628
          %1631 = dma.hbm_to_vmem [thread:$0]  %s1627, 16, %s1629, [#allocation15]
        $region196: #{proposed_model_forward.1} parent=11 // pred_fallthru
          _
        // Predicated region
        $region197: #{proposed_model_forward.1} parent=11 // pred_check
          %p1632 = pneg %p1150
        $region198: #{proposed_model_forward.1} parent=11 // pred_check_branch
          %1634 = sbr.rel (%p1632) target = $region200
        $region199: #{proposed_model_forward.1} parent=11 // pred_region
          _
        $region200: #{proposed_model_forward.1} parent=11 // pred_fallthru
          _
        // Predicated region
        $region201: #{proposed_model_forward.1} parent=11 // pred_check
          %p1635 = pneg %p1171
        $region202: #{proposed_model_forward.1} parent=11 // pred_check_branch
          %1637 = sbr.rel (%p1635) target = $region204
        $region203: #{proposed_model_forward.1} parent=11 // pred_region
          %1639 = vsyncadd [#allocation15], 0
          %s1641 = sshll.u32 %s97, 4
          %s1642 = int_to_ptr.hbm [resolvable:$true] %s1641
          %s1643 = sshll.u32 [#allocation16], 4
          %s1644 = int_to_ptr.vmem [resolvable:$true] %s1643
          %1646 = dma.hbm_to_vmem [thread:$0]  %s1642, 16, %s1644, [#allocation15]
        $region204: #{proposed_model_forward.1} parent=11 // pred_fallthru
          _
        // Predicated region
        $region205: #{proposed_model_forward.1} parent=11 // pred_check
          %p1647 = pneg %p1192
        $region206: #{proposed_model_forward.1} parent=11 // pred_check_branch
          %1649 = sbr.rel (%p1647) target = $region208
        $region207: #{proposed_model_forward.1} parent=11 // pred_region
          %1651 = vsyncadd [#allocation18], 0
          %s1653 = sshll.u32 %s99, 4
          %s1654 = int_to_ptr.hbm [resolvable:$true] %s1653
          %s1655 = sshll.u32 [#allocation17], 4
          %s1656 = int_to_ptr.vmem [resolvable:$true] %s1655
          %1658 = dma.hbm_to_vmem [thread:$0]  %s1654, 16, %s1656, [#allocation18]
        $region208: #{proposed_model_forward.1} parent=11 // pred_fallthru
          _
        // Predicated region
        $region209: #{proposed_model_forward.1} parent=11 // pred_check
          %p1659 = pneg %p1213
        $region210: #{proposed_model_forward.1} parent=11 // pred_check_branch
          %1661 = sbr.rel (%p1659) target = $region212
        $region211: #{proposed_model_forward.1} parent=11 // pred_region
          %1663 = vsyncadd [#allocation18], 0
          %s1665 = sshll.u32 %s101, 4
          %s1666 = int_to_ptr.hbm [resolvable:$true] %s1665
          %s1667 = sshll.u32 [#allocation19], 4
          %s1668 = int_to_ptr.vmem [resolvable:$true] %s1667
          %1670 = dma.hbm_to_vmem [thread:$0]  %s1666, 16, %s1668, [#allocation18]
        $region212: #{proposed_model_forward.1} parent=11 // pred_fallthru
          _
        // Predicated region
        $region213: #{proposed_model_forward.1} parent=11 // pred_check
          %p1671 = pneg %p1234
        $region214: #{proposed_model_forward.1} parent=11 // pred_check_branch
          %1673 = sbr.rel (%p1671) target = $region216
        $region215: #{proposed_model_forward.1} parent=11 // pred_region
          _
        $region216: #{proposed_model_forward.1} parent=11 // pred_fallthru
          _
        // Predicated region
        $region217: #{proposed_model_forward.1} parent=11 // pred_check
          %p1674 = pneg %p1255
        $region218: #{proposed_model_forward.1} parent=11 // pred_check_branch
          %1676 = sbr.rel (%p1674) target = $region220
        $region219: #{proposed_model_forward.1} parent=11 // pred_region
          %1678 = vsyncadd [#allocation21], 0
          %s1680 = sshll.u32 %s105, 4
          %s1681 = int_to_ptr.hbm [resolvable:$true] %s1680
          %s1682 = sshll.u32 [#allocation20], 4
          %s1683 = int_to_ptr.vmem [resolvable:$true] %s1682
          %1685 = dma.hbm_to_vmem [thread:$0]  %s1681, 16, %s1683, [#allocation21]
        $region220: #{proposed_model_forward.1} parent=11 // pred_fallthru
          _
        // Predicated region
        $region221: #{proposed_model_forward.1} parent=11 // pred_check
          %p1686 = pneg %p1276
        $region222: #{proposed_model_forward.1} parent=11 // pred_check_branch
          %1688 = sbr.rel (%p1686) target = $region224
        $region223: #{proposed_model_forward.1} parent=11 // pred_region
          _
        $region224: #{proposed_model_forward.1} parent=11 // pred_fallthru
          _
        // Predicated region
        $region225: #{proposed_model_forward.1} parent=11 // pred_check
          %p1689 = pneg %p1297
        $region226: #{proposed_model_forward.1} parent=11 // pred_check_branch
          %1691 = sbr.rel (%p1689) target = $region228
        $region227: #{proposed_model_forward.1} parent=11 // pred_region
          %1693 = vsyncadd [#allocation21], 0
          %s1695 = sshll.u32 %s109, 4
          %s1696 = int_to_ptr.hbm [resolvable:$true] %s1695
          %s1697 = sshll.u32 [#allocation22], 4
          %s1698 = int_to_ptr.vmem [resolvable:$true] %s1697
          %1700 = dma.hbm_to_vmem [thread:$0]  %s1696, 16, %s1698, [#allocation21]
        $region228: #{proposed_model_forward.1} parent=11 // pred_fallthru
          _
        // Predicated region
        $region229: #{proposed_model_forward.1} parent=11 // pred_check
          %p1701 = pneg %p1318
        $region230: #{proposed_model_forward.1} parent=11 // pred_check_branch
          %1703 = sbr.rel (%p1701) target = $region232
        $region231: #{proposed_model_forward.1} parent=11 // pred_region
          %1705 = vsyncadd [#allocation24], 0
          %s1707 = sshll.u32 %s111, 4
          %s1708 = int_to_ptr.hbm [resolvable:$true] %s1707
          %s1709 = sshll.u32 [#allocation23], 4
          %s1710 = int_to_ptr.vmem [resolvable:$true] %s1709
          %1712 = dma.hbm_to_vmem [thread:$0]  %s1708, 16, %s1710, [#allocation24]
        $region232: #{proposed_model_forward.1} parent=11 // pred_fallthru
          _
        // Predicated region
        $region233: #{proposed_model_forward.1} parent=11 // pred_check
          %p1713 = pneg %p1339
        $region234: #{proposed_model_forward.1} parent=11 // pred_check_branch
          %1715 = sbr.rel (%p1713) target = $region236
        $region235: #{proposed_model_forward.1} parent=11 // pred_region
          %1717 = vsyncadd [#allocation24], 0
          %s1719 = sshll.u32 %s113, 4
          %s1720 = int_to_ptr.hbm [resolvable:$true] %s1719
          %s1721 = sshll.u32 [#allocation25], 4
          %s1722 = int_to_ptr.vmem [resolvable:$true] %s1721
          %1724 = dma.hbm_to_vmem [thread:$0]  %s1720, 16, %s1722, [#allocation24]
        $region236: #{proposed_model_forward.1} parent=11 // pred_fallthru
          _
        // Predicated region
        $region237: #{proposed_model_forward.1} parent=11 // pred_check
          %p1725 = pneg %p1360
        $region238: #{proposed_model_forward.1} parent=11 // pred_check_branch
          %1727 = sbr.rel (%p1725) target = $region240
        $region239: #{proposed_model_forward.1} parent=11 // pred_region
          _
        $region240: #{proposed_model_forward.1} parent=11 // pred_fallthru
          _
        // Predicated region
        $region241: #{proposed_model_forward.1} parent=11 // pred_check
          %p1728 = pneg %p1381
        $region242: #{proposed_model_forward.1} parent=11 // pred_check_branch
          %1730 = sbr.rel (%p1728) target = $region244
        $region243: #{proposed_model_forward.1} parent=11 // pred_region
          %1732 = vsyncadd [#allocation27], 0
          %s1734 = sshll.u32 %s117, 4
          %s1735 = int_to_ptr.hbm [resolvable:$true] %s1734
          %s1736 = sshll.u32 [#allocation26], 4
          %s1737 = int_to_ptr.vmem [resolvable:$true] %s1736
          %1739 = dma.hbm_to_vmem [thread:$0]  %s1735, 16, %s1737, [#allocation27]
        $region244: #{proposed_model_forward.1} parent=11 // pred_fallthru
          _
      $region12: #{proposed_model_forward.1} parent=5 // pred_fallthru
        _
      %p1740 = scmp.lt.s32.totalorder %s137, 2
      // Predicated region
      $region245: #{proposed_model_forward.1} parent=5 // pred_check
        %p1741 = pneg %p1740
      $region246: #{proposed_model_forward.1} parent=5 // pred_check_branch
        %1743 = sbr.rel (%p1741) target = $region248
      $region247: #{proposed_model_forward.1} parent=5 // pred_region
        // Predicated region
        $region249: #{proposed_model_forward.1} parent=247 // pred_check
          %p1744 = pneg %p157
        $region250: #{proposed_model_forward.1} parent=247 // pred_check_branch
          %1746 = sbr.rel (%p1744) target = $region252
        $region251: #{proposed_model_forward.1} parent=247 // pred_region
          %p1747 = scmp.lt.s32.totalorder %s137, 1
          %s1748 = scalar_select %p1747, %s137, 1
          %s1749 = smul.addr %s1748, 8
          %s1750 = smul.addr %s1749, 8
          %s1751 = scalar_lea.vmem %s1, %s1750
        $region252: #{proposed_model_forward.1} parent=247 // pred_fallthru
          _
      $region248: #{proposed_model_forward.1} parent=5 // pred_fallthru
        _
      %p1752 = scmp.le.s32.totalorder 1, %s137
      %p1753 = scmp.lt.s32.totalorder %s137, 3
      %p1754 = pnand %p1752, %p1753
      %p1755 = pneg %p1754
      // Predicated region
      $region253: #{proposed_model_forward.1} parent=5 // pred_check
        _
      $region254: #{proposed_model_forward.1} parent=5 // pred_check_branch
        %1757 = sbr.rel (%p1754) target = $region256
      $region255: #{proposed_model_forward.1} parent=5 // pred_region
        %s1758 = ssub.s32 %s137, 1
        // Predicated region
        $region257: #{proposed_model_forward.1} parent=255 // pred_check
          %p1759 = pneg %p919
        $region258: #{proposed_model_forward.1} parent=255 // pred_check_branch
          %1761 = sbr.rel (%p1759) target = $region260
        $region259: #{proposed_model_forward.1} parent=255 // pred_region
          %1763 = dma.done [#allocation3], 16
        $region260: #{proposed_model_forward.1} parent=255 // pred_fallthru
          _
        // Predicated region
        $region261: #{proposed_model_forward.1} parent=255 // pred_check
          %p1764 = pneg %p940
        $region262: #{proposed_model_forward.1} parent=255 // pred_check_branch
          %1766 = sbr.rel (%p1764) target = $region264
        $region263: #{proposed_model_forward.1} parent=255 // pred_region
          %1768 = dma.done [#allocation6], 16
        $region264: #{proposed_model_forward.1} parent=255 // pred_fallthru
          _
        // Predicated region
        $region265: #{proposed_model_forward.1} parent=255 // pred_check
          %p1769 = pneg %p961
        $region266: #{proposed_model_forward.1} parent=255 // pred_check_branch
          %1771 = sbr.rel (%p1769) target = $region268
        $region267: #{proposed_model_forward.1} parent=255 // pred_region
          %1773 = dma.done [#allocation6], 16
        $region268: #{proposed_model_forward.1} parent=255 // pred_fallthru
          _
        // Predicated region
        $region269: #{proposed_model_forward.1} parent=255 // pred_check
          %p1774 = pneg %p1003
        $region270: #{proposed_model_forward.1} parent=255 // pred_check_branch
          %1776 = sbr.rel (%p1774) target = $region272
        $region271: #{proposed_model_forward.1} parent=255 // pred_region
          %1778 = dma.done [#allocation9], 16
        $region272: #{proposed_model_forward.1} parent=255 // pred_fallthru
          _
        // Predicated region
        $region273: #{proposed_model_forward.1} parent=255 // pred_check
          %p1779 = pneg %p1045
        $region274: #{proposed_model_forward.1} parent=255 // pred_check_branch
          %1781 = sbr.rel (%p1779) target = $region276
        $region275: #{proposed_model_forward.1} parent=255 // pred_region
          %1783 = dma.done [#allocation9], 16
        $region276: #{proposed_model_forward.1} parent=255 // pred_fallthru
          _
        // Predicated region
        $region277: #{proposed_model_forward.1} parent=255 // pred_check
          %p1784 = pneg %p1066
        $region278: #{proposed_model_forward.1} parent=255 // pred_check_branch
          %1786 = sbr.rel (%p1784) target = $region280
        $region279: #{proposed_model_forward.1} parent=255 // pred_region
          %1788 = dma.done [#allocation12], 16
        $region280: #{proposed_model_forward.1} parent=255 // pred_fallthru
          _
        // Predicated region
        $region281: #{proposed_model_forward.1} parent=255 // pred_check
          %p1789 = pneg %p1087
        $region282: #{proposed_model_forward.1} parent=255 // pred_check_branch
          %1791 = sbr.rel (%p1789) target = $region284
        $region283: #{proposed_model_forward.1} parent=255 // pred_region
          %1793 = dma.done [#allocation12], 16
        $region284: #{proposed_model_forward.1} parent=255 // pred_fallthru
          _
        // Predicated region
        $region285: #{proposed_model_forward.1} parent=255 // pred_check
          %p1794 = pneg %p1129
        $region286: #{proposed_model_forward.1} parent=255 // pred_check_branch
          %1796 = sbr.rel (%p1794) target = $region288
        $region287: #{proposed_model_forward.1} parent=255 // pred_region
          %1798 = dma.done [#allocation15], 16
        $region288: #{proposed_model_forward.1} parent=255 // pred_fallthru
          _
        // Predicated region
        $region289: #{proposed_model_forward.1} parent=255 // pred_check
          %p1799 = pneg %p1171
        $region290: #{proposed_model_forward.1} parent=255 // pred_check_branch
          %1801 = sbr.rel (%p1799) target = $region292
        $region291: #{proposed_model_forward.1} parent=255 // pred_region
          %1803 = dma.done [#allocation15], 16
        $region292: #{proposed_model_forward.1} parent=255 // pred_fallthru
          _
        // Predicated region
        $region293: #{proposed_model_forward.1} parent=255 // pred_check
          %p1804 = pneg %p1192
        $region294: #{proposed_model_forward.1} parent=255 // pred_check_branch
          %1806 = sbr.rel (%p1804) target = $region296
        $region295: #{proposed_model_forward.1} parent=255 // pred_region
          %1808 = dma.done [#allocation18], 16
        $region296: #{proposed_model_forward.1} parent=255 // pred_fallthru
          _
        // Predicated region
        $region297: #{proposed_model_forward.1} parent=255 // pred_check
          %p1809 = pneg %p1213
        $region298: #{proposed_model_forward.1} parent=255 // pred_check_branch
          %1811 = sbr.rel (%p1809) target = $region300
        $region299: #{proposed_model_forward.1} parent=255 // pred_region
          %1813 = dma.done [#allocation18], 16
        $region300: #{proposed_model_forward.1} parent=255 // pred_fallthru
          _
        // Predicated region
        $region301: #{proposed_model_forward.1} parent=255 // pred_check
          %p1814 = pneg %p1255
        $region302: #{proposed_model_forward.1} parent=255 // pred_check_branch
          %1816 = sbr.rel (%p1814) target = $region304
        $region303: #{proposed_model_forward.1} parent=255 // pred_region
          %1818 = dma.done [#allocation21], 16
        $region304: #{proposed_model_forward.1} parent=255 // pred_fallthru
          _
        // Predicated region
        $region305: #{proposed_model_forward.1} parent=255 // pred_check
          %p1819 = pneg %p1297
        $region306: #{proposed_model_forward.1} parent=255 // pred_check_branch
          %1821 = sbr.rel (%p1819) target = $region308
        $region307: #{proposed_model_forward.1} parent=255 // pred_region
          %1823 = dma.done [#allocation21], 16
        $region308: #{proposed_model_forward.1} parent=255 // pred_fallthru
          _
        // Predicated region
        $region309: #{proposed_model_forward.1} parent=255 // pred_check
          %p1824 = pneg %p1318
        $region310: #{proposed_model_forward.1} parent=255 // pred_check_branch
          %1826 = sbr.rel (%p1824) target = $region312
        $region311: #{proposed_model_forward.1} parent=255 // pred_region
          %1828 = dma.done [#allocation24], 16
        $region312: #{proposed_model_forward.1} parent=255 // pred_fallthru
          _
        // Predicated region
        $region313: #{proposed_model_forward.1} parent=255 // pred_check
          %p1829 = pneg %p1339
        $region314: #{proposed_model_forward.1} parent=255 // pred_check_branch
          %1831 = sbr.rel (%p1829) target = $region316
        $region315: #{proposed_model_forward.1} parent=255 // pred_region
          %1833 = dma.done [#allocation24], 16
        $region316: #{proposed_model_forward.1} parent=255 // pred_fallthru
          _
        // Predicated region
        $region317: #{proposed_model_forward.1} parent=255 // pred_check
          %p1834 = pneg %p1381
        $region318: #{proposed_model_forward.1} parent=255 // pred_check_branch
          %1836 = sbr.rel (%p1834) target = $region320
        $region319: #{proposed_model_forward.1} parent=255 // pred_region
          %1838 = dma.done [#allocation27], 16
        $region320: #{proposed_model_forward.1} parent=255 // pred_fallthru
          _
        %p1839 = scmp.lt.s32.totalorder %s142, 1
        %s1840 = scalar_select %p1839, %s142, 1
        %s1841 = smul.addr %s1840, 8
        %s1842 = smul.addr %s1841, 8
        %s1843 = scalar_lea.vmem %s1, %s1842
        %p1844 = pneg %p163
        %p1845 = pneg %p160
        %p1846 = pneg %p184
        %p1847 = pneg %p181
        %p1848 = pneg %p205
        %p1849 = pneg %p202
        %p1850 = pneg %p226
        %p1851 = pneg %p223
        %p1852 = pneg %p247
        %p1853 = pneg %p244
        %p1854 = pneg %p268
        %p1855 = pneg %p265
        %p1856 = pneg %p289
        %p1857 = pneg %p286
        %p1858 = pneg %p310
        %p1859 = pneg %p307
        %p1860 = pneg %p331
        %p1861 = pneg %p328
        %p1862 = pneg %p352
        %p1863 = pneg %p349
        %p1864 = pneg %p373
        %p1865 = pneg %p370
        %p1866 = pneg %p394
        %p1867 = pneg %p391
        %p1868 = pneg %p415
        %p1869 = pneg %p412
        %p1870 = pneg %p436
        %p1871 = pneg %p433
        %p1872 = pneg %p457
        %p1873 = pneg %p454
        %p1874 = pneg %p478
        %p1875 = pneg %p475
        %p1876 = pneg %p499
        %p1877 = pneg %p496
        %p1878 = pneg %p520
        %p1879 = pneg %p517
        %p1880 = pneg %p541
        %p1881 = pneg %p538
        %p1882 = pneg %p562
        %p1883 = pneg %p559
        %p1884 = pneg %p583
        %p1885 = pneg %p580
        %p1886 = pneg %p604
        %p1887 = pneg %p601
        %p1888 = pneg %p625
        %p1889 = pneg %p622
        %p1890 = pneg %p646
        %p1891 = pneg %p643
        %p1892 = pneg %p667
        %p1893 = pneg %p664
        %p1894 = pneg %p688
        %p1895 = pneg %p685
        %p1896 = pneg %p709
        %p1897 = pneg %p706
        %p1898 = pneg %p730
        %p1899 = pneg %p727
        %p1900 = pneg %p751
        %p1901 = pneg %p748
        %p1902 = pneg %p772
        %p1903 = pneg %p769
        %p1904 = pneg %p793
        %p1905 = pneg %p790
        %p1906 = pneg %p814
        %p1907 = pneg %p811
        %p1908 = pneg %p835
        %p1909 = pneg %p832
        %p1910 = pneg %p856
        %p1911 = pneg %p853
        %p1912 = pneg %p877
        %p1913 = pneg %p874
        %p1914 = pneg %p898
        %p1915 = pneg %p895
        %p1916 = pneg %p919
        %p1917 = pneg %p916
        %p1918 = pneg %p940
        %p1919 = pneg %p937
        %p1920 = pneg %p961
        %p1921 = pneg %p958
        %p1922 = pneg %p982
        %p1923 = pneg %p979
        %p1924 = pneg %p1003
        %p1925 = pneg %p1000
        %p1926 = pneg %p1024
        %p1927 = pneg %p1021
        %p1928 = pneg %p1045
        %p1929 = pneg %p1042
        %p1930 = pneg %p1066
        %p1931 = pneg %p1063
        %p1932 = pneg %p1087
        %p1933 = pneg %p1084
        %p1934 = pneg %p1108
        %p1935 = pneg %p1105
        %p1936 = pneg %p1129
        %p1937 = pneg %p1126
        %p1938 = pneg %p1150
        %p1939 = pneg %p1147
        %p1940 = pneg %p1171
        %p1941 = pneg %p1168
        %p1942 = pneg %p1192
        %p1943 = pneg %p1189
        %p1944 = pneg %p1213
        %p1945 = pneg %p1210
        %p1946 = pneg %p1234
        %p1947 = pneg %p1231
        %p1948 = pneg %p1255
        %p1949 = pneg %p1252
        %p1950 = pneg %p1276
        %p1951 = pneg %p1273
        %p1952 = pneg %p1297
        %p1953 = pneg %p1294
        %p1954 = pneg %p1318
        %p1955 = pneg %p1315
        %p1956 = pneg %p1339
        %p1957 = pneg %p1336
        %p1958 = pneg %p1360
        %p1959 = pneg %p1357
        %p1960 = pneg %p1381
        %p1961 = pneg %p1378
        %p1962 = pneg %p1407
        %p1963 = pneg %p1404
        %s1964 = sand.u32 %s1394, 1
        %s1965 = scalar_lea.sflag [#allocation4], %s1964
        %s1966 = sand.u32 %s1394, 1
        %s1967 = smul.addr %s1966, 8
        %s1968 = scalar_lea.vmem [#allocation28], %s1967
        %p1969 = scmp.lt.s32.totalorder %s142, 1
        %s1970 = scalar_select %p1969, %s142, 1
        %s1971 = smul.addr %s1970, 8
        %s1972 = smul.addr %s1971, 8
        %s1973 = scalar_lea.vmem %s1, %s1972
        %v1975 = vld [vmem:[%s1973] sm:$0xff]
        %v1976 = vld [vmem:[%s1973 + $0x8] sm:$0xff]
        %v1977 = vld [vmem:[%s1973 + $0x10] sm:$0xff]
        %v1978 = vld [vmem:[%s1973 + $0x18] sm:$0xff]
        %v1979 = vld [vmem:[%s1973 + $0x20] sm:$0xff]
        %v1980 = vld [vmem:[%s1973 + $0x28] sm:$0xff]
        %v1981 = vld [vmem:[%s1973 + $0x30] sm:$0xff]
        %v1982 = vld [vmem:[%s1973 + $0x38] sm:$0xff]
        %v1983 = vpack.c.bf16 %v1976, %v1975
        %v1984 = vpack.c.bf16 %v1978, %v1977
        %v1985 = vpack.c.bf16 %v1980, %v1979
        %v1986 = vpack.c.bf16 %v1982, %v1981
        %v1987 = vlaneseq
        %v1988 = vshrl.u32 %v1987, 7
        %v1989 = vadd.s32 %v1988, 8
        %v1990 = vadd.s32 %v1988, 16
        %v1991 = vadd.s32 %v1988, 24
        %v1992 = vlaneseq
        %v1993 = vand.u32 %v1992, 127
        %v1994 = vmul.u32 %v1988, 2
        %v1995 = vmul.u32 %v1989, 2
        %v1996 = vmul.u32 %v1990, 2
        %v1997 = vmul.u32 %v1991, 2
        %v1998 = vsub.s32 %v1994, 1
        %v1999 = vsub.s32 %v1995, 1
        %v2000 = vsub.s32 %v1996, 1
        %v2001 = vsub.s32 %v1997, 1
        %vm2002 = vcmp.eq.s32.totalorder %v1993, %v1998
        %vm2003 = vcmp.eq.s32.totalorder %v1993, %v1999
        %vm2004 = vcmp.eq.s32.totalorder %v1993, %v2000
        %vm2005 = vcmp.eq.s32.totalorder %v1993, %v2001
        %v2006 = vsel %vm2002, 1.0, 0.0
        %v2007 = vsel %vm2003, 1.0, 0.0
        %v2008 = vsel %vm2004, 1.0, 0.0
        %v2009 = vsel %vm2005, 1.0, 0.0
        %v2010 = vpack.c.bf16 %v2007, %v2006
        %v2011 = vpack.c.bf16 %v2009, %v2008
        %vm2012 = vcmask 523264
        %v2014 = vsel %vm2012, %v2010, 0
        %v2017 = vsel %vm2012, %v2011, 0
        %2019 = vmatpush.bf16.msra.mxu0 0
        %2020 = vmatpush.bf16.msra.mxu0 0
        %2021 = vmatpush.bf16.msra.mxu0 0
        %2022 = vmatpush.bf16.msra.mxu0 0
        %2023 = vmatpush.bf16.msra.mxu0 %v1986
        %2024 = vmatpush.bf16.msra.mxu0 %v1985
        %2025 = vmatpush.bf16.msra.mxu0 %v1984
        %2026 = vmatpush.bf16.msra.mxu0 %v1983
        %2027 = vmatmul.bf16.gmra.mxu0 %v2014
        %v2028 = vpop.f32.mrf.mxu0
        %v2029 = vadd.f32 0.0, %v2028
        %v2030 = vpop.f32.mrf.mxu0
        %v2031 = vadd.f32 0.0, %v2030
        %2032 = vmatmul.bf16.gmra.mxu0 %v2017
        %v2033 = vpop.f32.mrf.mxu0
        %v2034 = vadd.f32 0.0, %v2033
        %v2035 = vpop.f32.mrf.mxu0
        %v2036 = vadd.f32 0.0, %v2035
        %2037 = vdwg.mxu0
        %vm2038 = vcmp.eq.s32.totalorder %v1993, %v1994
        %vm2039 = vcmp.eq.s32.totalorder %v1993, %v1995
        %vm2040 = vcmp.eq.s32.totalorder %v1993, %v1996
        %vm2041 = vcmp.eq.s32.totalorder %v1993, %v1997
        %v2042 = vsel %vm2038, 1.0, 0.0
        %v2043 = vsel %vm2039, 1.0, 0.0
        %v2044 = vsel %vm2040, 1.0, 0.0
        %v2045 = vsel %vm2041, 1.0, 0.0
        %v2046 = vpack.c.bf16 %v2043, %v2042
        %v2047 = vpack.c.bf16 %v2045, %v2044
        %v2049 = vsel %vm2012, %v2046, 0
        %v2052 = vsel %vm2012, %v2047, 0
        %2054 = vmatpush.bf16.msra.mxu0 0
        %2055 = vmatpush.bf16.msra.mxu0 0
        %2056 = vmatpush.bf16.msra.mxu0 0
        %2057 = vmatpush.bf16.msra.mxu0 0
        %2058 = vmatpush.bf16.msra.mxu0 %v1986
        %2059 = vmatpush.bf16.msra.mxu0 %v1985
        %2060 = vmatpush.bf16.msra.mxu0 %v1984
        %2061 = vmatpush.bf16.msra.mxu0 %v1983
        %2062 = vmatmul.bf16.gmra.mxu0 %v2049
        %v2063 = vpop.f32.mrf.mxu0
        %v2064 = vadd.f32 0.0, %v2063
        %v2065 = vpop.f32.mrf.mxu0
        %v2066 = vadd.f32 0.0, %v2065
        %2067 = vmatmul.bf16.gmra.mxu0 %v2052
        %v2068 = vpop.f32.mrf.mxu0
        %v2069 = vadd.f32 0.0, %v2068
        %v2070 = vpop.f32.mrf.mxu0
        %v2071 = vadd.f32 0.0, %v2070
        %2072 = vdwg.mxu0
        %v2073 = vadd.s32 %v1994, 1
        %v2074 = vadd.s32 %v1995, 1
        %v2075 = vadd.s32 %v1996, 1
        %v2076 = vadd.s32 %v1997, 1
        %vm2077 = vcmp.eq.s32.totalorder %v1993, %v2073
        %vm2078 = vcmp.eq.s32.totalorder %v1993, %v2074
        %vm2079 = vcmp.eq.s32.totalorder %v1993, %v2075
        %vm2080 = vcmp.eq.s32.totalorder %v1993, %v2076
        %v2081 = vsel %vm2077, 1.0, 0.0
        %v2082 = vsel %vm2078, 1.0, 0.0
        %v2083 = vsel %vm2079, 1.0, 0.0
        %v2084 = vsel %vm2080, 1.0, 0.0
        %v2085 = vpack.c.bf16 %v2082, %v2081
        %v2086 = vpack.c.bf16 %v2084, %v2083
        %v2088 = vsel %vm2012, %v2085, 0
        %v2091 = vsel %vm2012, %v2086, 0
        %2093 = vmatpush.bf16.msra.mxu0 0
        %2094 = vmatpush.bf16.msra.mxu0 0
        %2095 = vmatpush.bf16.msra.mxu0 0
        %2096 = vmatpush.bf16.msra.mxu0 0
        %2097 = vmatpush.bf16.msra.mxu0 %v1986
        %2098 = vmatpush.bf16.msra.mxu0 %v1985
        %2099 = vmatpush.bf16.msra.mxu0 %v1984
        %2100 = vmatpush.bf16.msra.mxu0 %v1983
        %2101 = vmatmul.bf16.gmra.mxu0 %v2088
        %v2102 = vpop.f32.mrf.mxu0
        %v2103 = vadd.f32 0.0, %v2102
        %v2104 = vpop.f32.mrf.mxu0
        %v2105 = vadd.f32 0.0, %v2104
        %2106 = vmatmul.bf16.gmra.mxu0 %v2091
        %v2107 = vpop.f32.mrf.mxu0
        %v2108 = vadd.f32 0.0, %v2107
        %v2109 = vpop.f32.mrf.mxu0
        %v2110 = vadd.f32 0.0, %v2109
        %2111 = vdwg.mxu0
        %v2112 = vpack.c.bf16 %v2031, %v2029
        %v2113 = vpack.c.bf16 %v2036, %v2034
        %v2114 = vld [vmem:[%s3] sm:$0xf]
        %v2115 = vld [vmem:[%s3 + $0x4] sm:$0xf]
        %v2116 = vld [vmem:[%s3 + $0x8] sm:$0xf]
        %v2117 = vld [vmem:[%s3 + $0xc] sm:$0xf]
        %v2118 = vld [vmem:[%s3 + $0x10] sm:$0xf]
        %v2119 = vld [vmem:[%s3 + $0x14] sm:$0xf]
        %v2120 = vld [vmem:[%s3 + $0x18] sm:$0xf]
        %v2121 = vld [vmem:[%s3 + $0x1c] sm:$0x7]
        %v2122 = vpack.c.bf16 %v2066, %v2064
        %v2123 = vpack.c.bf16 %v2071, %v2069
        %s2124 = scalar_lea.vmem %s3, 32
        %v2125 = vld [vmem:[%s2124] sm:$0xf]
        %v2126 = vld [vmem:[%s2124 + $0x4] sm:$0xf]
        %v2127 = vld [vmem:[%s2124 + $0x8] sm:$0xf]
        %v2128 = vld [vmem:[%s2124 + $0xc] sm:$0xf]
        %v2129 = vld [vmem:[%s2124 + $0x10] sm:$0xf]
        %v2130 = vld [vmem:[%s2124 + $0x14] sm:$0xf]
        %v2131 = vld [vmem:[%s2124 + $0x18] sm:$0xf]
        %v2132 = vld [vmem:[%s2124 + $0x1c] sm:$0x7]
        %v2141 = vunpack.c.l.b16 %v2125
        %v2142 = vunpack.c.l.b16 %v2126
        %v2143 = vunpack.c.l.b16 %v2127
        %v2144 = vunpack.c.l.b16 %v2128
        %v2145 = vunpack.c.l.b16 %v2129
        %v2146 = vunpack.c.l.b16 %v2130
        %v2147 = vunpack.c.l.b16 %v2131
        %v2148 = vunpack.c.l.b16 %v2132
        %v2149 = vpack.c.b16 %v2142, %v2141
        %v2150 = vpack.c.b16 %v2144, %v2143
        %v2151 = vpack.c.b16 %v2146, %v2145
        %v2152 = vpack.c.b16 %v2148, %v2147
        %vm2156 = vcmask 506880
        %v2158 = vsel %vm2156, %v2122, 0
        %v2161 = vsel %vm2156, %v2123, 0
        %vm2163 = vcmask 1046528
        %v2165 = vsel %vm2163, %v2152, 0
        %2167 = vmatpush.bf16.msra.mxu0 0
        %2168 = vmatpush.bf16.msra.mxu0 0
        %2169 = vmatpush.bf16.msra.mxu0 0
        %2170 = vmatpush.bf16.msra.mxu0 0
        %2171 = vmatpush.bf16.msra.mxu0 %v2165
        %2172 = vmatpush.bf16.msra.mxu0 %v2151
        %2173 = vmatpush.bf16.msra.mxu0 %v2150
        %2174 = vmatpush.bf16.msra.mxu0 %v2149
        %2175 = vmatmul.bf16.gmra.mxu0 %v2158
        %v2176 = vpop.f32.mrf.mxu0
        %v2177 = vadd.f32 0.0, %v2176
        %v2178 = vpop.f32.mrf.mxu0
        %v2179 = vadd.f32 0.0, %v2178
        %2180 = vmatmul.bf16.gmra.mxu0 %v2161
        %v2181 = vpop.f32.mrf.mxu0
        %v2182 = vadd.f32 0.0, %v2181
        %v2183 = vpop.f32.mrf.mxu0
        %v2184 = vadd.f32 0.0, %v2183
        %2185 = vdwg.mxu0
        %v2194 = vunpack.c.l.b16 %v2114
        %v2195 = vunpack.c.l.b16 %v2115
        %v2196 = vunpack.c.l.b16 %v2116
        %v2197 = vunpack.c.l.b16 %v2117
        %v2198 = vunpack.c.l.b16 %v2118
        %v2199 = vunpack.c.l.b16 %v2119
        %v2200 = vunpack.c.l.b16 %v2120
        %v2201 = vunpack.c.l.b16 %v2121
        %v2202 = vpack.c.b16 %v2195, %v2194
        %v2203 = vpack.c.b16 %v2197, %v2196
        %v2204 = vpack.c.b16 %v2199, %v2198
        %v2205 = vpack.c.b16 %v2201, %v2200
        %v2210 = vsel %vm2156, %v2112, 0
        %v2213 = vsel %vm2156, %v2113, 0
        %v2216 = vsel %vm2163, %v2205, 0
        %2218 = vmatpush.bf16.msra.mxu0 0
        %2219 = vmatpush.bf16.msra.mxu0 0
        %2220 = vmatpush.bf16.msra.mxu0 0
        %2221 = vmatpush.bf16.msra.mxu0 0
        %2222 = vmatpush.bf16.msra.mxu0 %v2216
        %2223 = vmatpush.bf16.msra.mxu0 %v2204
        %2224 = vmatpush.bf16.msra.mxu0 %v2203
        %2225 = vmatpush.bf16.msra.mxu0 %v2202
        %2226 = vmatmul.bf16.gmra.mxu0 %v2210
        %v2227 = vpop.f32.mrf.mxu0
        %v2228 = vadd.f32 %v2177, %v2227
        %v2229 = vpop.f32.mrf.mxu0
        %v2230 = vadd.f32 %v2179, %v2229
        %2231 = vmatmul.bf16.gmra.mxu0 %v2213
        %v2232 = vpop.f32.mrf.mxu0
        %v2233 = vadd.f32 %v2182, %v2232
        %v2234 = vpop.f32.mrf.mxu0
        %v2235 = vadd.f32 %v2184, %v2234
        %2236 = vdwg.mxu0
        %v2237 = vpack.c.bf16 %v2105, %v2103
        %v2238 = vpack.c.bf16 %v2110, %v2108
        %s2239 = scalar_lea.vmem %s3, 64
        %v2240 = vld [vmem:[%s2239] sm:$0xf]
        %v2241 = vld [vmem:[%s2239 + $0x4] sm:$0xf]
        %v2242 = vld [vmem:[%s2239 + $0x8] sm:$0xf]
        %v2243 = vld [vmem:[%s2239 + $0xc] sm:$0xf]
        %v2244 = vld [vmem:[%s2239 + $0x10] sm:$0xf]
        %v2245 = vld [vmem:[%s2239 + $0x14] sm:$0xf]
        %v2246 = vld [vmem:[%s2239 + $0x18] sm:$0xf]
        %v2247 = vld [vmem:[%s2239 + $0x1c] sm:$0x7]
        %v2256 = vunpack.c.l.b16 %v2240
        %v2257 = vunpack.c.l.b16 %v2241
        %v2258 = vunpack.c.l.b16 %v2242
        %v2259 = vunpack.c.l.b16 %v2243
        %v2260 = vunpack.c.l.b16 %v2244
        %v2261 = vunpack.c.l.b16 %v2245
        %v2262 = vunpack.c.l.b16 %v2246
        %v2263 = vunpack.c.l.b16 %v2247
        %v2264 = vpack.c.b16 %v2257, %v2256
        %v2265 = vpack.c.b16 %v2259, %v2258
        %v2266 = vpack.c.b16 %v2261, %v2260
        %v2267 = vpack.c.b16 %v2263, %v2262
        %v2272 = vsel %vm2156, %v2237, 0
        %v2275 = vsel %vm2156, %v2238, 0
        %v2278 = vsel %vm2163, %v2267, 0
        %2280 = vmatpush.bf16.msra.mxu0 0
        %2281 = vmatpush.bf16.msra.mxu0 0
        %2282 = vmatpush.bf16.msra.mxu0 0
        %2283 = vmatpush.bf16.msra.mxu0 0
        %2284 = vmatpush.bf16.msra.mxu0 %v2278
        %2285 = vmatpush.bf16.msra.mxu0 %v2266
        %2286 = vmatpush.bf16.msra.mxu0 %v2265
        %2287 = vmatpush.bf16.msra.mxu0 %v2264
        %2288 = vmatmul.bf16.gmra.mxu0 %v2272
        %v2289 = vpop.f32.mrf.mxu0
        %v2290 = vadd.f32 0.0, %v2289
        %v2291 = vpop.f32.mrf.mxu0
        %v2292 = vadd.f32 0.0, %v2291
        %2293 = vmatmul.bf16.gmra.mxu0 %v2275
        %v2294 = vpop.f32.mrf.mxu0
        %v2295 = vadd.f32 0.0, %v2294
        %v2296 = vpop.f32.mrf.mxu0
        %v2297 = vadd.f32 0.0, %v2296
        %2298 = vdwg.mxu0
        %v2299 = vadd.f32 %v2228, %v2290
        %v2300 = vadd.f32 %v2230, %v2292
        %v2301 = vadd.f32 %v2233, %v2295
        %v2302 = vadd.f32 %v2235, %v2297
        %v2303 = vld [vmem:[%s5] sm:$0x1]
        %v2305 = vperm.slane %v2303, 0
        %v2307 = vmul.f32 %v2299, %v2305
        %v2308 = vmul.f32 %v2300, %v2305
        %v2309 = vmul.f32 %v2301, %v2305
        %v2310 = vmul.f32 %v2302, %v2305
        %v2311 = vld [vmem:[%s7] sm:$0x1]
        %v2313 = vperm.slane %v2311, 0
        %v2315 = vadd.f32 %v2307, %v2313
        %v2316 = vadd.f32 %v2308, %v2313
        %v2317 = vadd.f32 %v2309, %v2313
        %v2318 = vadd.f32 %v2310, %v2313
        %v2319 = vmax.f32 %v2315, 0.0
        %v2320 = vmax.f32 %v2316, 0.0
        %v2321 = vmax.f32 %v2317, 0.0
        %v2322 = vmax.f32 %v2318, 0.0
        %v2323 = vpack.c.bf16 %v2320, %v2319
        %v2324 = vpack.c.bf16 %v2322, %v2321
        %v2325 = vsub.s32 %v1988, 1
        %v2326 = vsub.s32 %v1989, 1
        %v2327 = vsub.s32 %v1990, 1
        %v2328 = vsub.s32 %v1991, 1
        %vm2329 = vcmp.eq.s32.totalorder %v1993, %v2325
        %vm2330 = vcmp.eq.s32.totalorder %v1993, %v2326
        %vm2331 = vcmp.eq.s32.totalorder %v1993, %v2327
        %vm2332 = vcmp.eq.s32.totalorder %v1993, %v2328
        %v2333 = vsel %vm2329, 1.0, 0.0
        %v2334 = vsel %vm2330, 1.0, 0.0
        %v2335 = vsel %vm2331, 1.0, 0.0
        %v2336 = vsel %vm2332, 1.0, 0.0
        %v2337 = vpack.c.bf16 %v2334, %v2333
        %v2338 = vpack.c.bf16 %v2336, %v2335
        %vm2339 = vcmask 261120
        %v2341 = vsel %vm2339, %v2337, 0
        %v2344 = vsel %vm2339, %v2338, 0
        %2346 = vmatpush.bf16.msra.mxu0 0
        %2347 = vmatpush.bf16.msra.mxu0 0
        %2348 = vmatpush.bf16.msra.mxu0 0
        %2349 = vmatpush.bf16.msra.mxu0 0
        %2350 = vmatpush.bf16.msra.mxu0 0
        %2351 = vmatpush.bf16.msra.mxu0 0
        %2352 = vmatpush.bf16.msra.mxu0 %v2324
        %2353 = vmatpush.bf16.msra.mxu0 %v2323
        %2354 = vmatmul.bf16.gmra.mxu0 %v2341
        %v2355 = vpop.f32.mrf.mxu0
        %v2356 = vadd.f32 0.0, %v2355
        %v2357 = vpop.f32.mrf.mxu0
        %v2358 = vadd.f32 0.0, %v2357
        %2359 = vmatmul.bf16.gmra.mxu0 %v2344
        %v2360 = vpop.f32.mrf.mxu0
        %v2361 = vadd.f32 0.0, %v2360
        %v2362 = vpop.f32.mrf.mxu0
        %v2363 = vadd.f32 0.0, %v2362
        %2364 = vdwg.mxu0
        %v2365 = vadd.s32 %v1988, 1
        %v2366 = vadd.s32 %v1989, 1
        %v2367 = vadd.s32 %v1990, 1
        %v2368 = vadd.s32 %v1991, 1
        %vm2369 = vcmp.eq.s32.totalorder %v1993, %v2365
        %vm2370 = vcmp.eq.s32.totalorder %v1993, %v2366
        %vm2371 = vcmp.eq.s32.totalorder %v1993, %v2367
        %vm2372 = vcmp.eq.s32.totalorder %v1993, %v2368
        %v2373 = vsel %vm2369, 1.0, 0.0
        %v2374 = vsel %vm2370, 1.0, 0.0
        %v2375 = vsel %vm2371, 1.0, 0.0
        %v2376 = vsel %vm2372, 1.0, 0.0
        %v2377 = vpack.c.bf16 %v2374, %v2373
        %v2378 = vpack.c.bf16 %v2376, %v2375
        %v2380 = vsel %vm2339, %v2377, 0
        %v2383 = vsel %vm2339, %v2378, 0
        %2385 = vmatpush.bf16.msra.mxu0 0
        %2386 = vmatpush.bf16.msra.mxu0 0
        %2387 = vmatpush.bf16.msra.mxu0 0
        %2388 = vmatpush.bf16.msra.mxu0 0
        %2389 = vmatpush.bf16.msra.mxu0 0
        %2390 = vmatpush.bf16.msra.mxu0 0
        %2391 = vmatpush.bf16.msra.mxu0 %v2324
        %2392 = vmatpush.bf16.msra.mxu0 %v2323
        %2393 = vmatmul.bf16.gmra.mxu0 %v2380
        %v2394 = vpop.f32.mrf.mxu0
        %v2395 = vadd.f32 0.0, %v2394
        %v2396 = vpop.f32.mrf.mxu0
        %v2397 = vadd.f32 0.0, %v2396
        %2398 = vmatmul.bf16.gmra.mxu0 %v2383
        %v2399 = vpop.f32.mrf.mxu0
        %v2400 = vadd.f32 0.0, %v2399
        %v2401 = vpop.f32.mrf.mxu0
        %v2402 = vadd.f32 0.0, %v2401
        %2403 = vdwg.mxu0
        %v2404 = vpack.c.bf16 %v2358, %v2356
        %v2405 = vpack.c.bf16 %v2363, %v2361
        %v2406 = vld [vmem:[%s9] sm:$0xf]
        %v2407 = vld [vmem:[%s9 + $0x4] sm:$0xf]
        %v2408 = vld [vmem:[%s9 + $0x8] sm:$0xf]
        %v2409 = vld [vmem:[%s9 + $0xc] sm:$0xf]
        %s2410 = scalar_lea.vmem %s9, 16
        %v2411 = vld [vmem:[%s2410] sm:$0xf]
        %v2412 = vld [vmem:[%s2410 + $0x4] sm:$0xf]
        %v2413 = vld [vmem:[%s2410 + $0x8] sm:$0xf]
        %v2414 = vld [vmem:[%s2410 + $0xc] sm:$0xf]
        %v2419 = vunpack.c.l.b16 %v2411
        %v2420 = vunpack.c.l.b16 %v2412
        %v2421 = vunpack.c.l.b16 %v2413
        %v2422 = vunpack.c.l.b16 %v2414
        %v2423 = vpack.c.b16 %v2420, %v2419
        %v2424 = vpack.c.b16 %v2422, %v2421
        %v2428 = vsel %vm2339, %v2323, 0
        %v2431 = vsel %vm2339, %v2324, 0
        %2433 = vmatpush.bf16.msra.mxu0 0
        %2434 = vmatpush.bf16.msra.mxu0 0
        %2435 = vmatpush.bf16.msra.mxu0 0
        %2436 = vmatpush.bf16.msra.mxu0 0
        %2437 = vmatpush.bf16.msra.mxu0 0
        %2438 = vmatpush.bf16.msra.mxu0 0
        %2439 = vmatpush.bf16.msra.mxu0 %v2424
        %2440 = vmatpush.bf16.msra.mxu0 %v2423
        %2441 = vmatmul.bf16.gmra.mxu0 %v2428
        %v2442 = vpop.f32.mrf.mxu0
        %v2443 = vadd.f32 0.0, %v2442
        %v2444 = vpop.f32.mrf.mxu0
        %v2445 = vadd.f32 0.0, %v2444
        %2446 = vmatmul.bf16.gmra.mxu0 %v2431
        %v2447 = vpop.f32.mrf.mxu0
        %v2448 = vadd.f32 0.0, %v2447
        %v2449 = vpop.f32.mrf.mxu0
        %v2450 = vadd.f32 0.0, %v2449
        %2451 = vdwg.mxu0
        %v2456 = vunpack.c.l.b16 %v2406
        %v2457 = vunpack.c.l.b16 %v2407
        %v2458 = vunpack.c.l.b16 %v2408
        %v2459 = vunpack.c.l.b16 %v2409
        %v2460 = vpack.c.b16 %v2457, %v2456
        %v2461 = vpack.c.b16 %v2459, %v2458
        %v2465 = vsel %vm2339, %v2404, 0
        %v2468 = vsel %vm2339, %v2405, 0
        %2470 = vmatpush.bf16.msra.mxu0 0
        %2471 = vmatpush.bf16.msra.mxu0 0
        %2472 = vmatpush.bf16.msra.mxu0 0
        %2473 = vmatpush.bf16.msra.mxu0 0
        %2474 = vmatpush.bf16.msra.mxu0 0
        %2475 = vmatpush.bf16.msra.mxu0 0
        %2476 = vmatpush.bf16.msra.mxu0 %v2461
        %2477 = vmatpush.bf16.msra.mxu0 %v2460
        %2478 = vmatmul.bf16.gmra.mxu0 %v2465
        %v2479 = vpop.f32.mrf.mxu0
        %v2480 = vadd.f32 %v2443, %v2479
        %v2481 = vpop.f32.mrf.mxu0
        %v2482 = vadd.f32 %v2445, %v2481
        %2483 = vmatmul.bf16.gmra.mxu0 %v2468
        %v2484 = vpop.f32.mrf.mxu0
        %v2485 = vadd.f32 %v2448, %v2484
        %v2486 = vpop.f32.mrf.mxu0
        %v2487 = vadd.f32 %v2450, %v2486
        %2488 = vdwg.mxu0
        %v2489 = vpack.c.bf16 %v2397, %v2395
        %v2490 = vpack.c.bf16 %v2402, %v2400
        %s2491 = scalar_lea.vmem %s9, 32
        %v2492 = vld [vmem:[%s2491] sm:$0xf]
        %v2493 = vld [vmem:[%s2491 + $0x4] sm:$0xf]
        %v2494 = vld [vmem:[%s2491 + $0x8] sm:$0xf]
        %v2495 = vld [vmem:[%s2491 + $0xc] sm:$0xf]
        %v2500 = vunpack.c.l.b16 %v2492
        %v2501 = vunpack.c.l.b16 %v2493
        %v2502 = vunpack.c.l.b16 %v2494
        %v2503 = vunpack.c.l.b16 %v2495
        %v2504 = vpack.c.b16 %v2501, %v2500
        %v2505 = vpack.c.b16 %v2503, %v2502
        %v2509 = vsel %vm2339, %v2489, 0
        %v2512 = vsel %vm2339, %v2490, 0
        %2514 = vmatpush.bf16.msra.mxu0 0
        %2515 = vmatpush.bf16.msra.mxu0 0
        %2516 = vmatpush.bf16.msra.mxu0 0
        %2517 = vmatpush.bf16.msra.mxu0 0
        %2518 = vmatpush.bf16.msra.mxu0 0
        %2519 = vmatpush.bf16.msra.mxu0 0
        %2520 = vmatpush.bf16.msra.mxu0 %v2505
        %2521 = vmatpush.bf16.msra.mxu0 %v2504
        %2522 = vmatmul.bf16.gmra.mxu0 %v2509
        %v2523 = vpop.f32.mrf.mxu0
        %v2524 = vadd.f32 0.0, %v2523
        %v2525 = vpop.f32.mrf.mxu0
        %v2526 = vadd.f32 0.0, %v2525
        %2527 = vmatmul.bf16.gmra.mxu0 %v2512
        %v2528 = vpop.f32.mrf.mxu0
        %v2529 = vadd.f32 0.0, %v2528
        %v2530 = vpop.f32.mrf.mxu0
        %v2531 = vadd.f32 0.0, %v2530
        %2532 = vdwg.mxu0
        %v2533 = vadd.f32 %v2480, %v2524
        %v2534 = vadd.f32 %v2482, %v2526
        %v2535 = vadd.f32 %v2485, %v2529
        %v2536 = vadd.f32 %v2487, %v2531
        %v2537 = vld [vmem:[%s11] sm:$0x1]
        %v2539 = vperm.slane %v2537, 0
        %v2541 = vmul.f32 %v2533, %v2539
        %v2542 = vmul.f32 %v2534, %v2539
        %v2543 = vmul.f32 %v2535, %v2539
        %v2544 = vmul.f32 %v2536, %v2539
        %v2545 = vld [vmem:[%s13] sm:$0x1]
        %v2547 = vperm.slane %v2545, 0
        %v2549 = vadd.f32 %v2541, %v2547
        %v2550 = vadd.f32 %v2542, %v2547
        %v2551 = vadd.f32 %v2543, %v2547
        %v2552 = vadd.f32 %v2544, %v2547
        %v2553 = vld [vmem:[%s15] sm:$0xf]
        %v2554 = vld [vmem:[%s15 + $0x4] sm:$0xf]
        %v2555 = vld [vmem:[%s15 + $0x8] sm:$0xf]
        %v2556 = vld [vmem:[%s15 + $0xc] sm:$0xf]
        %v2557 = vld [vmem:[%s15 + $0x10] sm:$0xf]
        %v2558 = vld [vmem:[%s15 + $0x14] sm:$0xf]
        %v2559 = vld [vmem:[%s15 + $0x18] sm:$0xf]
        %v2560 = vld [vmem:[%s15 + $0x1c] sm:$0x7]
        %v2569 = vunpack.c.l.b16 %v2553
        %v2570 = vunpack.c.l.b16 %v2554
        %v2571 = vunpack.c.l.b16 %v2555
        %v2572 = vunpack.c.l.b16 %v2556
        %v2573 = vunpack.c.l.b16 %v2557
        %v2574 = vunpack.c.l.b16 %v2558
        %v2575 = vunpack.c.l.b16 %v2559
        %v2576 = vunpack.c.l.b16 %v2560
        %v2577 = vpack.c.b16 %v2570, %v2569
        %v2578 = vpack.c.b16 %v2572, %v2571
        %v2579 = vpack.c.b16 %v2574, %v2573
        %v2580 = vpack.c.b16 %v2576, %v2575
        %v2585 = vsel %vm2163, %v2580, 0
        %2587 = vmatpush.bf16.msra.mxu0 0
        %2588 = vmatpush.bf16.msra.mxu0 0
        %2589 = vmatpush.bf16.msra.mxu0 0
        %2590 = vmatpush.bf16.msra.mxu0 0
        %2591 = vmatpush.bf16.msra.mxu0 %v2585
        %2592 = vmatpush.bf16.msra.mxu0 %v2579
        %2593 = vmatpush.bf16.msra.mxu0 %v2578
        %2594 = vmatpush.bf16.msra.mxu0 %v2577
        %2595 = vmatmul.bf16.gmra.mxu0 %v2158
        %v2596 = vpop.f32.mrf.mxu0
        %v2597 = vadd.f32 0.0, %v2596
        %v2598 = vpop.f32.mrf.mxu0
        %v2599 = vadd.f32 0.0, %v2598
        %2600 = vmatmul.bf16.gmra.mxu0 %v2161
        %v2601 = vpop.f32.mrf.mxu0
        %v2602 = vadd.f32 0.0, %v2601
        %v2603 = vpop.f32.mrf.mxu0
        %v2604 = vadd.f32 0.0, %v2603
        %2605 = vdwg.mxu0
        %v2606 = vld [vmem:[%s17] sm:$0x1]
        %v2608 = vperm.slane %v2606, 0
        %v2610 = vmul.f32 %v2597, %v2608
        %v2611 = vmul.f32 %v2599, %v2608
        %v2612 = vmul.f32 %v2602, %v2608
        %v2613 = vmul.f32 %v2604, %v2608
        %v2614 = vld [vmem:[%s19] sm:$0x1]
        %v2616 = vperm.slane %v2614, 0
        %v2618 = vadd.f32 %v2610, %v2616
        %v2619 = vadd.f32 %v2611, %v2616
        %v2620 = vadd.f32 %v2612, %v2616
        %v2621 = vadd.f32 %v2613, %v2616
        %v2622 = vadd.f32 %v2549, %v2618
        %v2623 = vadd.f32 %v2550, %v2619
        %v2624 = vadd.f32 %v2551, %v2620
        %v2625 = vadd.f32 %v2552, %v2621
        %v2626 = vmax.f32 %v2622, 0.0
        %v2627 = vmax.f32 %v2623, 0.0
        %v2628 = vmax.f32 %v2624, 0.0
        %v2629 = vmax.f32 %v2625, 0.0
        %v2630 = vpack.c.bf16 %v2627, %v2626
        %v2631 = vpack.c.bf16 %v2629, %v2628
        %v2632 = vsel %vm2339, %v2010, 0
        %2634 = vmatpush.bf16.msra.mxu0 0
        %2635 = vmatpush.bf16.msra.mxu0 0
        %2636 = vmatpush.bf16.msra.mxu0 0
        %2637 = vmatpush.bf16.msra.mxu0 0
        %2638 = vmatpush.bf16.msra.mxu0 0
        %2639 = vmatpush.bf16.msra.mxu0 0
        %2640 = vmatpush.bf16.msra.mxu0 %v2631
        %2641 = vmatpush.bf16.msra.mxu0 %v2630
        %2642 = vmatmul.bf16.gmra.mxu0 %v2632
        %v2643 = vpop.f32.mrf.mxu0
        %v2644 = vadd.f32 0.0, %v2643
        %v2645 = vpop.f32.mrf.mxu0
        %v2646 = vadd.f32 0.0, %v2645
        %2647 = vdwg.mxu0
        %v2648 = vsel %vm2339, %v2046, 0
        %2650 = vmatpush.bf16.msra.mxu0 0
        %2651 = vmatpush.bf16.msra.mxu0 0
        %2652 = vmatpush.bf16.msra.mxu0 0
        %2653 = vmatpush.bf16.msra.mxu0 0
        %2654 = vmatpush.bf16.msra.mxu0 0
        %2655 = vmatpush.bf16.msra.mxu0 0
        %2656 = vmatpush.bf16.msra.mxu0 %v2631
        %2657 = vmatpush.bf16.msra.mxu0 %v2630
        %2658 = vmatmul.bf16.gmra.mxu0 %v2648
        %v2659 = vpop.f32.mrf.mxu0
        %v2660 = vadd.f32 0.0, %v2659
        %v2661 = vpop.f32.mrf.mxu0
        %v2662 = vadd.f32 0.0, %v2661
        %2663 = vdwg.mxu0
        %v2664 = vsel %vm2339, %v2085, 0
        %2666 = vmatpush.bf16.msra.mxu0 0
        %2667 = vmatpush.bf16.msra.mxu0 0
        %2668 = vmatpush.bf16.msra.mxu0 0
        %2669 = vmatpush.bf16.msra.mxu0 0
        %2670 = vmatpush.bf16.msra.mxu0 0
        %2671 = vmatpush.bf16.msra.mxu0 0
        %2672 = vmatpush.bf16.msra.mxu0 %v2631
        %2673 = vmatpush.bf16.msra.mxu0 %v2630
        %2674 = vmatmul.bf16.gmra.mxu0 %v2664
        %v2675 = vpop.f32.mrf.mxu0
        %v2676 = vadd.f32 0.0, %v2675
        %v2677 = vpop.f32.mrf.mxu0
        %v2678 = vadd.f32 0.0, %v2677
        %2679 = vdwg.mxu0
        %v2680 = vpack.c.bf16 %v2646, %v2644
        %v2681 = vld [vmem:[%s21] sm:$0xf]
        %v2682 = vld [vmem:[%s21 + $0x4] sm:$0xf]
        %v2683 = vld [vmem:[%s21 + $0x8] sm:$0xf]
        %v2684 = vld [vmem:[%s21 + $0xc] sm:$0xf]
        %v2685 = vpack.c.bf16 %v2662, %v2660
        %s2686 = scalar_lea.vmem %s21, 16
        %v2687 = vld [vmem:[%s2686] sm:$0xf]
        %v2688 = vld [vmem:[%s2686 + $0x4] sm:$0xf]
        %v2689 = vld [vmem:[%s2686 + $0x8] sm:$0xf]
        %v2690 = vld [vmem:[%s2686 + $0xc] sm:$0xf]
        %v2695 = vunpack.c.l.b16 %v2687
        %v2696 = vunpack.c.l.b16 %v2688
        %v2697 = vunpack.c.l.b16 %v2689
        %v2698 = vunpack.c.l.b16 %v2690
        %v2699 = vpack.c.b16 %v2696, %v2695
        %v2700 = vpack.c.b16 %v2698, %v2697
        %v2704 = vsel %vm2339, %v2685, 0
        %2706 = vmatpush.bf16.msra.mxu0 0
        %2707 = vmatpush.bf16.msra.mxu0 0
        %2708 = vmatpush.bf16.msra.mxu0 0
        %2709 = vmatpush.bf16.msra.mxu0 0
        %2710 = vmatpush.bf16.msra.mxu0 0
        %2711 = vmatpush.bf16.msra.mxu0 0
        %2712 = vmatpush.bf16.msra.mxu0 %v2700
        %2713 = vmatpush.bf16.msra.mxu0 %v2699
        %2714 = vmatmul.bf16.gmra.mxu0 %v2704
        %v2715 = vpop.f32.mrf.mxu0
        %v2716 = vadd.f32 0.0, %v2715
        %v2717 = vpop.f32.mrf.mxu0
        %v2718 = vadd.f32 0.0, %v2717
        %2719 = vdwg.mxu0
        %v2724 = vunpack.c.l.b16 %v2681
        %v2725 = vunpack.c.l.b16 %v2682
        %v2726 = vunpack.c.l.b16 %v2683
        %v2727 = vunpack.c.l.b16 %v2684
        %v2728 = vpack.c.b16 %v2725, %v2724
        %v2729 = vpack.c.b16 %v2727, %v2726
        %v2733 = vsel %vm2339, %v2680, 0
        %2735 = vmatpush.bf16.msra.mxu0 0
        %2736 = vmatpush.bf16.msra.mxu0 0
        %2737 = vmatpush.bf16.msra.mxu0 0
        %2738 = vmatpush.bf16.msra.mxu0 0
        %2739 = vmatpush.bf16.msra.mxu0 0
        %2740 = vmatpush.bf16.msra.mxu0 0
        %2741 = vmatpush.bf16.msra.mxu0 %v2729
        %2742 = vmatpush.bf16.msra.mxu0 %v2728
        %2743 = vmatmul.bf16.gmra.mxu0 %v2733
        %v2744 = vpop.f32.mrf.mxu0
        %v2745 = vadd.f32 %v2716, %v2744
        %v2746 = vpop.f32.mrf.mxu0
        %v2747 = vadd.f32 %v2718, %v2746
        %2748 = vdwg.mxu0
        %v2749 = vpack.c.bf16 %v2678, %v2676
        %s2750 = scalar_lea.vmem %s21, 32
        %v2751 = vld [vmem:[%s2750] sm:$0xf]
        %v2752 = vld [vmem:[%s2750 + $0x4] sm:$0xf]
        %v2753 = vld [vmem:[%s2750 + $0x8] sm:$0xf]
        %v2754 = vld [vmem:[%s2750 + $0xc] sm:$0xf]
        %v2759 = vunpack.c.l.b16 %v2751
        %v2760 = vunpack.c.l.b16 %v2752
        %v2761 = vunpack.c.l.b16 %v2753
        %v2762 = vunpack.c.l.b16 %v2754
        %v2763 = vpack.c.b16 %v2760, %v2759
        %v2764 = vpack.c.b16 %v2762, %v2761
        %v2768 = vsel %vm2339, %v2749, 0
        %2770 = vmatpush.bf16.msra.mxu0 0
        %2771 = vmatpush.bf16.msra.mxu0 0
        %2772 = vmatpush.bf16.msra.mxu0 0
        %2773 = vmatpush.bf16.msra.mxu0 0
        %2774 = vmatpush.bf16.msra.mxu0 0
        %2775 = vmatpush.bf16.msra.mxu0 0
        %2776 = vmatpush.bf16.msra.mxu0 %v2764
        %2777 = vmatpush.bf16.msra.mxu0 %v2763
        %2778 = vmatmul.bf16.gmra.mxu0 %v2768
        %v2779 = vpop.f32.mrf.mxu0
        %v2780 = vadd.f32 0.0, %v2779
        %v2781 = vpop.f32.mrf.mxu0
        %v2782 = vadd.f32 0.0, %v2781
        %2783 = vdwg.mxu0
        %v2784 = vadd.f32 %v2745, %v2780
        %v2785 = vadd.f32 %v2747, %v2782
        %v2786 = vld [vmem:[%s23] sm:$0x1]
        %v2788 = vperm.slane %v2786, 0
        %v2790 = vmul.f32 %v2784, %v2788
        %v2791 = vmul.f32 %v2785, %v2788
        %v2792 = vld [vmem:[%s25] sm:$0x1]
        %v2794 = vperm.slane %v2792, 0
        %v2796 = vadd.f32 %v2790, %v2794
        %v2797 = vadd.f32 %v2791, %v2794
        %v2798 = vmax.f32 %v2796, 0.0
        %v2799 = vmax.f32 %v2797, 0.0
        %v2800 = vpack.c.bf16 %v2799, %v2798
        %vm2801 = vcmask 130048
        %v2802 = vsel %vm2801, %v2337, 0
        %2804 = vmatpush.bf16.msra.mxu0 0
        %2805 = vmatpush.bf16.msra.mxu0 0
        %2806 = vmatpush.bf16.msra.mxu0 0
        %2807 = vmatpush.bf16.msra.mxu0 0
        %2808 = vmatpush.bf16.msra.mxu0 0
        %2809 = vmatpush.bf16.msra.mxu0 0
        %2810 = vmatpush.bf16.msra.mxu0 0
        %2811 = vmatpush.bf16.msra.mxu0 %v2800
        %2812 = vmatmul.bf16.gmra.mxu0 %v2802
        %v2813 = vpop.f32.mrf.mxu0
        %v2814 = vadd.f32 0.0, %v2813
        %v2815 = vpop.f32.mrf.mxu0
        %v2816 = vadd.f32 0.0, %v2815
        %2817 = vdwg.mxu0
        %v2818 = vsel %vm2801, %v2377, 0
        %2820 = vmatpush.bf16.msra.mxu0 0
        %2821 = vmatpush.bf16.msra.mxu0 0
        %2822 = vmatpush.bf16.msra.mxu0 0
        %2823 = vmatpush.bf16.msra.mxu0 0
        %2824 = vmatpush.bf16.msra.mxu0 0
        %2825 = vmatpush.bf16.msra.mxu0 0
        %2826 = vmatpush.bf16.msra.mxu0 0
        %2827 = vmatpush.bf16.msra.mxu0 %v2800
        %2828 = vmatmul.bf16.gmra.mxu0 %v2818
        %v2829 = vpop.f32.mrf.mxu0
        %v2830 = vadd.f32 0.0, %v2829
        %v2831 = vpop.f32.mrf.mxu0
        %v2832 = vadd.f32 0.0, %v2831
        %2833 = vdwg.mxu0
        %v2834 = vpack.c.bf16 %v2816, %v2814
        %v2835 = vld [vmem:[%s27] sm:$0xf]
        %v2836 = vld [vmem:[%s27 + $0x4] sm:$0xf]
        %v2837 = vld [vmem:[%s27 + $0x8] sm:$0xf]
        %v2838 = vld [vmem:[%s27 + $0xc] sm:$0xf]
        %s2839 = scalar_lea.vmem %s27, 16
        %v2840 = vld [vmem:[%s2839] sm:$0xf]
        %v2841 = vld [vmem:[%s2839 + $0x4] sm:$0xf]
        %v2842 = vld [vmem:[%s2839 + $0x8] sm:$0xf]
        %v2843 = vld [vmem:[%s2839 + $0xc] sm:$0xf]
        %v2848 = vunpack.c.l.b16 %v2840
        %v2849 = vunpack.c.l.b16 %v2841
        %v2850 = vunpack.c.l.b16 %v2842
        %v2851 = vunpack.c.l.b16 %v2843
        %v2852 = vpack.c.b16 %v2849, %v2848
        %v2853 = vpack.c.b16 %v2851, %v2850
        %v2857 = vsel %vm2339, %v2800, 0
        %2859 = vmatpush.bf16.msra.mxu0 0
        %2860 = vmatpush.bf16.msra.mxu0 0
        %2861 = vmatpush.bf16.msra.mxu0 0
        %2862 = vmatpush.bf16.msra.mxu0 0
        %2863 = vmatpush.bf16.msra.mxu0 0
        %2864 = vmatpush.bf16.msra.mxu0 0
        %2865 = vmatpush.bf16.msra.mxu0 %v2853
        %2866 = vmatpush.bf16.msra.mxu0 %v2852
        %2867 = vmatmul.bf16.gmra.mxu0 %v2857
        %v2868 = vpop.f32.mrf.mxu0
        %v2869 = vadd.f32 0.0, %v2868
        %v2870 = vpop.f32.mrf.mxu0
        %v2871 = vadd.f32 0.0, %v2870
        %2872 = vdwg.mxu0
        %v2877 = vunpack.c.l.b16 %v2835
        %v2878 = vunpack.c.l.b16 %v2836
        %v2879 = vunpack.c.l.b16 %v2837
        %v2880 = vunpack.c.l.b16 %v2838
        %v2881 = vpack.c.b16 %v2878, %v2877
        %v2882 = vpack.c.b16 %v2880, %v2879
        %v2886 = vsel %vm2339, %v2834, 0
        %2888 = vmatpush.bf16.msra.mxu0 0
        %2889 = vmatpush.bf16.msra.mxu0 0
        %2890 = vmatpush.bf16.msra.mxu0 0
        %2891 = vmatpush.bf16.msra.mxu0 0
        %2892 = vmatpush.bf16.msra.mxu0 0
        %2893 = vmatpush.bf16.msra.mxu0 0
        %2894 = vmatpush.bf16.msra.mxu0 %v2882
        %2895 = vmatpush.bf16.msra.mxu0 %v2881
        %2896 = vmatmul.bf16.gmra.mxu0 %v2886
        %v2897 = vpop.f32.mrf.mxu0
        %v2898 = vadd.f32 %v2869, %v2897
        %v2899 = vpop.f32.mrf.mxu0
        %v2900 = vadd.f32 %v2871, %v2899
        %2901 = vdwg.mxu0
        %v2902 = vpack.c.bf16 %v2832, %v2830
        %s2903 = scalar_lea.vmem %s27, 32
        %v2904 = vld [vmem:[%s2903] sm:$0xf]
        %v2905 = vld [vmem:[%s2903 + $0x4] sm:$0xf]
        %v2906 = vld [vmem:[%s2903 + $0x8] sm:$0xf]
        %v2907 = vld [vmem:[%s2903 + $0xc] sm:$0xf]
        %v2912 = vunpack.c.l.b16 %v2904
        %v2913 = vunpack.c.l.b16 %v2905
        %v2914 = vunpack.c.l.b16 %v2906
        %v2915 = vunpack.c.l.b16 %v2907
        %v2916 = vpack.c.b16 %v2913, %v2912
        %v2917 = vpack.c.b16 %v2915, %v2914
        %v2921 = vsel %vm2339, %v2902, 0
        %2923 = vmatpush.bf16.msra.mxu0 0
        %2924 = vmatpush.bf16.msra.mxu0 0
        %2925 = vmatpush.bf16.msra.mxu0 0
        %2926 = vmatpush.bf16.msra.mxu0 0
        %2927 = vmatpush.bf16.msra.mxu0 0
        %2928 = vmatpush.bf16.msra.mxu0 0
        %2929 = vmatpush.bf16.msra.mxu0 %v2917
        %2930 = vmatpush.bf16.msra.mxu0 %v2916
        %2931 = vmatmul.bf16.gmra.mxu0 %v2921
        %v2932 = vpop.f32.mrf.mxu0
        %v2933 = vadd.f32 0.0, %v2932
        %v2934 = vpop.f32.mrf.mxu0
        %v2935 = vadd.f32 0.0, %v2934
        %2936 = vdwg.mxu0
        %v2937 = vadd.f32 %v2898, %v2933
        %v2938 = vadd.f32 %v2900, %v2935
        %v2939 = vld [vmem:[%s29] sm:$0x1]
        %v2941 = vperm.slane %v2939, 0
        %v2943 = vmul.f32 %v2937, %v2941
        %v2944 = vmul.f32 %v2938, %v2941
        %v2945 = vld [vmem:[%s31] sm:$0x1]
        %v2947 = vperm.slane %v2945, 0
        %v2949 = vadd.f32 %v2943, %v2947
        %v2950 = vadd.f32 %v2944, %v2947
        %v2951 = vld [vmem:[%s33] sm:$0xf]
        %v2952 = vld [vmem:[%s33 + $0x4] sm:$0xf]
        %v2953 = vld [vmem:[%s33 + $0x8] sm:$0xf]
        %v2954 = vld [vmem:[%s33 + $0xc] sm:$0xf]
        %v2959 = vunpack.c.l.b16 %v2951
        %v2960 = vunpack.c.l.b16 %v2952
        %v2961 = vunpack.c.l.b16 %v2953
        %v2962 = vunpack.c.l.b16 %v2954
        %v2963 = vpack.c.b16 %v2960, %v2959
        %v2964 = vpack.c.b16 %v2962, %v2961
        %2967 = vmatpush.bf16.msra.mxu0 0
        %2968 = vmatpush.bf16.msra.mxu0 0
        %2969 = vmatpush.bf16.msra.mxu0 0
        %2970 = vmatpush.bf16.msra.mxu0 0
        %2971 = vmatpush.bf16.msra.mxu0 0
        %2972 = vmatpush.bf16.msra.mxu0 0
        %2973 = vmatpush.bf16.msra.mxu0 %v2964
        %2974 = vmatpush.bf16.msra.mxu0 %v2963
        %2975 = vmatmul.bf16.gmra.mxu0 %v2704
        %v2976 = vpop.f32.mrf.mxu0
        %v2977 = vadd.f32 0.0, %v2976
        %v2978 = vpop.f32.mrf.mxu0
        %v2979 = vadd.f32 0.0, %v2978
        %2980 = vdwg.mxu0
        %v2981 = vld [vmem:[%s35] sm:$0x1]
        %v2983 = vperm.slane %v2981, 0
        %v2985 = vmul.f32 %v2977, %v2983
        %v2986 = vmul.f32 %v2979, %v2983
        %v2987 = vld [vmem:[%s37] sm:$0x1]
        %v2989 = vperm.slane %v2987, 0
        %v2991 = vadd.f32 %v2985, %v2989
        %v2992 = vadd.f32 %v2986, %v2989
        %v2993 = vadd.f32 %v2949, %v2991
        %v2994 = vadd.f32 %v2950, %v2992
        %v2995 = vmax.f32 %v2993, 0.0
        %v2996 = vmax.f32 %v2994, 0.0
        %v2997 = vpack.c.bf16 %v2996, %v2995
        %v2998 = vpack.c.bf16 %v2006, %v2006
        %v3000 = vsel %vm2801, %v2998, 0
        %3002 = vmatpush.bf16.msra.mxu0 0
        %3003 = vmatpush.bf16.msra.mxu0 0
        %3004 = vmatpush.bf16.msra.mxu0 0
        %3005 = vmatpush.bf16.msra.mxu0 0
        %3006 = vmatpush.bf16.msra.mxu0 0
        %3007 = vmatpush.bf16.msra.mxu0 0
        %3008 = vmatpush.bf16.msra.mxu0 0
        %3009 = vmatpush.bf16.msra.mxu0 %v2997
        %3010 = vmatmul.bf16.gmra.mxu0 %v3000
        %v3011 = vpop.f32.mrf.mxu0
        %v3012 = vadd.f32 0.0, %v3011
        %v3013 = vpop.f32.mrf.mxu0
        %3014 = vdwg.mxu0
        %v3015 = vpack.c.bf16 %v2042, %v2042
        %v3017 = vsel %vm2801, %v3015, 0
        %3019 = vmatpush.bf16.msra.mxu0 0
        %3020 = vmatpush.bf16.msra.mxu0 0
        %3021 = vmatpush.bf16.msra.mxu0 0
        %3022 = vmatpush.bf16.msra.mxu0 0
        %3023 = vmatpush.bf16.msra.mxu0 0
        %3024 = vmatpush.bf16.msra.mxu0 0
        %3025 = vmatpush.bf16.msra.mxu0 0
        %3026 = vmatpush.bf16.msra.mxu0 %v2997
        %3027 = vmatmul.bf16.gmra.mxu0 %v3017
        %v3028 = vpop.f32.mrf.mxu0
        %v3029 = vadd.f32 0.0, %v3028
        %v3030 = vpop.f32.mrf.mxu0
        %3031 = vdwg.mxu0
        %v3032 = vpack.c.bf16 %v2081, %v2081
        %v3034 = vsel %vm2801, %v3032, 0
        %3036 = vmatpush.bf16.msra.mxu0 0
        %3037 = vmatpush.bf16.msra.mxu0 0
        %3038 = vmatpush.bf16.msra.mxu0 0
        %3039 = vmatpush.bf16.msra.mxu0 0
        %3040 = vmatpush.bf16.msra.mxu0 0
        %3041 = vmatpush.bf16.msra.mxu0 0
        %3042 = vmatpush.bf16.msra.mxu0 0
        %3043 = vmatpush.bf16.msra.mxu0 %v2997
        %3044 = vmatmul.bf16.gmra.mxu0 %v3034
        %v3045 = vpop.f32.mrf.mxu0
        %v3046 = vadd.f32 0.0, %v3045
        %v3047 = vpop.f32.mrf.mxu0
        %3048 = vdwg.mxu0
        %v3049 = vpack.c.bf16 %v3012, %v3012
        %v3050 = vld [vmem:[%s39] sm:$0xf]
        %v3051 = vld [vmem:[%s39 + $0x4] sm:$0xf]
        %v3052 = vld [vmem:[%s39 + $0x8] sm:$0xf]
        %v3053 = vld [vmem:[%s39 + $0xc] sm:$0xf]
        %v3054 = vpack.c.bf16 %v3029, %v3029
        %s3055 = scalar_lea.vmem %s39, 16
        %v3056 = vld [vmem:[%s3055] sm:$0xf]
        %v3057 = vld [vmem:[%s3055 + $0x4] sm:$0xf]
        %v3058 = vld [vmem:[%s3055 + $0x8] sm:$0xf]
        %v3059 = vld [vmem:[%s3055 + $0xc] sm:$0xf]
        %v3064 = vunpack.c.l.b16 %v3056
        %v3065 = vunpack.c.l.b16 %v3057
        %v3066 = vunpack.c.l.b16 %v3058
        %v3067 = vunpack.c.l.b16 %v3059
        %v3068 = vpack.c.b16 %v3065, %v3064
        %v3069 = vpack.c.b16 %v3067, %v3066
        %v3073 = vsel %vm2339, %v3054, 0
        %3075 = vmatpush.bf16.msra.mxu0 0
        %3076 = vmatpush.bf16.msra.mxu0 0
        %3077 = vmatpush.bf16.msra.mxu0 0
        %3078 = vmatpush.bf16.msra.mxu0 0
        %3079 = vmatpush.bf16.msra.mxu0 0
        %3080 = vmatpush.bf16.msra.mxu0 0
        %3081 = vmatpush.bf16.msra.mxu0 %v3069
        %3082 = vmatpush.bf16.msra.mxu0 %v3068
        %3083 = vmatmul.bf16.gmra.mxu0 %v3073
        %v3084 = vpop.f32.mrf.mxu0
        %v3085 = vadd.f32 0.0, %v3084
        %v3086 = vpop.f32.mrf.mxu0
        %3087 = vdwg.mxu0
        %v3092 = vunpack.c.l.b16 %v3050
        %v3093 = vunpack.c.l.b16 %v3051
        %v3094 = vunpack.c.l.b16 %v3052
        %v3095 = vunpack.c.l.b16 %v3053
        %v3096 = vpack.c.b16 %v3093, %v3092
        %v3097 = vpack.c.b16 %v3095, %v3094
        %v3101 = vsel %vm2339, %v3049, 0
        %3103 = vmatpush.bf16.msra.mxu0 0
        %3104 = vmatpush.bf16.msra.mxu0 0
        %3105 = vmatpush.bf16.msra.mxu0 0
        %3106 = vmatpush.bf16.msra.mxu0 0
        %3107 = vmatpush.bf16.msra.mxu0 0
        %3108 = vmatpush.bf16.msra.mxu0 0
        %3109 = vmatpush.bf16.msra.mxu0 %v3097
        %3110 = vmatpush.bf16.msra.mxu0 %v3096
        %3111 = vmatmul.bf16.gmra.mxu0 %v3101
        %v3112 = vpop.f32.mrf.mxu0
        %v3113 = vadd.f32 %v3085, %v3112
        %v3114 = vpop.f32.mrf.mxu0
        %3115 = vdwg.mxu0
        %v3116 = vpack.c.bf16 %v3046, %v3046
        %s3117 = scalar_lea.vmem %s39, 32
        %v3118 = vld [vmem:[%s3117] sm:$0xf]
        %v3119 = vld [vmem:[%s3117 + $0x4] sm:$0xf]
        %v3120 = vld [vmem:[%s3117 + $0x8] sm:$0xf]
        %v3121 = vld [vmem:[%s3117 + $0xc] sm:$0xf]
        %v3126 = vunpack.c.l.b16 %v3118
        %v3127 = vunpack.c.l.b16 %v3119
        %v3128 = vunpack.c.l.b16 %v3120
        %v3129 = vunpack.c.l.b16 %v3121
        %v3130 = vpack.c.b16 %v3127, %v3126
        %v3131 = vpack.c.b16 %v3129, %v3128
        %v3135 = vsel %vm2339, %v3116, 0
        %3137 = vmatpush.bf16.msra.mxu0 0
        %3138 = vmatpush.bf16.msra.mxu0 0
        %3139 = vmatpush.bf16.msra.mxu0 0
        %3140 = vmatpush.bf16.msra.mxu0 0
        %3141 = vmatpush.bf16.msra.mxu0 0
        %3142 = vmatpush.bf16.msra.mxu0 0
        %3143 = vmatpush.bf16.msra.mxu0 %v3131
        %3144 = vmatpush.bf16.msra.mxu0 %v3130
        %3145 = vmatmul.bf16.gmra.mxu0 %v3135
        %v3146 = vpop.f32.mrf.mxu0
        %v3147 = vadd.f32 0.0, %v3146
        %v3148 = vpop.f32.mrf.mxu0
        %3149 = vdwg.mxu0
        %v3150 = vadd.f32 %v3113, %v3147
        %v3151 = vld [vmem:[%s41] sm:$0x1]
        %v3153 = vperm.slane %v3151, 0
        %v3155 = vmul.f32 %v3150, %v3153
        %v3156 = vld [vmem:[%s43] sm:$0x1]
        %v3158 = vperm.slane %v3156, 0
        %v3160 = vadd.f32 %v3155, %v3158
        %v3161 = vmax.f32 %v3160, 0.0
        %v3162 = vpack.c.bf16 %v3161, %v3161
        %v3163 = vpack.c.bf16 %v2333, %v2333
        %vm3164 = vcmask 64512
        %v3166 = vsel %vm3164, %v3163, 0
        %vm3168 = vcmask 1043456
        %v3170 = vsel %vm3168, %v3162, 0
        %3172 = vmatpush.bf16.msra.mxu0 0
        %3173 = vmatpush.bf16.msra.mxu0 0
        %3174 = vmatpush.bf16.msra.mxu0 0
        %3175 = vmatpush.bf16.msra.mxu0 0
        %3176 = vmatpush.bf16.msra.mxu0 0
        %3177 = vmatpush.bf16.msra.mxu0 0
        %3178 = vmatpush.bf16.msra.mxu0 0
        %3179 = vmatpush.bf16.msra.mxu0 %v3170
        %3180 = vmatmul.bf16.gmra.mxu0 %v3166
        %v3181 = vpop.f32.mrf.mxu0
        %v3182 = vadd.f32 0.0, %v3181
        %v3183 = vpop.f32.mrf.mxu0
        %3184 = vdwg.mxu0
        %v3185 = vpack.c.bf16 %v2373, %v2373
        %v3187 = vsel %vm3164, %v3185, 0
        %3189 = vmatpush.bf16.msra.mxu0 0
        %3190 = vmatpush.bf16.msra.mxu0 0
        %3191 = vmatpush.bf16.msra.mxu0 0
        %3192 = vmatpush.bf16.msra.mxu0 0
        %3193 = vmatpush.bf16.msra.mxu0 0
        %3194 = vmatpush.bf16.msra.mxu0 0
        %3195 = vmatpush.bf16.msra.mxu0 0
        %3196 = vmatpush.bf16.msra.mxu0 %v3170
        %3197 = vmatmul.bf16.gmra.mxu0 %v3187
        %v3198 = vpop.f32.mrf.mxu0
        %v3199 = vadd.f32 0.0, %v3198
        %v3200 = vpop.f32.mrf.mxu0
        %3201 = vdwg.mxu0
        %v3202 = vpack.c.bf16 %v3182, %v3182
        %v3203 = vld [vmem:[%s45] sm:$0xf]
        %v3204 = vld [vmem:[%s45 + $0x4] sm:$0xf]
        %v3205 = vld [vmem:[%s45 + $0x8] sm:$0xf]
        %v3206 = vld [vmem:[%s45 + $0xc] sm:$0xf]
        %s3207 = scalar_lea.vmem %s45, 16
        %v3208 = vld [vmem:[%s3207] sm:$0xf]
        %v3209 = vld [vmem:[%s3207 + $0x4] sm:$0xf]
        %v3210 = vld [vmem:[%s3207 + $0x8] sm:$0xf]
        %v3211 = vld [vmem:[%s3207 + $0xc] sm:$0xf]
        %v3216 = vunpack.c.l.b16 %v3208
        %v3217 = vunpack.c.l.b16 %v3209
        %v3218 = vunpack.c.l.b16 %v3210
        %v3219 = vunpack.c.l.b16 %v3211
        %v3220 = vpack.c.b16 %v3217, %v3216
        %v3221 = vpack.c.b16 %v3219, %v3218
        %v3224 = vsel %vm2339, %v3162, 0
        %3226 = vmatpush.bf16.msra.mxu0 0
        %3227 = vmatpush.bf16.msra.mxu0 0
        %3228 = vmatpush.bf16.msra.mxu0 0
        %3229 = vmatpush.bf16.msra.mxu0 0
        %3230 = vmatpush.bf16.msra.mxu0 0
        %3231 = vmatpush.bf16.msra.mxu0 0
        %3232 = vmatpush.bf16.msra.mxu0 %v3221
        %3233 = vmatpush.bf16.msra.mxu0 %v3220
        %3234 = vmatmul.bf16.gmra.mxu0 %v3224
        %v3235 = vpop.f32.mrf.mxu0
        %v3236 = vadd.f32 0.0, %v3235
        %v3237 = vpop.f32.mrf.mxu0
        %3238 = vdwg.mxu0
        %v3243 = vunpack.c.l.b16 %v3203
        %v3244 = vunpack.c.l.b16 %v3204
        %v3245 = vunpack.c.l.b16 %v3205
        %v3246 = vunpack.c.l.b16 %v3206
        %v3247 = vpack.c.b16 %v3244, %v3243
        %v3248 = vpack.c.b16 %v3246, %v3245
        %v3252 = vsel %vm2339, %v3202, 0
        %3254 = vmatpush.bf16.msra.mxu0 0
        %3255 = vmatpush.bf16.msra.mxu0 0
        %3256 = vmatpush.bf16.msra.mxu0 0
        %3257 = vmatpush.bf16.msra.mxu0 0
        %3258 = vmatpush.bf16.msra.mxu0 0
        %3259 = vmatpush.bf16.msra.mxu0 0
        %3260 = vmatpush.bf16.msra.mxu0 %v3248
        %3261 = vmatpush.bf16.msra.mxu0 %v3247
        %3262 = vmatmul.bf16.gmra.mxu0 %v3252
        %v3263 = vpop.f32.mrf.mxu0
        %v3264 = vadd.f32 %v3236, %v3263
        %v3265 = vpop.f32.mrf.mxu0
        %3266 = vdwg.mxu0
        %v3267 = vpack.c.bf16 %v3199, %v3199
        %s3268 = scalar_lea.vmem %s45, 32
        %v3269 = vld [vmem:[%s3268] sm:$0xf]
        %v3270 = vld [vmem:[%s3268 + $0x4] sm:$0xf]
        %v3271 = vld [vmem:[%s3268 + $0x8] sm:$0xf]
        %v3272 = vld [vmem:[%s3268 + $0xc] sm:$0xf]
        %v3277 = vunpack.c.l.b16 %v3269
        %v3278 = vunpack.c.l.b16 %v3270
        %v3279 = vunpack.c.l.b16 %v3271
        %v3280 = vunpack.c.l.b16 %v3272
        %v3281 = vpack.c.b16 %v3278, %v3277
        %v3282 = vpack.c.b16 %v3280, %v3279
        %v3286 = vsel %vm2339, %v3267, 0
        %3288 = vmatpush.bf16.msra.mxu0 0
        %3289 = vmatpush.bf16.msra.mxu0 0
        %3290 = vmatpush.bf16.msra.mxu0 0
        %3291 = vmatpush.bf16.msra.mxu0 0
        %3292 = vmatpush.bf16.msra.mxu0 0
        %3293 = vmatpush.bf16.msra.mxu0 0
        %3294 = vmatpush.bf16.msra.mxu0 %v3282
        %3295 = vmatpush.bf16.msra.mxu0 %v3281
        %3296 = vmatmul.bf16.gmra.mxu0 %v3286
        %v3297 = vpop.f32.mrf.mxu0
        %v3298 = vadd.f32 0.0, %v3297
        %v3299 = vpop.f32.mrf.mxu0
        %3300 = vdwg.mxu0
        %v3301 = vadd.f32 %v3264, %v3298
        %v3302 = vld [vmem:[%s47] sm:$0x1]
        %v3304 = vperm.slane %v3302, 0
        %v3306 = vmul.f32 %v3301, %v3304
        %v3307 = vld [vmem:[%s49] sm:$0x1]
        %v3309 = vperm.slane %v3307, 0
        %v3311 = vadd.f32 %v3306, %v3309
        %v3312 = vld [vmem:[%s51] sm:$0xf]
        %v3313 = vld [vmem:[%s51 + $0x4] sm:$0xf]
        %v3314 = vld [vmem:[%s51 + $0x8] sm:$0xf]
        %v3315 = vld [vmem:[%s51 + $0xc] sm:$0xf]
        %v3320 = vunpack.c.l.b16 %v3312
        %v3321 = vunpack.c.l.b16 %v3313
        %v3322 = vunpack.c.l.b16 %v3314
        %v3323 = vunpack.c.l.b16 %v3315
        %v3324 = vpack.c.b16 %v3321, %v3320
        %v3325 = vpack.c.b16 %v3323, %v3322
        %3328 = vmatpush.bf16.msra.mxu0 0
        %3329 = vmatpush.bf16.msra.mxu0 0
        %3330 = vmatpush.bf16.msra.mxu0 0
        %3331 = vmatpush.bf16.msra.mxu0 0
        %3332 = vmatpush.bf16.msra.mxu0 0
        %3333 = vmatpush.bf16.msra.mxu0 0
        %3334 = vmatpush.bf16.msra.mxu0 %v3325
        %3335 = vmatpush.bf16.msra.mxu0 %v3324
        %3336 = vmatmul.bf16.gmra.mxu0 %v3073
        %v3337 = vpop.f32.mrf.mxu0
        %v3338 = vadd.f32 0.0, %v3337
        %v3339 = vpop.f32.mrf.mxu0
        %3340 = vdwg.mxu0
        %v3341 = vld [vmem:[%s53] sm:$0x1]
        %v3343 = vperm.slane %v3341, 0
        %v3345 = vmul.f32 %v3338, %v3343
        %v3346 = vld [vmem:[%s55] sm:$0x1]
        %v3348 = vperm.slane %v3346, 0
        %v3350 = vadd.f32 %v3345, %v3348
        %v3351 = vadd.f32 %v3311, %v3350
        %v3352 = vmax.f32 %v3351, 0.0
        %v3353 = vpack.c.bf16 %v3352, %v3352
        %v3354 = vld [vmem:[%s57] sm:$0xf]
        %v3355 = vld [vmem:[%s57 + $0x4] sm:$0xf]
        %v3356 = vld [vmem:[%s57 + $0x8] sm:$0xf]
        %v3357 = vld [vmem:[%s57 + $0xc] sm:$0xf]
        %v3358 = vld [vmem:[%s59] sm:$0x1]
        %v3360 = vperm.slane %v3358, 0
        %v3366 = vunpack.c.l.b16 %v3354
        %v3367 = vunpack.c.l.b16 %v3355
        %v3368 = vunpack.c.l.b16 %v3356
        %v3369 = vunpack.c.l.b16 %v3357
        %v3370 = vpack.c.b16 %v3367, %v3366
        %v3371 = vpack.c.b16 %v3369, %v3368
        %v3375 = vsel %vm2339, %v3353, 0
        %3377 = vmatpush.bf16.msra.mxu0 0
        %3378 = vmatpush.bf16.msra.mxu0 0
        %3379 = vmatpush.bf16.msra.mxu0 0
        %3380 = vmatpush.bf16.msra.mxu0 0
        %3381 = vmatpush.bf16.msra.mxu0 0
        %3382 = vmatpush.bf16.msra.mxu0 0
        %3383 = vmatpush.bf16.msra.mxu0 %v3371
        %3384 = vmatpush.bf16.msra.mxu0 %v3370
        %3385 = vmatmul.bf16.gmra.mxu0 %v3375
        %v3386 = vpop.f32.mrf.mxu0
        %v3387 = vadd.f32 %v3360, %v3386
        %v3388 = vpop.f32.mrf.mxu0
        %3389 = vdwg.mxu0
        %v3390 = vpack.c.bf16 %v3387, %v3387
        %v3391 = vld [vmem:[%s67] sm:$0xf]
        %v3392 = vld [vmem:[%s67 + $0x4] sm:$0xf]
        %v3393 = vld [vmem:[%s67 + $0x8] sm:$0xf]
        %v3394 = vld [vmem:[%s67 + $0xc] sm:$0xf]
        %v3395 = vld [vmem:[%s69] sm:$0x1]
        %v3397 = vperm.slane %v3395, 0
        %v3403 = vunpack.c.l.b16 %v3391
        %v3404 = vunpack.c.l.b16 %v3392
        %v3405 = vunpack.c.l.b16 %v3393
        %v3406 = vunpack.c.l.b16 %v3394
        %v3407 = vpack.c.b16 %v3404, %v3403
        %v3408 = vpack.c.b16 %v3406, %v3405
        %v3412 = vsel %vm2339, %v3390, 0
        %3414 = vmatpush.bf16.msra.mxu0 0
        %3415 = vmatpush.bf16.msra.mxu0 0
        %3416 = vmatpush.bf16.msra.mxu0 0
        %3417 = vmatpush.bf16.msra.mxu0 0
        %3418 = vmatpush.bf16.msra.mxu0 0
        %3419 = vmatpush.bf16.msra.mxu0 0
        %3420 = vmatpush.bf16.msra.mxu0 %v3408
        %3421 = vmatpush.bf16.msra.mxu0 %v3407
        %3422 = vmatmul.bf16.gmra.mxu0 %v3412
        %v3423 = vpop.f32.mrf.mxu0
        %v3424 = vadd.f32 %v3397, %v3423
        %v3425 = vpop.f32.mrf.mxu0
        %3426 = vdwg.mxu0
        %v3427 = vld [vmem:[%s65] sm:$0xff]
        %v3428 = vld [vmem:[%s65 + $0x8] sm:$0xff]
        %v3429 = vld [vmem:[%s65 + $0x10] sm:$0xff]
        %v3430 = vld [vmem:[%s65 + $0x18] sm:$0xff]
        %v3431 = vld [vmem:[%s65 + $0x20] sm:$0xff]
        %v3432 = vld [vmem:[%s65 + $0x28] sm:$0xff]
        %v3433 = vld [vmem:[%s65 + $0x30] sm:$0xff]
        %v3434 = vld [vmem:[%s65 + $0x38] sm:$0xff]
        %v3435 = vld [vmem:[%s61] sm:$0xf]
        %v3436 = vld [vmem:[%s61 + $0x4] sm:$0xf]
        %v3437 = vld [vmem:[%s61 + $0x8] sm:$0xf]
        %v3438 = vld [vmem:[%s61 + $0xc] sm:$0xf]
        %v3439 = vld [vmem:[%s61 + $0x10] sm:$0xf]
        %v3440 = vld [vmem:[%s61 + $0x14] sm:$0xf]
        %v3441 = vld [vmem:[%s61 + $0x18] sm:$0xf]
        %v3442 = vld [vmem:[%s61 + $0x1c] sm:$0xf]
        %v3443 = vpack.c.bf16 %v3424, %v3424
        %v3452 = vunpack.c.l.b16 %v3435
        %v3453 = vunpack.c.l.b16 %v3436
        %v3454 = vunpack.c.l.b16 %v3437
        %v3455 = vunpack.c.l.b16 %v3438
        %v3456 = vunpack.c.l.b16 %v3439
        %v3457 = vunpack.c.l.b16 %v3440
        %v3458 = vunpack.c.l.b16 %v3441
        %v3459 = vunpack.c.l.b16 %v3442
        %v3460 = vpack.c.b16 %v3453, %v3452
        %v3461 = vpack.c.b16 %v3455, %v3454
        %v3462 = vpack.c.b16 %v3457, %v3456
        %v3463 = vpack.c.b16 %v3459, %v3458
        %v3465 = vsel %vm3164, %v3460, 0
        %v3468 = vsel %vm3164, %v3461, 0
        %v3471 = vsel %vm3164, %v3462, 0
        %v3474 = vsel %vm3164, %v3463, 0
        %v3477 = vsel %vm3168, %v3443, 0
        %3479 = vmatpush.bf16.msra.mxu0 0
        %3480 = vmatpush.bf16.msra.mxu0 0
        %3481 = vmatpush.bf16.msra.mxu0 0
        %3482 = vmatpush.bf16.msra.mxu0 0
        %3483 = vmatpush.bf16.msra.mxu0 0
        %3484 = vmatpush.bf16.msra.mxu0 0
        %3485 = vmatpush.bf16.msra.mxu0 0
        %3486 = vmatpush.bf16.msra.mxu0 %v3477
        %3487 = vmatmul.bf16.gmra.mxu0 %v3465
        %v3488 = vpop.f32.mrf.mxu0
        %v3489 = vadd.f32 0.0, %v3488
        %v3490 = vpop.f32.mrf.mxu0
        %v3491 = vadd.f32 0.0, %v3490
        %3492 = vmatmul.bf16.gmra.mxu0 %v3468
        %v3493 = vpop.f32.mrf.mxu0
        %v3494 = vadd.f32 0.0, %v3493
        %v3495 = vpop.f32.mrf.mxu0
        %v3496 = vadd.f32 0.0, %v3495
        %3497 = vmatmul.bf16.gmra.mxu0 %v3471
        %v3498 = vpop.f32.mrf.mxu0
        %v3499 = vadd.f32 0.0, %v3498
        %v3500 = vpop.f32.mrf.mxu0
        %v3501 = vadd.f32 0.0, %v3500
        %3502 = vmatmul.bf16.gmra.mxu0 %v3474
        %v3503 = vpop.f32.mrf.mxu0
        %v3504 = vadd.f32 0.0, %v3503
        %v3505 = vpop.f32.mrf.mxu0
        %v3506 = vadd.f32 0.0, %v3505
        %3507 = vdwg.mxu0
        %v3508 = vmul.f32 %v3489, %v3427
        %v3509 = vmul.f32 %v3491, %v3428
        %v3510 = vmul.f32 %v3494, %v3429
        %v3511 = vmul.f32 %v3496, %v3430
        %v3512 = vmul.f32 %v3499, %v3431
        %v3513 = vmul.f32 %v3501, %v3432
        %v3514 = vmul.f32 %v3504, %v3433
        %v3515 = vmul.f32 %v3506, %v3434
        %v3516 = vpack.c.bf16 %v3509, %v3508
        %v3517 = vpack.c.bf16 %v3511, %v3510
        %v3518 = vpack.c.bf16 %v3513, %v3512
        %v3519 = vpack.c.bf16 %v3515, %v3514
        %3521 = vrot.lane.b32.xlu0 %v3443, 96
        %v3522 = vpop.permute.xlu0 %3521
        %v3524 = vsel %vm2339, %v3516, 0
        %v3527 = vsel %vm2339, %v3517, 0
        %v3530 = vsel %vm2339, %v3518, 0
        %v3533 = vsel %vm2339, %v3519, 0
        %v3536 = vsel %vm2339, %v3522, 0
        %3538 = vmatpush.bf16.xpose.msra.mxu0 0
        %3539 = vmatpush.bf16.xpose.msra.mxu0 0
        %3540 = vmatpush.bf16.xpose.msra.mxu0 0
        %3541 = vmatpush.bf16.xpose.msra.mxu0 0
        %3542 = vmatpush.bf16.xpose.msra.mxu0 0
        %3543 = vmatpush.bf16.xpose.msra.mxu0 0
        %3544 = vmatpush.bf16.xpose.msra.mxu0 0
        %3545 = vmatpush.bf16.xpose.msra.mxu0 %v3536
        %3546 = vmatmul.bf16.gmra.mxu0 %v3524
        %v3547 = vpop.f32.mrf.mxu0
        %v3548 = vadd.f32 0.0, %v3547
        %v3549 = vpop.f32.mrf.mxu0
        %v3550 = vadd.f32 0.0, %v3549
        %3551 = vmatmul.bf16.gmra.mxu0 %v3527
        %v3552 = vpop.f32.mrf.mxu0
        %v3553 = vadd.f32 0.0, %v3552
        %v3554 = vpop.f32.mrf.mxu0
        %v3555 = vadd.f32 0.0, %v3554
        %3556 = vmatmul.bf16.gmra.mxu0 %v3530
        %v3557 = vpop.f32.mrf.mxu0
        %v3558 = vadd.f32 0.0, %v3557
        %v3559 = vpop.f32.mrf.mxu0
        %v3560 = vadd.f32 0.0, %v3559
        %3561 = vmatmul.bf16.gmra.mxu0 %v3533
        %v3562 = vpop.f32.mrf.mxu0
        %v3563 = vadd.f32 0.0, %v3562
        %v3564 = vpop.f32.mrf.mxu0
        %v3565 = vadd.f32 0.0, %v3564
        %3566 = vdwg.mxu0
        %v3567 = vsel %vm3164, %v3548, -inf
        %3568 = vmax.xlane.f32.xlu0 %v3567
        %v3569 = vpop.xlane.xlu0 %3568
        %v3570 = vsel %vm3164, %v3550, -inf
        %3571 = vmax.xlane.f32.xlu0 %v3570
        %v3572 = vpop.xlane.xlu0 %3571
        %v3573 = vsel %vm3164, %v3553, -inf
        %3574 = vmax.xlane.f32.xlu0 %v3573
        %v3575 = vpop.xlane.xlu0 %3574
        %v3576 = vsel %vm3164, %v3555, -inf
        %3577 = vmax.xlane.f32.xlu0 %v3576
        %v3578 = vpop.xlane.xlu0 %3577
        %v3579 = vsel %vm3164, %v3558, -inf
        %3580 = vmax.xlane.f32.xlu0 %v3579
        %v3581 = vpop.xlane.xlu0 %3580
        %v3582 = vsel %vm3164, %v3560, -inf
        %3583 = vmax.xlane.f32.xlu0 %v3582
        %v3584 = vpop.xlane.xlu0 %3583
        %v3585 = vsel %vm3164, %v3563, -inf
        %3586 = vmax.xlane.f32.xlu0 %v3585
        %v3587 = vpop.xlane.xlu0 %3586
        %v3588 = vsel %vm3164, %v3565, -inf
        %3589 = vmax.xlane.f32.xlu0 %v3588
        %v3590 = vpop.xlane.xlu0 %3589
        %v3591 = vsub.f32 %v3548, %v3569
        %v3592 = vsub.f32 %v3550, %v3572
        %v3593 = vsub.f32 %v3553, %v3575
        %v3594 = vsub.f32 %v3555, %v3578
        %v3595 = vsub.f32 %v3558, %v3581
        %v3596 = vsub.f32 %v3560, %v3584
        %v3597 = vsub.f32 %v3563, %v3587
        %v3598 = vsub.f32 %v3565, %v3590
        %v3599 = vmul.f32 %v3591, 1.442695
        %v3600 = vpow.pop %v3599
        %v3601 = vmul.f32 %v3592, 1.442695
        %v3602 = vpow.pop %v3601
        %v3603 = vmul.f32 %v3593, 1.442695
        %v3604 = vpow.pop %v3603
        %v3605 = vmul.f32 %v3594, 1.442695
        %v3606 = vpow.pop %v3605
        %v3607 = vmul.f32 %v3595, 1.442695
        %v3608 = vpow.pop %v3607
        %v3609 = vmul.f32 %v3596, 1.442695
        %v3610 = vpow.pop %v3609
        %v3611 = vmul.f32 %v3597, 1.442695
        %v3612 = vpow.pop %v3611
        %v3613 = vmul.f32 %v3598, 1.442695
        %v3614 = vpow.pop %v3613
        %v3615 = vsel %vm3164, %v3600, 0.0
        %3616 = vadd.xlane.f32.xlu0 %v3615
        %v3617 = vpop.xlane.xlu0 %3616
        %v3618 = vsel %vm3164, %v3602, 0.0
        %3619 = vadd.xlane.f32.xlu0 %v3618
        %v3620 = vpop.xlane.xlu0 %3619
        %v3621 = vsel %vm3164, %v3604, 0.0
        %3622 = vadd.xlane.f32.xlu0 %v3621
        %v3623 = vpop.xlane.xlu0 %3622
        %v3624 = vsel %vm3164, %v3606, 0.0
        %3625 = vadd.xlane.f32.xlu0 %v3624
        %v3626 = vpop.xlane.xlu0 %3625
        %v3627 = vsel %vm3164, %v3608, 0.0
        %3628 = vadd.xlane.f32.xlu0 %v3627
        %v3629 = vpop.xlane.xlu0 %3628
        %v3630 = vsel %vm3164, %v3610, 0.0
        %3631 = vadd.xlane.f32.xlu0 %v3630
        %v3632 = vpop.xlane.xlu0 %3631
        %v3633 = vsel %vm3164, %v3612, 0.0
        %3634 = vadd.xlane.f32.xlu0 %v3633
        %v3635 = vpop.xlane.xlu0 %3634
        %v3636 = vsel %vm3164, %v3614, 0.0
        %3637 = vadd.xlane.f32.xlu0 %v3636
        %v3638 = vpop.xlane.xlu0 %3637
        %v3639 = vrcp.pop %v3617
        %v3640 = vrcp.pop %v3620
        %v3641 = vrcp.pop %v3623
        %v3642 = vrcp.pop %v3626
        %v3643 = vrcp.pop %v3629
        %v3644 = vrcp.pop %v3632
        %v3645 = vrcp.pop %v3635
        %v3646 = vrcp.pop %v3638
        %v3647 = vmul.f32 %v3600, %v3639
        %v3648 = vmul.f32 %v3602, %v3640
        %v3649 = vmul.f32 %v3604, %v3641
        %v3650 = vmul.f32 %v3606, %v3642
        %v3651 = vmul.f32 %v3608, %v3643
        %v3652 = vmul.f32 %v3610, %v3644
        %v3653 = vmul.f32 %v3612, %v3645
        %v3654 = vmul.f32 %v3614, %v3646
        %v3655 = vpack.c.bf16 %v3648, %v3647
        %v3656 = vpack.c.bf16 %v3650, %v3649
        %v3657 = vpack.c.bf16 %v3652, %v3651
        %v3658 = vpack.c.bf16 %v3654, %v3653
        %3659 = vrot.lane.b32.xlu0 %v3443, 64
        %v3660 = vpop.permute.xlu0 %3659
        %v3662 = vsel %vm3164, %v3655, 0
        %v3665 = vsel %vm3164, %v3656, 0
        %v3668 = vsel %vm3164, %v3657, 0
        %v3671 = vsel %vm3164, %v3658, 0
        %v3674 = vsel %vm3168, %v3660, 0
        %3676 = vmatpush.bf16.msra.mxu0 0
        %3677 = vmatpush.bf16.msra.mxu0 0
        %3678 = vmatpush.bf16.msra.mxu0 0
        %3679 = vmatpush.bf16.msra.mxu0 0
        %3680 = vmatpush.bf16.msra.mxu0 0
        %3681 = vmatpush.bf16.msra.mxu0 0
        %3682 = vmatpush.bf16.msra.mxu0 0
        %3683 = vmatpush.bf16.msra.mxu0 %v3674
        %3684 = vmatmul.bf16.gmra.mxu0 %v3662
        %v3685 = vpop.f32.mrf.mxu0
        %v3686 = vadd.f32 0.0, %v3685
        %v3687 = vpop.f32.mrf.mxu0
        %v3688 = vadd.f32 0.0, %v3687
        %3689 = vmatmul.bf16.gmra.mxu0 %v3665
        %v3690 = vpop.f32.mrf.mxu0
        %v3691 = vadd.f32 0.0, %v3690
        %v3692 = vpop.f32.mrf.mxu0
        %v3693 = vadd.f32 0.0, %v3692
        %3694 = vmatmul.bf16.gmra.mxu0 %v3668
        %v3695 = vpop.f32.mrf.mxu0
        %v3696 = vadd.f32 0.0, %v3695
        %v3697 = vpop.f32.mrf.mxu0
        %v3698 = vadd.f32 0.0, %v3697
        %3699 = vmatmul.bf16.gmra.mxu0 %v3671
        %v3700 = vpop.f32.mrf.mxu0
        %v3701 = vadd.f32 0.0, %v3700
        %v3702 = vpop.f32.mrf.mxu0
        %v3703 = vadd.f32 0.0, %v3702
        %3704 = vdwg.mxu0
        %v3705 = vmul.f32 %v3686, %v3427
        %v3706 = vmul.f32 %v3688, %v3428
        %v3707 = vmul.f32 %v3691, %v3429
        %v3708 = vmul.f32 %v3693, %v3430
        %v3709 = vmul.f32 %v3696, %v3431
        %v3710 = vmul.f32 %v3698, %v3432
        %v3711 = vmul.f32 %v3701, %v3433
        %v3712 = vmul.f32 %v3703, %v3434
        %v3713 = vld [vmem:[%s63] sm:$0xf]
        %v3714 = vpack.c.bf16 %v3706, %v3705
        %v3715 = vpack.c.bf16 %v3708, %v3707
        %v3716 = vpack.c.bf16 %v3710, %v3709
        %v3717 = vpack.c.bf16 %v3712, %v3711
        %v3719 = vsel %vm2012, %v3713, 0
        %3721 = vmatpush.bf16.msra.mxu0 0
        %3722 = vmatpush.bf16.msra.mxu0 0
        %3723 = vmatpush.bf16.msra.mxu0 0
        %3724 = vmatpush.bf16.msra.mxu0 0
        %3725 = vmatpush.bf16.msra.mxu0 %v3717
        %3726 = vmatpush.bf16.msra.mxu0 %v3716
        %3727 = vmatpush.bf16.msra.mxu0 %v3715
        %3728 = vmatpush.bf16.msra.mxu0 %v3714
        %3729 = vmatmul.bf16.gmra.mxu0 %v3719
        %v3730 = vpop.f32.mrf.mxu0
        %v3731 = vadd.f32 0.0, %v3730
        %v3732 = vpop.f32.mrf.mxu0
        %3733 = vdwg.mxu0
        %v3734 = vpack.c.bf16 %v3731, %v3731
        %v3735 = vld [vmem:[%s71] sm:$0xf]
        %v3736 = vld [vmem:[%s71 + $0x4] sm:$0xf]
        %v3737 = vld [vmem:[%s71 + $0x8] sm:$0xf]
        %v3738 = vld [vmem:[%s71 + $0xc] sm:$0xf]
        %v3739 = vld [vmem:[#allocation2] sm:$0x1]
        %v3741 = vperm.slane %v3739, 0
        %v3747 = vunpack.c.l.b16 %v3735
        %v3748 = vunpack.c.l.b16 %v3736
        %v3749 = vunpack.c.l.b16 %v3737
        %v3750 = vunpack.c.l.b16 %v3738
        %v3751 = vpack.c.b16 %v3748, %v3747
        %v3752 = vpack.c.b16 %v3750, %v3749
        %v3756 = vsel %vm2339, %v3734, 0
        %3758 = vmatpush.bf16.msra.mxu0 0
        %3759 = vmatpush.bf16.msra.mxu0 0
        %3760 = vmatpush.bf16.msra.mxu0 0
        %3761 = vmatpush.bf16.msra.mxu0 0
        %3762 = vmatpush.bf16.msra.mxu0 0
        %3763 = vmatpush.bf16.msra.mxu0 0
        %3764 = vmatpush.bf16.msra.mxu0 %v3752
        %3765 = vmatpush.bf16.msra.mxu0 %v3751
        %3766 = vmatmul.bf16.gmra.mxu0 %v3756
        %v3767 = vpop.f32.mrf.mxu0
        %v3768 = vadd.f32 %v3741, %v3767
        %v3769 = vpop.f32.mrf.mxu0
        %3770 = vdwg.mxu0
        %v3771 = vadd.f32 %v3387, %v3768
        %v3772 = vld [vmem:[#allocation5] sm:$0x1]
        %v3773 = vld [vmem:[#allocation7] sm:$0x1]
        %v3774 = vsel %vm2339, %v3771, 0.0
        %3775 = vadd.xlane.f32.xlu0 %v3774
        %v3776 = vpop.xlane.xlu0 %3775
        %v3777 = vrcp.pop 32.0
        %v3778 = vmul.f32 32.0, %v3777
        %v3779 = vsub.f32 1.0, %v3778
        %v3780 = vmul.f32 %v3777, %v3779
        %v3781 = vadd.f32 %v3777, %v3780
        %vm3782 = vweird.f32 %v3777
        %v3783 = vsel %vm3782, %v3777, %v3781
        %v3784 = vmul.f32 %v3776, %v3783
        %v3785 = vsub.f32 %v3771, %v3784
        %v3786 = vmul.f32 %v3785, %v3785
        %v3787 = vsel %vm2339, %v3786, 0.0
        %3788 = vadd.xlane.f32.xlu0 %v3787
        %v3789 = vpop.xlane.xlu0 %3788
        %v3790 = vmul.f32 %v3789, %v3783
        %v3791 = vadd.f32 %v3790, 1e-05
        %v3792 = vrsqrt.pop %v3791
        %v3793 = vmul.f32 %v3792, %v3791
        %v3794 = vmul.f32 %v3793, %v3792
        %v3795 = vmul.f32 0.5, %v3794
        %v3796 = vsub.f32 1.5, %v3795
        %v3797 = vmul.f32 %v3792, %v3796
        %vm3798 = vweird.f32 %v3791
        %vm3799 = vweird.f32 %v3792
        %vm3800 = vmor %vm3798, %vm3799
        %v3801 = vsel %vm3800, %v3792, %v3797
        %v3802 = vmul.f32 %v3785, %v3801
        %v3804 = vperm.slane %v3772, 0
        %v3806 = vmul.f32 %v3802, %v3804
        %v3808 = vperm.slane %v3773, 0
        %v3810 = vadd.f32 %v3806, %v3808
        %v3811 = vpack.c.bf16 %v3810, %v3810
        %v3812 = vld [vmem:[%s79] sm:$0xf]
        %v3813 = vld [vmem:[%s79 + $0x4] sm:$0xf]
        %v3814 = vld [vmem:[%s79 + $0x8] sm:$0xf]
        %v3815 = vld [vmem:[%s79 + $0xc] sm:$0xf]
        %v3816 = vld [vmem:[#allocation8] sm:$0x1]
        %v3818 = vperm.slane %v3816, 0
        %v3824 = vunpack.c.l.b16 %v3812
        %v3825 = vunpack.c.l.b16 %v3813
        %v3826 = vunpack.c.l.b16 %v3814
        %v3827 = vunpack.c.l.b16 %v3815
        %v3828 = vpack.c.b16 %v3825, %v3824
        %v3829 = vpack.c.b16 %v3827, %v3826
        %v3833 = vsel %vm2339, %v3811, 0
        %3835 = vmatpush.bf16.msra.mxu0 0
        %3836 = vmatpush.bf16.msra.mxu0 0
        %3837 = vmatpush.bf16.msra.mxu0 0
        %3838 = vmatpush.bf16.msra.mxu0 0
        %3839 = vmatpush.bf16.msra.mxu0 0
        %3840 = vmatpush.bf16.msra.mxu0 0
        %3841 = vmatpush.bf16.msra.mxu0 %v3829
        %3842 = vmatpush.bf16.msra.mxu0 %v3828
        %3843 = vmatmul.bf16.gmra.mxu0 %v3833
        %v3844 = vpop.f32.mrf.mxu0
        %v3845 = vadd.f32 %v3818, %v3844
        %v3846 = vpop.f32.mrf.mxu0
        %3847 = vdwg.mxu0
        %v3848 = vmax.f32 %v3845, 0.0
        %v3849 = vpack.c.bf16 %v3848, %v3848
        %v3850 = vld [vmem:[%s83] sm:$0xf]
        %v3851 = vld [vmem:[%s83 + $0x4] sm:$0xf]
        %v3852 = vld [vmem:[%s83 + $0x8] sm:$0xf]
        %v3853 = vld [vmem:[%s83 + $0xc] sm:$0xf]
        %v3854 = vld [vmem:[%s83 + $0x10] sm:$0xf]
        %v3855 = vld [vmem:[%s83 + $0x14] sm:$0xf]
        %v3856 = vld [vmem:[%s83 + $0x18] sm:$0xf]
        %v3857 = vld [vmem:[%s83 + $0x1c] sm:$0xf]
        %v3858 = vld [vmem:[#allocation10] sm:$0x1]
        %v3860 = vperm.slane %v3858, 0
        %v3870 = vunpack.c.l.b16 %v3850
        %v3871 = vunpack.c.l.b16 %v3851
        %v3872 = vunpack.c.l.b16 %v3852
        %v3873 = vunpack.c.l.b16 %v3853
        %v3874 = vunpack.c.l.b16 %v3854
        %v3875 = vunpack.c.l.b16 %v3855
        %v3876 = vunpack.c.l.b16 %v3856
        %v3877 = vunpack.c.l.b16 %v3857
        %v3878 = vpack.c.b16 %v3871, %v3870
        %v3879 = vpack.c.b16 %v3873, %v3872
        %v3880 = vpack.c.b16 %v3875, %v3874
        %v3881 = vpack.c.b16 %v3877, %v3876
        %v3887 = vsel %vm2012, %v3849, 0
        %3889 = vmatpush.bf16.msra.mxu0 0
        %3890 = vmatpush.bf16.msra.mxu0 0
        %3891 = vmatpush.bf16.msra.mxu0 0
        %3892 = vmatpush.bf16.msra.mxu0 0
        %3893 = vmatpush.bf16.msra.mxu0 %v3881
        %3894 = vmatpush.bf16.msra.mxu0 %v3880
        %3895 = vmatpush.bf16.msra.mxu0 %v3879
        %3896 = vmatpush.bf16.msra.mxu0 %v3878
        %3897 = vmatmul.bf16.gmra.mxu0 %v3887
        %v3898 = vpop.f32.mrf.mxu0
        %v3899 = vadd.f32 %v3860, %v3898
        %v3900 = vpop.f32.mrf.mxu0
        %3901 = vdwg.mxu0
        %v3902 = vadd.f32 %v3810, %v3899
        %v3903 = vld [vmem:[#allocation11] sm:$0x1]
        %v3904 = vld [vmem:[#allocation13] sm:$0x1]
        %v3905 = vsel %vm2339, %v3902, 0.0
        %3906 = vadd.xlane.f32.xlu0 %v3905
        %v3907 = vpop.xlane.xlu0 %3906
        %v3908 = vmul.f32 %v3907, %v3783
        %v3909 = vsub.f32 %v3902, %v3908
        %v3910 = vmul.f32 %v3909, %v3909
        %v3911 = vsel %vm2339, %v3910, 0.0
        %3912 = vadd.xlane.f32.xlu0 %v3911
        %v3913 = vpop.xlane.xlu0 %3912
        %v3914 = vmul.f32 %v3913, %v3783
        %v3915 = vadd.f32 %v3914, 1e-05
        %v3916 = vrsqrt.pop %v3915
        %v3917 = vmul.f32 %v3916, %v3915
        %v3918 = vmul.f32 %v3917, %v3916
        %v3919 = vmul.f32 0.5, %v3918
        %v3920 = vsub.f32 1.5, %v3919
        %v3921 = vmul.f32 %v3916, %v3920
        %vm3922 = vweird.f32 %v3915
        %vm3923 = vweird.f32 %v3916
        %vm3924 = vmor %vm3922, %vm3923
        %v3925 = vsel %vm3924, %v3916, %v3921
        %v3926 = vmul.f32 %v3909, %v3925
        %v3928 = vperm.slane %v3903, 0
        %v3930 = vmul.f32 %v3926, %v3928
        %v3932 = vperm.slane %v3904, 0
        %v3934 = vadd.f32 %v3930, %v3932
        %v3935 = vpack.c.bf16 %v3934, %v3934
        %v3936 = vld [vmem:[%s91] sm:$0xf]
        %v3937 = vld [vmem:[%s91 + $0x4] sm:$0xf]
        %v3938 = vld [vmem:[%s91 + $0x8] sm:$0xf]
        %v3939 = vld [vmem:[%s91 + $0xc] sm:$0xf]
        %v3940 = vld [vmem:[#allocation14] sm:$0x1]
        %v3942 = vperm.slane %v3940, 0
        %v3948 = vunpack.c.l.b16 %v3936
        %v3949 = vunpack.c.l.b16 %v3937
        %v3950 = vunpack.c.l.b16 %v3938
        %v3951 = vunpack.c.l.b16 %v3939
        %v3952 = vpack.c.b16 %v3949, %v3948
        %v3953 = vpack.c.b16 %v3951, %v3950
        %v3957 = vsel %vm2339, %v3935, 0
        %3959 = vmatpush.bf16.msra.mxu0 0
        %3960 = vmatpush.bf16.msra.mxu0 0
        %3961 = vmatpush.bf16.msra.mxu0 0
        %3962 = vmatpush.bf16.msra.mxu0 0
        %3963 = vmatpush.bf16.msra.mxu0 0
        %3964 = vmatpush.bf16.msra.mxu0 0
        %3965 = vmatpush.bf16.msra.mxu0 %v3953
        %3966 = vmatpush.bf16.msra.mxu0 %v3952
        %3967 = vmatmul.bf16.gmra.mxu0 %v3957
        %v3968 = vpop.f32.mrf.mxu0
        %v3969 = vadd.f32 %v3942, %v3968
        %v3970 = vpop.f32.mrf.mxu0
        %3971 = vdwg.mxu0
        %v3972 = vpack.c.bf16 %v3969, %v3969
        %v3974 = vsel %vm3168, %v3972, 0
        %3976 = vmatpush.bf16.msra.mxu0 0
        %3977 = vmatpush.bf16.msra.mxu0 0
        %3978 = vmatpush.bf16.msra.mxu0 0
        %3979 = vmatpush.bf16.msra.mxu0 0
        %3980 = vmatpush.bf16.msra.mxu0 0
        %3981 = vmatpush.bf16.msra.mxu0 0
        %3982 = vmatpush.bf16.msra.mxu0 0
        %3983 = vmatpush.bf16.msra.mxu0 %v3974
        %3984 = vmatmul.bf16.gmra.mxu0 %v3465
        %v3985 = vpop.f32.mrf.mxu0
        %v3986 = vadd.f32 0.0, %v3985
        %v3987 = vpop.f32.mrf.mxu0
        %v3988 = vadd.f32 0.0, %v3987
        %3989 = vmatmul.bf16.gmra.mxu0 %v3468
        %v3990 = vpop.f32.mrf.mxu0
        %v3991 = vadd.f32 0.0, %v3990
        %v3992 = vpop.f32.mrf.mxu0
        %v3993 = vadd.f32 0.0, %v3992
        %3994 = vmatmul.bf16.gmra.mxu0 %v3471
        %v3995 = vpop.f32.mrf.mxu0
        %v3996 = vadd.f32 0.0, %v3995
        %v3997 = vpop.f32.mrf.mxu0
        %v3998 = vadd.f32 0.0, %v3997
        %3999 = vmatmul.bf16.gmra.mxu0 %v3474
        %v4000 = vpop.f32.mrf.mxu0
        %v4001 = vadd.f32 0.0, %v4000
        %v4002 = vpop.f32.mrf.mxu0
        %v4003 = vadd.f32 0.0, %v4002
        %4004 = vdwg.mxu0
        %v4005 = vmul.f32 %v3986, %v3427
        %v4006 = vmul.f32 %v3988, %v3428
        %v4007 = vmul.f32 %v3991, %v3429
        %v4008 = vmul.f32 %v3993, %v3430
        %v4009 = vmul.f32 %v3996, %v3431
        %v4010 = vmul.f32 %v3998, %v3432
        %v4011 = vmul.f32 %v4001, %v3433
        %v4012 = vmul.f32 %v4003, %v3434
        %v4013 = vpack.c.bf16 %v4006, %v4005
        %v4014 = vpack.c.bf16 %v4008, %v4007
        %v4015 = vpack.c.bf16 %v4010, %v4009
        %v4016 = vpack.c.bf16 %v4012, %v4011
        %4018 = vrot.lane.b32.xlu0 %v3972, 96
        %v4019 = vpop.permute.xlu0 %4018
        %v4021 = vsel %vm2339, %v4013, 0
        %v4024 = vsel %vm2339, %v4014, 0
        %v4027 = vsel %vm2339, %v4015, 0
        %v4030 = vsel %vm2339, %v4016, 0
        %v4033 = vsel %vm2339, %v4019, 0
        %4035 = vmatpush.bf16.xpose.msra.mxu0 0
        %4036 = vmatpush.bf16.xpose.msra.mxu0 0
        %4037 = vmatpush.bf16.xpose.msra.mxu0 0
        %4038 = vmatpush.bf16.xpose.msra.mxu0 0
        %4039 = vmatpush.bf16.xpose.msra.mxu0 0
        %4040 = vmatpush.bf16.xpose.msra.mxu0 0
        %4041 = vmatpush.bf16.xpose.msra.mxu0 0
        %4042 = vmatpush.bf16.xpose.msra.mxu0 %v4033
        %4043 = vmatmul.bf16.gmra.mxu0 %v4021
        %v4044 = vpop.f32.mrf.mxu0
        %v4045 = vadd.f32 0.0, %v4044
        %v4046 = vpop.f32.mrf.mxu0
        %v4047 = vadd.f32 0.0, %v4046
        %4048 = vmatmul.bf16.gmra.mxu0 %v4024
        %v4049 = vpop.f32.mrf.mxu0
        %v4050 = vadd.f32 0.0, %v4049
        %v4051 = vpop.f32.mrf.mxu0
        %v4052 = vadd.f32 0.0, %v4051
        %4053 = vmatmul.bf16.gmra.mxu0 %v4027
        %v4054 = vpop.f32.mrf.mxu0
        %v4055 = vadd.f32 0.0, %v4054
        %v4056 = vpop.f32.mrf.mxu0
        %v4057 = vadd.f32 0.0, %v4056
        %4058 = vmatmul.bf16.gmra.mxu0 %v4030
        %v4059 = vpop.f32.mrf.mxu0
        %v4060 = vadd.f32 0.0, %v4059
        %v4061 = vpop.f32.mrf.mxu0
        %v4062 = vadd.f32 0.0, %v4061
        %4063 = vdwg.mxu0
        %v4064 = vsel %vm3164, %v4045, -inf
        %4065 = vmax.xlane.f32.xlu0 %v4064
        %v4066 = vpop.xlane.xlu0 %4065
        %v4067 = vsel %vm3164, %v4047, -inf
        %4068 = vmax.xlane.f32.xlu0 %v4067
        %v4069 = vpop.xlane.xlu0 %4068
        %v4070 = vsel %vm3164, %v4050, -inf
        %4071 = vmax.xlane.f32.xlu0 %v4070
        %v4072 = vpop.xlane.xlu0 %4071
        %v4073 = vsel %vm3164, %v4052, -inf
        %4074 = vmax.xlane.f32.xlu0 %v4073
        %v4075 = vpop.xlane.xlu0 %4074
        %v4076 = vsel %vm3164, %v4055, -inf
        %4077 = vmax.xlane.f32.xlu0 %v4076
        %v4078 = vpop.xlane.xlu0 %4077
        %v4079 = vsel %vm3164, %v4057, -inf
        %4080 = vmax.xlane.f32.xlu0 %v4079
        %v4081 = vpop.xlane.xlu0 %4080
        %v4082 = vsel %vm3164, %v4060, -inf
        %4083 = vmax.xlane.f32.xlu0 %v4082
        %v4084 = vpop.xlane.xlu0 %4083
        %v4085 = vsel %vm3164, %v4062, -inf
        %4086 = vmax.xlane.f32.xlu0 %v4085
        %v4087 = vpop.xlane.xlu0 %4086
        %v4088 = vsub.f32 %v4045, %v4066
        %v4089 = vsub.f32 %v4047, %v4069
        %v4090 = vsub.f32 %v4050, %v4072
        %v4091 = vsub.f32 %v4052, %v4075
        %v4092 = vsub.f32 %v4055, %v4078
        %v4093 = vsub.f32 %v4057, %v4081
        %v4094 = vsub.f32 %v4060, %v4084
        %v4095 = vsub.f32 %v4062, %v4087
        %v4096 = vmul.f32 %v4088, 1.442695
        %v4097 = vpow.pop %v4096
        %v4098 = vmul.f32 %v4089, 1.442695
        %v4099 = vpow.pop %v4098
        %v4100 = vmul.f32 %v4090, 1.442695
        %v4101 = vpow.pop %v4100
        %v4102 = vmul.f32 %v4091, 1.442695
        %v4103 = vpow.pop %v4102
        %v4104 = vmul.f32 %v4092, 1.442695
        %v4105 = vpow.pop %v4104
        %v4106 = vmul.f32 %v4093, 1.442695
        %v4107 = vpow.pop %v4106
        %v4108 = vmul.f32 %v4094, 1.442695
        %v4109 = vpow.pop %v4108
        %v4110 = vmul.f32 %v4095, 1.442695
        %v4111 = vpow.pop %v4110
        %v4112 = vsel %vm3164, %v4097, 0.0
        %4113 = vadd.xlane.f32.xlu0 %v4112
        %v4114 = vpop.xlane.xlu0 %4113
        %v4115 = vsel %vm3164, %v4099, 0.0
        %4116 = vadd.xlane.f32.xlu0 %v4115
        %v4117 = vpop.xlane.xlu0 %4116
        %v4118 = vsel %vm3164, %v4101, 0.0
        %4119 = vadd.xlane.f32.xlu0 %v4118
        %v4120 = vpop.xlane.xlu0 %4119
        %v4121 = vsel %vm3164, %v4103, 0.0
        %4122 = vadd.xlane.f32.xlu0 %v4121
        %v4123 = vpop.xlane.xlu0 %4122
        %v4124 = vsel %vm3164, %v4105, 0.0
        %4125 = vadd.xlane.f32.xlu0 %v4124
        %v4126 = vpop.xlane.xlu0 %4125
        %v4127 = vsel %vm3164, %v4107, 0.0
        %4128 = vadd.xlane.f32.xlu0 %v4127
        %v4129 = vpop.xlane.xlu0 %4128
        %v4130 = vsel %vm3164, %v4109, 0.0
        %4131 = vadd.xlane.f32.xlu0 %v4130
        %v4132 = vpop.xlane.xlu0 %4131
        %v4133 = vsel %vm3164, %v4111, 0.0
        %4134 = vadd.xlane.f32.xlu0 %v4133
        %v4135 = vpop.xlane.xlu0 %4134
        %v4136 = vrcp.pop %v4114
        %v4137 = vrcp.pop %v4117
        %v4138 = vrcp.pop %v4120
        %v4139 = vrcp.pop %v4123
        %v4140 = vrcp.pop %v4126
        %v4141 = vrcp.pop %v4129
        %v4142 = vrcp.pop %v4132
        %v4143 = vrcp.pop %v4135
        %v4144 = vmul.f32 %v4097, %v4136
        %v4145 = vmul.f32 %v4099, %v4137
        %v4146 = vmul.f32 %v4101, %v4138
        %v4147 = vmul.f32 %v4103, %v4139
        %v4148 = vmul.f32 %v4105, %v4140
        %v4149 = vmul.f32 %v4107, %v4141
        %v4150 = vmul.f32 %v4109, %v4142
        %v4151 = vmul.f32 %v4111, %v4143
        %v4152 = vpack.c.bf16 %v4145, %v4144
        %v4153 = vpack.c.bf16 %v4147, %v4146
        %v4154 = vpack.c.bf16 %v4149, %v4148
        %v4155 = vpack.c.bf16 %v4151, %v4150
        %4156 = vrot.lane.b32.xlu0 %v3972, 64
        %v4157 = vpop.permute.xlu0 %4156
        %v4159 = vsel %vm3164, %v4152, 0
        %v4162 = vsel %vm3164, %v4153, 0
        %v4165 = vsel %vm3164, %v4154, 0
        %v4168 = vsel %vm3164, %v4155, 0
        %v4171 = vsel %vm3168, %v4157, 0
        %4173 = vmatpush.bf16.msra.mxu0 0
        %4174 = vmatpush.bf16.msra.mxu0 0
        %4175 = vmatpush.bf16.msra.mxu0 0
        %4176 = vmatpush.bf16.msra.mxu0 0
        %4177 = vmatpush.bf16.msra.mxu0 0
        %4178 = vmatpush.bf16.msra.mxu0 0
        %4179 = vmatpush.bf16.msra.mxu0 0
        %4180 = vmatpush.bf16.msra.mxu0 %v4171
        %4181 = vmatmul.bf16.gmra.mxu0 %v4159
        %v4182 = vpop.f32.mrf.mxu0
        %v4183 = vadd.f32 0.0, %v4182
        %v4184 = vpop.f32.mrf.mxu0
        %v4185 = vadd.f32 0.0, %v4184
        %4186 = vmatmul.bf16.gmra.mxu0 %v4162
        %v4187 = vpop.f32.mrf.mxu0
        %v4188 = vadd.f32 0.0, %v4187
        %v4189 = vpop.f32.mrf.mxu0
        %v4190 = vadd.f32 0.0, %v4189
        %4191 = vmatmul.bf16.gmra.mxu0 %v4165
        %v4192 = vpop.f32.mrf.mxu0
        %v4193 = vadd.f32 0.0, %v4192
        %v4194 = vpop.f32.mrf.mxu0
        %v4195 = vadd.f32 0.0, %v4194
        %4196 = vmatmul.bf16.gmra.mxu0 %v4168
        %v4197 = vpop.f32.mrf.mxu0
        %v4198 = vadd.f32 0.0, %v4197
        %v4199 = vpop.f32.mrf.mxu0
        %v4200 = vadd.f32 0.0, %v4199
        %4201 = vdwg.mxu0
        %v4202 = vmul.f32 %v4183, %v3427
        %v4203 = vmul.f32 %v4185, %v3428
        %v4204 = vmul.f32 %v4188, %v3429
        %v4205 = vmul.f32 %v4190, %v3430
        %v4206 = vmul.f32 %v4193, %v3431
        %v4207 = vmul.f32 %v4195, %v3432
        %v4208 = vmul.f32 %v4198, %v3433
        %v4209 = vmul.f32 %v4200, %v3434
        %v4210 = vpack.c.bf16 %v4203, %v4202
        %v4211 = vpack.c.bf16 %v4205, %v4204
        %v4212 = vpack.c.bf16 %v4207, %v4206
        %v4213 = vpack.c.bf16 %v4209, %v4208
        %4214 = vmatpush.bf16.msra.mxu0 0
        %4215 = vmatpush.bf16.msra.mxu0 0
        %4216 = vmatpush.bf16.msra.mxu0 0
        %4217 = vmatpush.bf16.msra.mxu0 0
        %4218 = vmatpush.bf16.msra.mxu0 %v4213
        %4219 = vmatpush.bf16.msra.mxu0 %v4212
        %4220 = vmatpush.bf16.msra.mxu0 %v4211
        %4221 = vmatpush.bf16.msra.mxu0 %v4210
        %4222 = vmatmul.bf16.gmra.mxu0 %v3719
        %v4223 = vpop.f32.mrf.mxu0
        %v4224 = vadd.f32 0.0, %v4223
        %v4225 = vpop.f32.mrf.mxu0
        %4226 = vdwg.mxu0
        %v4227 = vpack.c.bf16 %v4224, %v4224
        %v4228 = vld [vmem:[%s95] sm:$0xf]
        %v4229 = vld [vmem:[%s95 + $0x4] sm:$0xf]
        %v4230 = vld [vmem:[%s95 + $0x8] sm:$0xf]
        %v4231 = vld [vmem:[%s95 + $0xc] sm:$0xf]
        %v4232 = vld [vmem:[#allocation16] sm:$0x1]
        %v4234 = vperm.slane %v4232, 0
        %v4240 = vunpack.c.l.b16 %v4228
        %v4241 = vunpack.c.l.b16 %v4229
        %v4242 = vunpack.c.l.b16 %v4230
        %v4243 = vunpack.c.l.b16 %v4231
        %v4244 = vpack.c.b16 %v4241, %v4240
        %v4245 = vpack.c.b16 %v4243, %v4242
        %v4249 = vsel %vm2339, %v4227, 0
        %4251 = vmatpush.bf16.msra.mxu0 0
        %4252 = vmatpush.bf16.msra.mxu0 0
        %4253 = vmatpush.bf16.msra.mxu0 0
        %4254 = vmatpush.bf16.msra.mxu0 0
        %4255 = vmatpush.bf16.msra.mxu0 0
        %4256 = vmatpush.bf16.msra.mxu0 0
        %4257 = vmatpush.bf16.msra.mxu0 %v4245
        %4258 = vmatpush.bf16.msra.mxu0 %v4244
        %4259 = vmatmul.bf16.gmra.mxu0 %v4249
        %v4260 = vpop.f32.mrf.mxu0
        %v4261 = vadd.f32 %v4234, %v4260
        %v4262 = vpop.f32.mrf.mxu0
        %4263 = vdwg.mxu0
        %v4264 = vadd.f32 %v3934, %v4261
        %v4265 = vld [vmem:[#allocation17] sm:$0x1]
        %v4266 = vld [vmem:[#allocation19] sm:$0x1]
        %v4267 = vsel %vm2339, %v4264, 0.0
        %4268 = vadd.xlane.f32.xlu0 %v4267
        %v4269 = vpop.xlane.xlu0 %4268
        %v4270 = vmul.f32 %v4269, %v3783
        %v4271 = vsub.f32 %v4264, %v4270
        %v4272 = vmul.f32 %v4271, %v4271
        %v4273 = vsel %vm2339, %v4272, 0.0
        %4274 = vadd.xlane.f32.xlu0 %v4273
        %v4275 = vpop.xlane.xlu0 %4274
        %v4276 = vmul.f32 %v4275, %v3783
        %v4277 = vadd.f32 %v4276, 1e-05
        %v4278 = vrsqrt.pop %v4277
        %v4279 = vmul.f32 %v4278, %v4277
        %v4280 = vmul.f32 %v4279, %v4278
        %v4281 = vmul.f32 0.5, %v4280
        %v4282 = vsub.f32 1.5, %v4281
        %v4283 = vmul.f32 %v4278, %v4282
        %vm4284 = vweird.f32 %v4277
        %vm4285 = vweird.f32 %v4278
        %vm4286 = vmor %vm4284, %vm4285
        %v4287 = vsel %vm4286, %v4278, %v4283
        %v4288 = vmul.f32 %v4271, %v4287
        %v4290 = vperm.slane %v4265, 0
        %v4292 = vmul.f32 %v4288, %v4290
        %v4294 = vperm.slane %v4266, 0
        %v4296 = vadd.f32 %v4292, %v4294
        %v4297 = vpack.c.bf16 %v4296, %v4296
        %v4298 = vld [vmem:[%s103] sm:$0xf]
        %v4299 = vld [vmem:[%s103 + $0x4] sm:$0xf]
        %v4300 = vld [vmem:[%s103 + $0x8] sm:$0xf]
        %v4301 = vld [vmem:[%s103 + $0xc] sm:$0xf]
        %v4302 = vld [vmem:[#allocation20] sm:$0x1]
        %v4304 = vperm.slane %v4302, 0
        %v4310 = vunpack.c.l.b16 %v4298
        %v4311 = vunpack.c.l.b16 %v4299
        %v4312 = vunpack.c.l.b16 %v4300
        %v4313 = vunpack.c.l.b16 %v4301
        %v4314 = vpack.c.b16 %v4311, %v4310
        %v4315 = vpack.c.b16 %v4313, %v4312
        %v4319 = vsel %vm2339, %v4297, 0
        %4321 = vmatpush.bf16.msra.mxu0 0
        %4322 = vmatpush.bf16.msra.mxu0 0
        %4323 = vmatpush.bf16.msra.mxu0 0
        %4324 = vmatpush.bf16.msra.mxu0 0
        %4325 = vmatpush.bf16.msra.mxu0 0
        %4326 = vmatpush.bf16.msra.mxu0 0
        %4327 = vmatpush.bf16.msra.mxu0 %v4315
        %4328 = vmatpush.bf16.msra.mxu0 %v4314
        %4329 = vmatmul.bf16.gmra.mxu0 %v4319
        %v4330 = vpop.f32.mrf.mxu0
        %v4331 = vadd.f32 %v4304, %v4330
        %v4332 = vpop.f32.mrf.mxu0
        %4333 = vdwg.mxu0
        %v4334 = vmax.f32 %v4331, 0.0
        %v4335 = vpack.c.bf16 %v4334, %v4334
        %v4336 = vld [vmem:[%s107] sm:$0xf]
        %v4337 = vld [vmem:[%s107 + $0x4] sm:$0xf]
        %v4338 = vld [vmem:[%s107 + $0x8] sm:$0xf]
        %v4339 = vld [vmem:[%s107 + $0xc] sm:$0xf]
        %v4340 = vld [vmem:[%s107 + $0x10] sm:$0xf]
        %v4341 = vld [vmem:[%s107 + $0x14] sm:$0xf]
        %v4342 = vld [vmem:[%s107 + $0x18] sm:$0xf]
        %v4343 = vld [vmem:[%s107 + $0x1c] sm:$0xf]
        %v4344 = vld [vmem:[#allocation22] sm:$0x1]
        %v4346 = vperm.slane %v4344, 0
        %v4356 = vunpack.c.l.b16 %v4336
        %v4357 = vunpack.c.l.b16 %v4337
        %v4358 = vunpack.c.l.b16 %v4338
        %v4359 = vunpack.c.l.b16 %v4339
        %v4360 = vunpack.c.l.b16 %v4340
        %v4361 = vunpack.c.l.b16 %v4341
        %v4362 = vunpack.c.l.b16 %v4342
        %v4363 = vunpack.c.l.b16 %v4343
        %v4364 = vpack.c.b16 %v4357, %v4356
        %v4365 = vpack.c.b16 %v4359, %v4358
        %v4366 = vpack.c.b16 %v4361, %v4360
        %v4367 = vpack.c.b16 %v4363, %v4362
        %v4373 = vsel %vm2012, %v4335, 0
        %4375 = vmatpush.bf16.msra.mxu0 0
        %4376 = vmatpush.bf16.msra.mxu0 0
        %4377 = vmatpush.bf16.msra.mxu0 0
        %4378 = vmatpush.bf16.msra.mxu0 0
        %4379 = vmatpush.bf16.msra.mxu0 %v4367
        %4380 = vmatpush.bf16.msra.mxu0 %v4366
        %4381 = vmatpush.bf16.msra.mxu0 %v4365
        %4382 = vmatpush.bf16.msra.mxu0 %v4364
        %4383 = vmatmul.bf16.gmra.mxu0 %v4373
        %v4384 = vpop.f32.mrf.mxu0
        %v4385 = vadd.f32 %v4346, %v4384
        %v4386 = vpop.f32.mrf.mxu0
        %4387 = vdwg.mxu0
        %v4388 = vadd.f32 %v4296, %v4385
        %v4389 = vld [vmem:[#allocation23] sm:$0x1]
        %v4390 = vld [vmem:[#allocation25] sm:$0x1]
        %v4391 = vsel %vm2339, %v4388, 0.0
        %4392 = vadd.xlane.f32.xlu0 %v4391
        %v4393 = vpop.xlane.xlu0 %4392
        %v4394 = vmul.f32 %v4393, %v3783
        %v4395 = vsub.f32 %v4388, %v4394
        %v4396 = vmul.f32 %v4395, %v4395
        %v4397 = vsel %vm2339, %v4396, 0.0
        %4398 = vadd.xlane.f32.xlu0 %v4397
        %v4399 = vpop.xlane.xlu0 %4398
        %v4400 = vmul.f32 %v4399, %v3783
        %v4401 = vadd.f32 %v4400, 1e-05
        %v4402 = vrsqrt.pop %v4401
        %v4403 = vmul.f32 %v4402, %v4401
        %v4404 = vmul.f32 %v4403, %v4402
        %v4405 = vmul.f32 0.5, %v4404
        %v4406 = vsub.f32 1.5, %v4405
        %v4407 = vmul.f32 %v4402, %v4406
        %vm4408 = vweird.f32 %v4401
        %vm4409 = vweird.f32 %v4402
        %vm4410 = vmor %vm4408, %vm4409
        %v4411 = vsel %vm4410, %v4402, %v4407
        %v4412 = vmul.f32 %v4395, %v4411
        %v4414 = vperm.slane %v4389, 0
        %v4416 = vmul.f32 %v4412, %v4414
        %v4418 = vperm.slane %v4390, 0
        %v4420 = vadd.f32 %v4416, %v4418
        %v4421 = vpack.c.bf16 %v4420, %v4420
        %v4422 = vld [vmem:[%s115] sm:$0xf]
        %v4423 = vld [vmem:[%s115 + $0x4] sm:$0xf]
        %v4424 = vld [vmem:[%s115 + $0x8] sm:$0xf]
        %v4425 = vld [vmem:[%s115 + $0xc] sm:$0xf]
        %v4426 = vld [vmem:[#allocation26] sm:$0x1]
        %v4428 = vperm.slane %v4426, 0
        %v4434 = vunpack.c.l.b16 %v4422
        %v4435 = vunpack.c.l.b16 %v4423
        %v4436 = vunpack.c.l.b16 %v4424
        %v4437 = vunpack.c.l.b16 %v4425
        %v4438 = vpack.c.b16 %v4435, %v4434
        %v4439 = vpack.c.b16 %v4437, %v4436
        %v4443 = vsel %vm2339, %v4421, 0
        %4445 = vmatpush.bf16.msra.mxu0 0
        %4446 = vmatpush.bf16.msra.mxu0 0
        %4447 = vmatpush.bf16.msra.mxu0 0
        %4448 = vmatpush.bf16.msra.mxu0 0
        %4449 = vmatpush.bf16.msra.mxu0 0
        %4450 = vmatpush.bf16.msra.mxu0 0
        %4451 = vmatpush.bf16.msra.mxu0 %v4439
        %4452 = vmatpush.bf16.msra.mxu0 %v4438
        %4453 = vmatmul.bf16.gmra.mxu0 %v4443
        %v4454 = vpop.f32.mrf.mxu0
        %v4455 = vadd.f32 %v4428, %v4454
        %v4456 = vpop.f32.mrf.mxu0
        %4457 = vdwg.mxu0
        %vm4458 = vcmask 654336
        %4459 = vst.msk [vmem:[%s1968] sm:$0xff] %vm4458, %v4455
        %s4460 = sand.u32 %s1394, 1
        %s4461 = scalar_lea.sflag [#allocation4], %s4460
        %s4462 = sand.u32 %s1394, 1
        %s4463 = smul.addr %s4462, 8
        %s4464 = scalar_lea.vmem [#allocation28], %s4463
        // Predicated region
        $region321: #{proposed_model_forward.1} parent=255 // pred_check
          %p4465 = pneg %p1404
        $region322: #{proposed_model_forward.1} parent=255 // pred_check_branch
          %4467 = sbr.rel (%p4465) target = $region324
        $region323: #{proposed_model_forward.1} parent=255 // pred_region
          %4469 = vsyncadd %s4461, 0
          %s4470 = smul.addr %s142, 8
          %s4471 = scalar_lea.hbm %s119, %s4470
          %s4473 = sshll.u32 %s4464, 4
          %s4474 = int_to_ptr.vmem [resolvable:$true] %s4473
          %s4475 = sshll.u32 %s4471, 4
          %s4476 = int_to_ptr.hbm [resolvable:$true] %s4475
          %4478 = dma.vmem_to_hbm [thread:$0]  %s4474, 128, %s4476, %s4461
        $region324: #{proposed_model_forward.1} parent=255 // pred_fallthru
          _
      $region256: #{proposed_model_forward.1} parent=5 // pred_fallthru
        _
      %p4479 = scmp.le.s32.totalorder 2, %s137
      // Predicated region
      $region325: #{proposed_model_forward.1} parent=5 // pred_check
        %p4480 = pneg %p4479
      $region326: #{proposed_model_forward.1} parent=5 // pred_check_branch
        %4482 = sbr.rel (%p4480) target = $region328
      $region327: #{proposed_model_forward.1} parent=5 // pred_region
        %s4483 = ssub.s32 %s137, 2
        // Predicated region
        $region329: #{proposed_model_forward.1} parent=327 // pred_check
          %p4484 = pneg %p1410
        $region330: #{proposed_model_forward.1} parent=327 // pred_check_branch
          %4486 = sbr.rel (%p4484) target = $region332
        $region331: #{proposed_model_forward.1} parent=327 // pred_region
          %s4487 = sand.u32 %s1395, 1
          %s4488 = scalar_lea.sflag [#allocation4], %s4487
          %s4489 = sand.u32 %s1395, 1
          %s4490 = smul.addr %s4489, 8
          %s4491 = scalar_lea.vmem [#allocation28], %s4490
          %4493 = dma.done %s4488, 128
        $region332: #{proposed_model_forward.1} parent=327 // pred_fallthru
          _
      $region328: #{proposed_model_forward.1} parent=5 // pred_fallthru
        _
    $region6: #{proposed_model_forward.1} parent=1 // loop_footer
      %s141 = sadd.s32 1, %s137
    $region7: #{proposed_model_forward.1} parent=1 // loop_footer_branch
      %136 = sbr.rel target = $region3
    $region8: #{proposed_model_forward.1} parent=1 // loop_exit
      _
    %4494 = vsyncpa [#allocation3], 1
    %s4495 = scalar_lea.sflag [#allocation3], 1
    %4496 = vsyncpa %s4495, 1
    %4497 = vsyncpa [#allocation6], 1
    %4498 = vsyncpa [#allocation9], 1
    %4499 = vsyncpa [#allocation12], 1
    %4500 = vsyncpa [#allocation15], 1
    %4501 = vsyncpa [#allocation18], 1
    %4502 = vsyncpa [#allocation21], 1
    %4503 = vsyncpa [#allocation24], 1
    %4504 = vsyncpa [#allocation27], 1
    %4505 = vsyncpa [#allocation4], 1
    %s4506 = scalar_lea.sflag [#allocation4], 1
    %4507 = vsyncpa %s4506, 1

</llo_original>
